<compile_context>
chip_gen: v7x
topology: tpu7x:2x2x1
jax: 0.10.0
libtpu: 0.0.40
codegen_flags: <defaults>
</compile_context>

<pallas_src>
import functools

import numpy as np
import jax
import jax.numpy as jnp
from jax.experimental import pallas as pl
from jax.experimental.pallas import tpu as pltpu

# ----------------------------------------------------------------------------
# Static configuration (small synthetic shapes consistent with the module).
# ----------------------------------------------------------------------------
CLASSES = ("__background__", "car", "person")
N_CLASSES = len(CLASSES)          # 3
CLASS_AGNOSTIC = False
LC, GC, CE, GRL = True, True, False, False

DOUT_BASE = 32                    # self.dout_base_model
POOLING_SIZE = 4                  # cfg.POOLING_SIZE (small)
N_ANCHORS = 3
IM_H = IM_W = 32
N_ROIS = 8                        # proposals per image
FEAT_STRIDE = 4                   # synthetic backbone stride (ref uses 16)
DP_FEAT = 16                      # netD_pixel context-feature channels
G_FEAT = 32                       # netD (global) context-feature dim
HEAD_DIM = 64                     # _head_to_tail output dim
BATCH = 2
POOLED_CAT_DIM = HEAD_DIM + BATCH * DP_FEAT + BATCH * G_FEAT   # 160

H1 = W1 = IM_H // 2               # 16 : spatial size after base1 (stride 2)
H2 = W2 = IM_H // 4               # 8  : spatial size after base2 (stride 2)
HG = WG = IM_H // 8               # 4  : spatial size after netD global conv


# ----------------------------------------------------------------------------
# pallas_call plumbing (grid=(1,), whole-array blocks — tensors are KB-sized)
# ----------------------------------------------------------------------------
def _full_spec(shape):
    zeros = (0,) * len(shape)
    return pl.BlockSpec(shape, lambda i, z=zeros: z)


def _pallas(kernel, out_shapes, *inputs):
    single = not isinstance(out_shapes, (tuple, list))
    outs = (out_shapes,) if single else tuple(out_shapes)
    fn = pl.pallas_call(
        kernel,
        out_shape=outs,
        grid=(1,),
        in_specs=[_full_spec(x.shape) for x in inputs],
        out_specs=tuple(_full_spec(o.shape) for o in outs),
        compiler_params=pltpu.CompilerParams(dimension_semantics=("arbitrary",)),
    )
    res = fn(*inputs)
    return res[0] if single else res


# ----------------------------------------------------------------------------
# Fused Pallas kernels
# ----------------------------------------------------------------------------
def _stage1_kernel(p1_ref, wb1_ref, bb1_ref,
                   wp1_ref, bp1_ref, wp2_ref, bp2_ref, wp3_ref, bp3_ref,
                   avg1_ref,
                   bf1_ref, d_ref, fp_ref):
    """base1 conv (im2col rows) + full netD_pixel, single launch."""
    # base1: 3x3 stride-2 conv as matmul, bias, relu
    bf1 = jnp.dot(p1_ref[...], wb1_ref[...], preferred_element_type=jnp.float32)
    bf1 = jnp.maximum(bf1 + bb1_ref[...], 0.0)
    bf1_ref[...] = bf1.astype(bf1_ref.dtype)

    # netD_pixel (grad_reverse == identity in fwd; detach path reuses this pass)
    x = bf1.astype(jnp.bfloat16)
    h1 = jnp.dot(x, wp1_ref[...], preferred_element_type=jnp.float32) + bp1_ref[...]
    h1 = jnp.maximum(h1, 0.0).astype(jnp.bfloat16)
    h2 = jnp.dot(h1, wp2_ref[...], preferred_element_type=jnp.float32) + bp2_ref[...]
    h2 = jnp.maximum(h2, 0.0)
    h2b = h2.astype(jnp.bfloat16)

    # pixel-level domain logit -> sigmoid (exp + recip land on the EUP slot)
    d = jnp.dot(h2b, wp3_ref[...], preferred_element_type=jnp.float32) + bp3_ref[...]
    d_ref[...] = pl.reciprocal(1.0 + jnp.exp(-d), approx=True).astype(d_ref.dtype)

    # per-image global average pool as an averaging matmul (no reshapes/XLU)
    fp_ref[...] = jnp.dot(avg1_ref[...], h2b,
                          preferred_element_type=jnp.float32).astype(fp_ref.dtype)


def _mm_bias_act_kernel(x_ref, w_ref, b_ref, o_ref, *, act):
    """out = act(x @ w + b) — used for the base2 conv matmul."""
    acc = jnp.dot(x_ref[...], w_ref[...], preferred_element_type=jnp.float32)
    acc = acc + b_ref[...]
    if act == "relu":
        acc = jnp.maximum(acc, 0.0)
    o_ref[...] = acc.astype(o_ref.dtype)


def _netd_global_kernel(gp_ref, wg_ref, bg_ref, avg2_ref,
                        wfc1_ref, bfc1_ref, wfc2_ref, bfc2_ref,
                        dom_ref, feat_ref):
    """netD (global): conv + GAP + fc1(relu) + fc2, single launch."""
    h = jnp.dot(gp_ref[...], wg_ref[...], preferred_element_type=jnp.float32)
    h = jnp.maximum(h + bg_ref[...], 0.0).astype(jnp.bfloat16)
    gap = jnp.dot(avg2_ref[...], h,
                  preferred_element_type=jnp.float32).astype(jnp.bfloat16)
    f1 = jnp.dot(gap, wfc1_ref[...], preferred_element_type=jnp.float32) + bfc1_ref[...]
    f1 = jnp.maximum(f1, 0.0)
    feat_ref[...] = f1.astype(feat_ref.dtype)
    dom = jnp.dot(f1.astype(jnp.bfloat16), wfc2_ref[...],
                  preferred_element_type=jnp.float32) + bfc2_ref[...]
    dom_ref[...] = dom.astype(dom_ref.dtype)


def _roi_head_kernel(pooled_ref, wh_ref, bh_ref, fg_ref, fp_ref,
                     wcg_ref, wcp_ref, wch_ref, bc_ref,
                     wbg_ref, wbp_ref, wbh_ref, bb_ref,
                     cls_ref, bbox_ref):
    """head_fc + cls_score + bbox_pred + softmax in one launch.

    The reference's tile+concat of the context features is replaced by split
    matmuls: the context terms are rank-1 rows broadcast over all ROIs.
    """
    head = jnp.dot(pooled_ref[...], wh_ref[...], preferred_element_type=jnp.float32)
    head = jnp.maximum(head + bh_ref[...], 0.0).astype(jnp.bfloat16)
    fg = fg_ref[...]
    fp = fp_ref[...]

    ctx_c = (jnp.dot(fg, wcg_ref[...], preferred_element_type=jnp.float32)
             + jnp.dot(fp, wcp_ref[...], preferred_element_type=jnp.float32)
             + bc_ref[...])
    cls_score = jnp.dot(head, wch_ref[...], preferred_element_type=jnp.float32) + ctx_c
    m = jnp.max(cls_score, axis=-1, keepdims=True)
    e = jnp.exp(cls_score - m)
    cls_ref[...] = (e / jnp.sum(e, axis=-1, keepdims=True)).astype(cls_ref.dtype)

    ctx_b = (jnp.dot(fg, wbg_ref[...], preferred_element_type=jnp.float32)
             + jnp.dot(fp, wbp_ref[...], preferred_element_type=jnp.float32)
             + bb_ref[...])
    bbox_ref[...] = (jnp.dot(head, wbh_ref[...], preferred_element_type=jnp.float32)
                     + ctx_b).astype(bbox_ref.dtype)


# ----------------------------------------------------------------------------
# JAX glue: NHWC im2col, fixed proposals, ROI pooling
# ----------------------------------------------------------------------------
def _patches_nhwc(x, kh, kw, stride, pad):
    """x: (B,H,W,C) -> (B,Ho,Wo,C*kh*kw), feature order (C, kh, kw)."""
    return jax.lax.conv_general_dilated_patches(
        x, filter_shape=(kh, kw), window_strides=(stride, stride),
        padding=[(pad, pad), (pad, pad)],
        dimension_numbers=("NHWC", "HWIO", "NHWC"))


def make_rois(batch, n_rois, im_h, im_w):
    """Deterministic grid of proposals, format [batch_idx, x1, y1, x2, y2]."""
    rois = np.zeros((batch, n_rois, 5), np.float32)
    for b in range(batch):
        for i in range(n_rois):
            gx, gy = i % 4, i // 4
            x1 = gx * im_w / 4.0
            y1 = gy * im_h / 4.0
            x2 = min(x1 + im_w / 2.0, im_w - 1.0)
            y2 = min(y1 + im_h / 2.0, im_h - 1.0)
            rois[b, i] = [b, x1, y1, x2, y2]
    return jnp.asarray(rois)


def roi_pool(feat, rois, pool_size, spatial_scale):
    """Average ROI pooling on NHWC features (plain-JAX: data-dependent gather)."""
    # TODO(synk): bilinear ROIAlign / max ROIPool with data-dependent sampling
    # has no clean Pallas equivalent at this tiny size; mask-average in JAX.
    B, Hf, Wf, C = feat.shape
    feat = feat.astype(jnp.float32)
    ys = jnp.arange(Hf, dtype=jnp.float32)
    xs = jnp.arange(Wf, dtype=jnp.float32)
    p = jnp.arange(pool_size, dtype=jnp.float32)

    def one_roi(roi):
        b = roi[0].astype(jnp.int32)
        x1, y1, x2, y2 = (roi[1] * spatial_scale, roi[2] * spatial_scale,
                          roi[3] * spatial_scale, roi[4] * spatial_scale)
        fmap = jnp.take(feat, b, axis=0)                          # (Hf, Wf, C)
        bin_h = jnp.maximum(y2 - y1, 1.0) / pool_size
        bin_w = jnp.maximum(x2 - x1, 1.0) / pool_size
        y_lo, y_hi = y1 + p * bin_h, y1 + (p + 1.0) * bin_h
        x_lo, x_hi = x1 + p * bin_w, x1 + (p + 1.0) * bin_w
        ymask = (ys[None, :] >= y_lo[:, None]) & (
            ys[None, :] < jnp.maximum(y_hi[:, None], y_lo[:, None] + 1.0))
        xmask = (xs[None, :] >= x_lo[:, None]) & (
            xs[None, :] < jnp.maximum(x_hi[:, None], x_lo[:, None] + 1.0))
        mask = (ymask[:, None, :, None] & xmask[None, :, None, :]).astype(jnp.float32)
        denom = jnp.maximum(mask.sum(axis=(2, 3)), 1.0)           # (P, P)
        pooled = jnp.einsum("hwc,pqhw->pqc", fmap, mask) / denom[..., None]
        return pooled                                             # (P, P, C)

    return jax.vmap(one_roi)(rois)                                # (R, P, P, C)


# ----------------------------------------------------------------------------
# Full forward pass (eval mode)
# ----------------------------------------------------------------------------
@functools.partial(jax.jit, static_argnames=("target",))
def faster_rcnn_forward(kp, im_data, im_info, gt_boxes, num_boxes,
                        target=False, eta=1.0):
    del im_info, gt_boxes, num_boxes, eta         # unused in eval / fwd pass
    batch_size = im_data.shape[0]

    # NCHW -> NHWC once at the API boundary; stays channel-last afterwards.
    x = jnp.transpose(im_data, (0, 2, 3, 1)).astype(jnp.bfloat16)

    # ---- stage 1: base1 conv + netD_pixel (lc), one fused kernel ---------- #
    # (the reference calls netD_pixel twice — grad_reverse path and .detach()
    #  path — forward outputs are identical, so compute once and reuse.)
    p1 = _patches_nhwc(x, 3, 3, 2, 1)                       # (B, H1, W1, 27)
    p1 = jnp.pad(p1, ((0, 0), (0, 0), (0, 0), (0, 32 - p1.shape[-1])))  # K 27->32
    p1 = p1.reshape(batch_size * H1 * W1, 32)

    bf1_flat, d_flat, feat_pixel = _pallas(
        _stage1_kernel,
        (jax.ShapeDtypeStruct((batch_size * H1 * W1, DOUT_BASE), jnp.bfloat16),
         jax.ShapeDtypeStruct((batch_size * H1 * W1, 1), jnp.float32),
         jax.ShapeDtypeStruct((batch_size, DP_FEAT), jnp.bfloat16)),
        p1, kp["base1_w"], kp["base1_b"],
        kp["dp1_w"], kp["dp1_b"], kp["dp2_w"], kp["dp2_b"],
        kp["dp3_w"], kp["dp3_b"], kp["avg1"])
    d_pixel = d_flat.reshape(batch_size, 1, H1, W1)

    # ---- base2 conv -------------------------------------------------------- #
    bf1 = bf1_flat.reshape(batch_size, H1, W1, DOUT_BASE)
    p2 = _patches_nhwc(bf1, 3, 3, 2, 1).reshape(batch_size * H2 * W2, DOUT_BASE * 9)
    base_feat_flat = _pallas(
        functools.partial(_mm_bias_act_kernel, act="relu"),
        jax.ShapeDtypeStruct((batch_size * H2 * W2, DOUT_BASE), jnp.bfloat16),
        p2, kp["base2_w"], kp["base2_b"])
    base_feat = base_feat_flat.reshape(batch_size, H2, W2, DOUT_BASE)

    # ---- global domain classifier (gc), one fused kernel ------------------- #
    # (single pass: the .detach() re-invocation of netD is identical in fwd.)
    gp = _patches_nhwc(base_feat, 3, 3, 2, 1).reshape(batch_size * HG * WG,
                                                      DOUT_BASE * 9)
    domain_p, feat_g = _pallas(
        _netd_global_kernel,
        (jax.ShapeDtypeStruct((batch_size, 2), jnp.float32),
         jax.ShapeDtypeStruct((batch_size, G_FEAT), jnp.bfloat16)),
        gp, kp["g_conv_w"], kp["g_conv_b"], kp["avg2"],
        kp["g_fc1_w"], kp["g_fc1_b"], kp["g_fc2_w"], kp["g_fc2_b"])

    if target and GC and not GRL:
        return d_pixel, domain_p

    # ---- RPN + proposals ---------------------------------------------------- #
    # TODO(synk): anchor generation, box decoding and NMS (data-dependent sort /
    # suppression) have no clean Pallas equivalent; deterministic proposal grid.
    # The RPN conv heads' outputs were discarded in this path, so the dead
    # conv stack is removed entirely (perf: 3 full-feature-map matmuls).
    rois = make_rois(batch_size, N_ROIS, IM_H, IM_W)
    rpn_loss_cls = 0.0
    rpn_loss_bbox = 0.0
    rois_label = None                                             # eval mode

    # ---- ROI pooling + fused detection head -------------------------------- #
    pooled = roi_pool(base_feat, rois.reshape(-1, 5), POOLING_SIZE,
                      1.0 / FEAT_STRIDE)                          # (R, P, P, C)
    R = pooled.shape[0]
    pooled_flat = pooled.reshape(R, -1).astype(jnp.bfloat16)      # (R, C*P*P)

    fg_row = feat_g.reshape(1, -1)                                # (1, B*G_FEAT)
    fp_row = feat_pixel.reshape(1, -1)                            # (1, B*DP_FEAT)

    cls_prob, bbox_pred = _pallas(
        _roi_head_kernel,
        (jax.ShapeDtypeStruct((R, N_CLASSES), jnp.float32),
         jax.ShapeDtypeStruct((R, 4 * N_CLASSES), jnp.float32)),
        pooled_flat, kp["head_w"], kp["head_b"], fg_row, fp_row,
        kp["cls_w_g"], kp["cls_w_p"], kp["cls_w_h"], kp["cls_b"],
        kp["bb_w_g"], kp["bb_w_p"], kp["bb_w_h"], kp["bb_b"])

    RCNN_loss_cls = 0.0
    RCNN_loss_bbox = 0.0

    cls_prob = cls_prob.reshape(batch_size, N_ROIS, -1)
    bbox_pred = bbox_pred.reshape(batch_size, N_ROIS, -1)

    return [rois, cls_prob, bbox_pred, rpn_loss_cls, rpn_loss_bbox,
            RCNN_loss_cls, RCNN_loss_bbox, rois_label, d_pixel, domain_p,
            None, None]


# ----------------------------------------------------------------------------
# Parameters: normal_init semantics (N(0, std), b = 0), then a one-time prep
# that reshapes conv weights to (K, Cout) matmul form and casts to bf16.
# ----------------------------------------------------------------------------
def init_params(key):
    keys = jax.random.split(key, 14)

    def conv_p(k, cout, cin, kh, kw, std=0.01):
        return (jax.random.normal(k, (cout, cin, kh, kw), jnp.float32) * std,
                jnp.zeros((cout,), jnp.float32))

    def fc_p(k, cin, cout, std=0.01):
        return (jax.random.normal(k, (cin, cout), jnp.float32) * std,
                jnp.zeros((cout,), jnp.float32))

    return {
        "base1":     conv_p(keys[0], DOUT_BASE, 3, 3, 3),
        "base2":     conv_p(keys[1], DOUT_BASE, DOUT_BASE, 3, 3),
        "dp_c1":     conv_p(keys[2], DOUT_BASE, DOUT_BASE, 1, 1),
        "dp_c2":     conv_p(keys[3], DP_FEAT, DOUT_BASE, 1, 1),
        "dp_c3":     conv_p(keys[4], 1, DP_FEAT, 1, 1),
        "g_conv":    conv_p(keys[5], DOUT_BASE, DOUT_BASE, 3, 3),
        "g_fc1":     fc_p(keys[6], DOUT_BASE, G_FEAT),
        "g_fc2":     fc_p(keys[7], G_FEAT, 2),
        # RPN heads kept for structural fidelity but unused: outputs are dead
        # in this path (proposals are a fixed grid), so they are not computed.
        "rpn_conv":  conv_p(keys[8], DOUT_BASE, DOUT_BASE, 3, 3),
        "rpn_cls":   conv_p(keys[9], 2 * N_ANCHORS, DOUT_BASE, 1, 1),
        "rpn_bbox":  conv_p(keys[10], 4 * N_ANCHORS, DOUT_BASE, 1, 1),
        "head_fc":   fc_p(keys[11], DOUT_BASE * POOLING_SIZE * POOLING_SIZE, HEAD_DIM),
        "cls_score": fc_p(keys[12], POOLED_CAT_DIM, N_CLASSES),
        "bbox_pred": fc_p(keys[13], POOLED_CAT_DIM, 4 * N_CLASSES, std=0.001),
    }


def prep_params(p):
    """One-time conversion to kernel-ready layouts (bf16 weights, (1,N) biases)."""
    def convw(wb, pad_k_to=None):
        w, b = wb
        cout, cin, kh, kw = w.shape
        wm = w.reshape(cout, cin * kh * kw).T            # (K, Cout), (Cin,kh,kw)-major
        if pad_k_to is not None and wm.shape[0] < pad_k_to:
            wm = jnp.pad(wm, ((0, pad_k_to - wm.shape[0]), (0, 0)))
        return wm.astype(jnp.bfloat16), b.reshape(1, -1).astype(jnp.float32)

    def fcw(wb):
        w, b = wb
        return w.astype(jnp.bfloat16), b.reshape(1, -1).astype(jnp.float32)

    kp = {}
    kp["base1_w"], kp["base1_b"] = convw(p["base1"], pad_k_to=32)   # K 27 -> 32
    kp["base2_w"], kp["base2_b"] = convw(p["base2"])
    kp["dp1_w"], kp["dp1_b"] = convw(p["dp_c1"])
    kp["dp2_w"], kp["dp2_b"] = convw(p["dp_c2"])
    kp["dp3_w"], kp["dp3_b"] = convw(p["dp_c3"])
    kp["g_conv_w"], kp["g_conv_b"] = convw(p["g_conv"])
    kp["g_fc1_w"], kp["g_fc1_b"] = fcw(p["g_fc1"])
    kp["g_fc2_w"], kp["g_fc2_b"] = fcw(p["g_fc2"])
    kp["head_w"], kp["head_b"] = fcw(p["head_fc"])

    # cls_score / bbox_pred weights split by context source so the kernel can
    # use broadcast (rank-1) matmuls instead of tile + concat.
    gdim, pdim = BATCH * G_FEAT, BATCH * DP_FEAT
    w_cls, b_cls = p["cls_score"]
    w_bb, b_bb = p["bbox_pred"]
    kp["cls_w_g"] = w_cls[:gdim].astype(jnp.bfloat16)
    kp["cls_w_p"] = w_cls[gdim:gdim + pdim].astype(jnp.bfloat16)
    kp["cls_w_h"] = w_cls[gdim + pdim:].astype(jnp.bfloat16)
    kp["cls_b"] = b_cls.reshape(1, -1).astype(jnp.float32)
    kp["bb_w_g"] = w_bb[:gdim].astype(jnp.bfloat16)
    kp["bb_w_p"] = w_bb[gdim:gdim + pdim].astype(jnp.bfloat16)
    kp["bb_w_h"] = w_bb[gdim + pdim:].astype(jnp.bfloat16)
    kp["bb_b"] = b_bb.reshape(1, -1).astype(jnp.float32)

    # averaging matrices for per-image global average pooling (exact in bf16:
    # 1/256 and 1/16 are powers of two)
    eye_b = jnp.eye(BATCH, dtype=jnp.float32)
    kp["avg1"] = (jnp.repeat(eye_b, H1 * W1, axis=1) / (H1 * W1)).astype(jnp.bfloat16)
    kp["avg2"] = (jnp.repeat(eye_b, HG * WG, axis=1) / (HG * WG)).astype(jnp.bfloat16)
    return kp


# ----------------------------------------------------------------------------
if __name__ == "__main__":
    key = jax.random.PRNGKey(0)
    pkey, dkey = jax.random.split(key)
    params = init_params(pkey)
    kparams = prep_params(params)

    im_data = jax.random.normal(dkey, (BATCH, 3, IM_H, IM_W), jnp.float32)
    im_info = jnp.array([[IM_H, IM_W, 1.0]] * BATCH, jnp.float32)
    gt_boxes = jnp.zeros((BATCH, 5, 5), jnp.float32)
    num_boxes = jnp.zeros((BATCH,), jnp.float32)

    outs = faster_rcnn_forward(kparams, im_data, im_info, gt_boxes, num_boxes,
                               target=False, eta=1.0)
    rois, cls_prob, bbox_pred = outs[0], outs[1], outs[2]
    d_pixel, domain_p = outs[8], outs[9]

    jax.block_until_ready(cls_prob)
    jax.block_until_ready(bbox_pred)
    jax.block_until_ready(d_pixel)
    jax.block_until_ready(domain_p)

    assert rois.shape == (BATCH, N_ROIS, 5)
    assert cls_prob.shape == (BATCH, N_ROIS, N_CLASSES)
    assert bbox_pred.shape == (BATCH, N_ROIS, 4 * N_CLASSES)
    assert d_pixel.shape == (BATCH, 1, IM_H // 2, IM_W // 2)
    assert domain_p.shape == (BATCH, 2)
    assert bool(jnp.all(jnp.isfinite(cls_prob)))
    assert bool(jnp.all(jnp.isfinite(bbox_pred)))

    print("KERNEL_OK")
</pallas_src>

<mosaic_0001>
module attributes {stable_mosaic.version = 11 : i64} {
  func.func @_stage1_kernel(%arg0: i32, %arg1: memref<512x32xbf16, #tpu.memory_space<vmem>>, %arg2: memref<32x32xbf16, #tpu.memory_space<vmem>>, %arg3: memref<1x32xf32, #tpu.memory_space<vmem>>, %arg4: memref<32x32xbf16, #tpu.memory_space<vmem>>, %arg5: memref<1x32xf32, #tpu.memory_space<vmem>>, %arg6: memref<32x16xbf16, #tpu.memory_space<vmem>>, %arg7: memref<1x16xf32, #tpu.memory_space<vmem>>, %arg8: memref<16x1xbf16, #tpu.memory_space<vmem>>, %arg9: memref<1x1xf32, #tpu.memory_space<vmem>>, %arg10: memref<2x512xbf16, #tpu.memory_space<vmem>>, %arg11: memref<512x32xbf16, #tpu.memory_space<vmem>>, %arg12: memref<512x1xf32, #tpu.memory_space<vmem>>, %arg13: memref<2x16xbf16, #tpu.memory_space<vmem>>) attributes {dimension_semantics = [#tpu.dimension_semantics<arbitrary>], iteration_bounds = array<i64: 1>, scalar_prefetch = 0 : i64, scratch_operands = 0 : i64, tpu.core_type = #tpu.core_type<tc>, window_params = [{pipeline_mode = #tpu.pipeline_mode<synchronous>, transform_indices = @transform_0, window_bounds = array<i64: 512, 32>}, {pipeline_mode = #tpu.pipeline_mode<synchronous>, transform_indices = @transform_1, window_bounds = array<i64: 32, 32>}, {pipeline_mode = #tpu.pipeline_mode<synchronous>, transform_indices = @transform_2, window_bounds = array<i64: 1, 32>}, {pipeline_mode = #tpu.pipeline_mode<synchronous>, transform_indices = @transform_3, window_bounds = array<i64: 32, 32>}, {pipeline_mode = #tpu.pipeline_mode<synchronous>, transform_indices = @transform_4, window_bounds = array<i64: 1, 32>}, {pipeline_mode = #tpu.pipeline_mode<synchronous>, transform_indices = @transform_5, window_bounds = array<i64: 32, 16>}, {pipeline_mode = #tpu.pipeline_mode<synchronous>, transform_indices = @transform_6, window_bounds = array<i64: 1, 16>}, {pipeline_mode = #tpu.pipeline_mode<synchronous>, transform_indices = @transform_7, window_bounds = array<i64: 16, 1>}, {pipeline_mode = #tpu.pipeline_mode<synchronous>, transform_indices = @transform_8, window_bounds = array<i64: 1, 1>}, {pipeline_mode = #tpu.pipeline_mode<synchronous>, transform_indices = @transform_9, window_bounds = array<i64: 2, 512>}, {pipeline_mode = #tpu.pipeline_mode<synchronous>, transform_indices = @transform_10, window_bounds = array<i64: 512, 32>}, {pipeline_mode = #tpu.pipeline_mode<synchronous>, transform_indices = @transform_11, window_bounds = array<i64: 512, 1>}, {pipeline_mode = #tpu.pipeline_mode<synchronous>, transform_indices = @transform_12, window_bounds = array<i64: 2, 16>}]} {
    %c0 = arith.constant 0 : index
    %c0_0 = arith.constant 0 : index
    %0 = vector.load %arg1[%c0, %c0_0] : memref<512x32xbf16, #tpu.memory_space<vmem>>, vector<512x32xbf16>
    %c0_1 = arith.constant 0 : index
    %c0_2 = arith.constant 0 : index
    %1 = vector.load %arg2[%c0_1, %c0_2] : memref<32x32xbf16, #tpu.memory_space<vmem>>, vector<32x32xbf16>
    %cst = arith.constant dense<0.000000e+00> : vector<512x32xf32>
    %2 = tpu.matmul %0, %1, %cst {dimension_numbers = #tpu.dot_dimension_numbers<[1], [0], [0], [1], [0, 0, 1, 1], [], []>} : vector<512x32xbf16>, vector<32x32xbf16>, vector<512x32xf32> -> vector<512x32xf32>
    %c0_3 = arith.constant 0 : index
    %c0_4 = arith.constant 0 : index
    %3 = vector.load %arg3[%c0_3, %c0_4] : memref<1x32xf32, #tpu.memory_space<vmem>>, vector<1x32xf32>
    %4 = vector.broadcast %3 : vector<1x32xf32> to vector<512x32xf32>
    %5 = arith.addf %2, %4 : vector<512x32xf32>
    %cst_5 = arith.constant 0.000000e+00 : f32
    %6 = vector.broadcast %cst_5 : f32 to vector<512x32xf32>
    %7 = arith.maximumf %5, %6 : vector<512x32xf32>
    %8 = arith.truncf %7 : vector<512x32xf32> to vector<512x32xbf16>
    %c0_6 = arith.constant 0 : index
    %c0_7 = arith.constant 0 : index
    %9 = vector.load %arg11[%c0_6, %c0_7] : memref<512x32xbf16, #tpu.memory_space<vmem>>, vector<512x32xbf16>
    tpu.vector_store %arg11[%c0_6, %c0_7], %8 {strides = array<i32>} : memref<512x32xbf16, #tpu.memory_space<vmem>>, vector<512x32xbf16>,
    %10 = arith.truncf %7 : vector<512x32xf32> to vector<512x32xbf16>
    %c0_8 = arith.constant 0 : index
    %c0_9 = arith.constant 0 : index
    %11 = vector.load %arg4[%c0_8, %c0_9] : memref<32x32xbf16, #tpu.memory_space<vmem>>, vector<32x32xbf16>
    %cst_10 = arith.constant dense<0.000000e+00> : vector<512x32xf32>
    %12 = tpu.matmul %10, %11, %cst_10 {dimension_numbers = #tpu.dot_dimension_numbers<[1], [0], [0], [1], [0, 0, 1, 1], [], []>} : vector<512x32xbf16>, vector<32x32xbf16>, vector<512x32xf32> -> vector<512x32xf32>
    %c0_11 = arith.constant 0 : index
    %c0_12 = arith.constant 0 : index
    %13 = vector.load %arg5[%c0_11, %c0_12] : memref<1x32xf32, #tpu.memory_space<vmem>>, vector<1x32xf32>
    %14 = vector.broadcast %13 : vector<1x32xf32> to vector<512x32xf32>
    %15 = arith.addf %12, %14 : vector<512x32xf32>
    %cst_13 = arith.constant 0.000000e+00 : f32
    %16 = vector.broadcast %cst_13 : f32 to vector<512x32xf32>
    %17 = arith.maximumf %15, %16 : vector<512x32xf32>
    %18 = arith.truncf %17 : vector<512x32xf32> to vector<512x32xbf16>
    %c0_14 = arith.constant 0 : index
    %c0_15 = arith.constant 0 : index
    %19 = vector.load %arg6[%c0_14, %c0_15] : memref<32x16xbf16, #tpu.memory_space<vmem>>, vector<32x16xbf16>
    %cst_16 = arith.constant dense<0.000000e+00> : vector<512x16xf32>
    %20 = tpu.matmul %18, %19, %cst_16 {dimension_numbers = #tpu.dot_dimension_numbers<[1], [0], [0], [1], [0, 0, 1, 1], [], []>} : vector<512x32xbf16>, vector<32x16xbf16>, vector<512x16xf32> -> vector<512x16xf32>
    %c0_17 = arith.constant 0 : index
    %c0_18 = arith.constant 0 : index
    %21 = vector.load %arg7[%c0_17, %c0_18] : memref<1x16xf32, #tpu.memory_space<vmem>>, vector<1x16xf32>
    %22 = vector.broadcast %21 : vector<1x16xf32> to vector<512x16xf32>
    %23 = arith.addf %20, %22 : vector<512x16xf32>
    %cst_19 = arith.constant 0.000000e+00 : f32
    %24 = vector.broadcast %cst_19 : f32 to vector<512x16xf32>
    %25 = arith.maximumf %23, %24 : vector<512x16xf32>
    %26 = arith.truncf %25 : vector<512x16xf32> to vector<512x16xbf16>
    %c0_20 = arith.constant 0 : index
    %c0_21 = arith.constant 0 : index
    %27 = vector.load %arg8[%c0_20, %c0_21] : memref<16x1xbf16, #tpu.memory_space<vmem>>, vector<16x1xbf16>
    %cst_22 = arith.constant dense<0.000000e+00> : vector<512x1xf32>
    %28 = tpu.matmul %26, %27, %cst_22 {dimension_numbers = #tpu.dot_dimension_numbers<[1], [0], [0], [1], [0, 0, 1, 1], [], []>} : vector<512x16xbf16>, vector<16x1xbf16>, vector<512x1xf32> -> vector<512x1xf32>
    %c0_23 = arith.constant 0 : index
    %c0_24 = arith.constant 0 : index
    %29 = vector.load %arg9[%c0_23, %c0_24] : memref<1x1xf32, #tpu.memory_space<vmem>>, vector<1x1xf32>
    %30 = vector.broadcast %29 : vector<1x1xf32> to vector<512x1xf32>
    %31 = arith.addf %28, %30 : vector<512x1xf32>
    %cst_25 = arith.constant 0.000000e+00 : f32
    %32 = vector.broadcast %cst_25 : f32 to vector<512x1xf32>
    %33 = arith.subf %32, %31 : vector<512x1xf32>
    %34 = math.exp %33 : vector<512x1xf32>
    %cst_26 = arith.constant 1.000000e+00 : f32
    %35 = vector.broadcast %cst_26 : f32 to vector<512x1xf32>
    %36 = arith.addf %35, %34 : vector<512x1xf32>
    %37 = tpu.reciprocal %36 {approx = true} : vector<512x1xf32> -> vector<512x1xf32>
    %c0_27 = arith.constant 0 : index
    %c0_28 = arith.constant 0 : index
    %38 = vector.load %arg12[%c0_27, %c0_28] : memref<512x1xf32, #tpu.memory_space<vmem>>, vector<512x1xf32>
    tpu.vector_store %arg12[%c0_27, %c0_28], %37 {strides = array<i32>} : memref<512x1xf32, #tpu.memory_space<vmem>>, vector<512x1xf32>,
    %c0_29 = arith.constant 0 : index
    %c0_30 = arith.constant 0 : index
    %39 = vector.load %arg10[%c0_29, %c0_30] : memref<2x512xbf16, #tpu.memory_space<vmem>>, vector<2x512xbf16>
    %cst_31 = arith.constant dense<0.000000e+00> : vector<2x16xf32>
    %40 = tpu.matmul %39, %26, %cst_31 {dimension_numbers = #tpu.dot_dimension_numbers<[1], [0], [0], [1], [0, 0, 1, 1], [], []>} : vector<2x512xbf16>, vector<512x16xbf16>, vector<2x16xf32> -> vector<2x16xf32>
    %41 = arith.truncf %40 : vector<2x16xf32> to vector<2x16xbf16>
    %c0_32 = arith.constant 0 : index
    %c0_33 = arith.constant 0 : index
    %42 = vector.load %arg13[%c0_32, %c0_33] : memref<2x16xbf16, #tpu.memory_space<vmem>>, vector<2x16xbf16>
    tpu.vector_store %arg13[%c0_32, %c0_33], %41 {strides = array<i32>} : memref<2x16xbf16, #tpu.memory_space<vmem>>, vector<2x16xbf16>,
    return
  }
  func.func @transform_0(%arg0: i32) -> (i32, i32) {
    %c0_i32 = arith.constant 0 : i32
    %c0_i32_0 = arith.constant 0 : i32
    %c0_i32_1 = arith.constant 0 : i32
    return %c0_i32, %c0_i32_0 : i32, i32
  }
  func.func @transform_1(%arg0: i32) -> (i32, i32) {
    %c0_i32 = arith.constant 0 : i32
    %c0_i32_0 = arith.constant 0 : i32
    %c0_i32_1 = arith.constant 0 : i32
    return %c0_i32, %c0_i32_0 : i32, i32
  }
  func.func @transform_2(%arg0: i32) -> (i32, i32) {
    %c0_i32 = arith.constant 0 : i32
    %c0_i32_0 = arith.constant 0 : i32
    %c0_i32_1 = arith.constant 0 : i32
    return %c0_i32, %c0_i32_0 : i32, i32
  }
  func.func @transform_3(%arg0: i32) -> (i32, i32) {
    %c0_i32 = arith.constant 0 : i32
    %c0_i32_0 = arith.constant 0 : i32
    %c0_i32_1 = arith.constant 0 : i32
    return %c0_i32, %c0_i32_0 : i32, i32
  }
  func.func @transform_4(%arg0: i32) -> (i32, i32) {
    %c0_i32 = arith.constant 0 : i32
    %c0_i32_0 = arith.constant 0 : i32
    %c0_i32_1 = arith.constant 0 : i32
    return %c0_i32, %c0_i32_0 : i32, i32
  }
  func.func @transform_5(%arg0: i32) -> (i32, i32) {
    %c0_i32 = arith.constant 0 : i32
    %c0_i32_0 = arith.constant 0 : i32
    %c0_i32_1 = arith.constant 0 : i32
    return %c0_i32, %c0_i32_0 : i32, i32
  }
  func.func @transform_6(%arg0: i32) -> (i32, i32) {
    %c0_i32 = arith.constant 0 : i32
    %c0_i32_0 = arith.constant 0 : i32
    %c0_i32_1 = arith.constant 0 : i32
    return %c0_i32, %c0_i32_0 : i32, i32
  }
  func.func @transform_7(%arg0: i32) -> (i32, i32) {
    %c0_i32 = arith.constant 0 : i32
    %c0_i32_0 = arith.constant 0 : i32
    %c0_i32_1 = arith.constant 0 : i32
    return %c0_i32, %c0_i32_0 : i32, i32
  }
  func.func @transform_8(%arg0: i32) -> (i32, i32) {
    %c0_i32 = arith.constant 0 : i32
    %c0_i32_0 = arith.constant 0 : i32
    %c0_i32_1 = arith.constant 0 : i32
    return %c0_i32, %c0_i32_0 : i32, i32
  }
  func.func @transform_9(%arg0: i32) -> (i32, i32) {
    %c0_i32 = arith.constant 0 : i32
    %c0_i32_0 = arith.constant 0 : i32
    %c0_i32_1 = arith.constant 0 : i32
    return %c0_i32, %c0_i32_0 : i32, i32
  }
  func.func @transform_10(%arg0: i32) -> (i32, i32) {
    %c0_i32 = arith.constant 0 : i32
    %c0_i32_0 = arith.constant 0 : i32
    %c0_i32_1 = arith.constant 0 : i32
    return %c0_i32, %c0_i32_0 : i32, i32
  }
  func.func @transform_11(%arg0: i32) -> (i32, i32) {
    %c0_i32 = arith.constant 0 : i32
    %c0_i32_0 = arith.constant 0 : i32
    %c0_i32_1 = arith.constant 0 : i32
    return %c0_i32, %c0_i32_0 : i32, i32
  }
  func.func @transform_12(%arg0: i32) -> (i32, i32) {
    %c0_i32 = arith.constant 0 : i32
    %c0_i32_0 = arith.constant 0 : i32
    %c0_i32_1 = arith.constant 0 : i32
    return %c0_i32, %c0_i32_0 : i32, i32
  }
}

module attributes {stable_mosaic.version = 11 : i64} {
  func.func @_mm_bias_act_kernel(%arg0: i32, %arg1: memref<128x288xbf16, #tpu.memory_space<vmem>>, %arg2: memref<288x32xbf16, #tpu.memory_space<vmem>>, %arg3: memref<1x32xf32, #tpu.memory_space<vmem>>, %arg4: memref<128x32xbf16, #tpu.memory_space<vmem>>) attributes {dimension_semantics = [#tpu.dimension_semantics<arbitrary>], iteration_bounds = array<i64: 1>, scalar_prefetch = 0 : i64, scratch_operands = 0 : i64, tpu.core_type = #tpu.core_type<tc>, window_params = [{pipeline_mode = #tpu.pipeline_mode<synchronous>, transform_indices = @transform_0, window_bounds = array<i64: 128, 288>}, {pipeline_mode = #tpu.pipeline_mode<synchronous>, transform_indices = @transform_1, window_bounds = array<i64: 288, 32>}, {pipeline_mode = #tpu.pipeline_mode<synchronous>, transform_indices = @transform_2, window_bounds = array<i64: 1, 32>}, {pipeline_mode = #tpu.pipeline_mode<synchronous>, transform_indices = @transform_3, window_bounds = array<i64: 128, 32>}]} {
    %c0 = arith.constant 0 : index
    %c0_0 = arith.constant 0 : index
    %0 = vector.load %arg1[%c0, %c0_0] : memref<128x288xbf16, #tpu.memory_space<vmem>>, vector<128x288xbf16>
    %c0_1 = arith.constant 0 : index
    %c0_2 = arith.constant 0 : index
    %1 = vector.load %arg2[%c0_1, %c0_2] : memref<288x32xbf16, #tpu.memory_space<vmem>>, vector<288x32xbf16>
    %cst = arith.constant dense<0.000000e+00> : vector<128x32xf32>
    %2 = tpu.matmul %0, %1, %cst {dimension_numbers = #tpu.dot_dimension_numbers<[1], [0], [0], [1], [0, 0, 1, 1], [], []>} : vector<128x288xbf16>, vector<288x32xbf16>, vector<128x32xf32> -> vector<128x32xf32>
    %c0_3 = arith.constant 0 : index
    %c0_4 = arith.constant 0 : index
    %3 = vector.load %arg3[%c0_3, %c0_4] : memref<1x32xf32, #tpu.memory_space<vmem>>, vector<1x32xf32>
    %4 = vector.broadcast %3 : vector<1x32xf32> to vector<128x32xf32>
    %5 = arith.addf %2, %4 : vector<128x32xf32>
    %cst_5 = arith.constant 0.000000e+00 : f32
    %6 = vector.broadcast %cst_5 : f32 to vector<128x32xf32>
    %7 = arith.maximumf %5, %6 : vector<128x32xf32>
    %8 = arith.truncf %7 : vector<128x32xf32> to vector<128x32xbf16>
    %c0_6 = arith.constant 0 : index
    %c0_7 = arith.constant 0 : index
    %9 = vector.load %arg4[%c0_6, %c0_7] : memref<128x32xbf16, #tpu.memory_space<vmem>>, vector<128x32xbf16>
    tpu.vector_store %arg4[%c0_6, %c0_7], %8 {strides = array<i32>} : memref<128x32xbf16, #tpu.memory_space<vmem>>, vector<128x32xbf16>,
    return
  }
  func.func @transform_0(%arg0: i32) -> (i32, i32) {
    %c0_i32 = arith.constant 0 : i32
    %c0_i32_0 = arith.constant 0 : i32
    %c0_i32_1 = arith.constant 0 : i32
    return %c0_i32, %c0_i32_0 : i32, i32
  }
  func.func @transform_1(%arg0: i32) -> (i32, i32) {
    %c0_i32 = arith.constant 0 : i32
    %c0_i32_0 = arith.constant 0 : i32
    %c0_i32_1 = arith.constant 0 : i32
    return %c0_i32, %c0_i32_0 : i32, i32
  }
  func.func @transform_2(%arg0: i32) -> (i32, i32) {
    %c0_i32 = arith.constant 0 : i32
    %c0_i32_0 = arith.constant 0 : i32
    %c0_i32_1 = arith.constant 0 : i32
    return %c0_i32, %c0_i32_0 : i32, i32
  }
  func.func @transform_3(%arg0: i32) -> (i32, i32) {
    %c0_i32 = arith.constant 0 : i32
    %c0_i32_0 = arith.constant 0 : i32
    %c0_i32_1 = arith.constant 0 : i32
    return %c0_i32, %c0_i32_0 : i32, i32
  }
}

module attributes {stable_mosaic.version = 11 : i64} {
  func.func @_netd_global_kernel(%arg0: i32, %arg1: memref<32x288xbf16, #tpu.memory_space<vmem>>, %arg2: memref<288x32xbf16, #tpu.memory_space<vmem>>, %arg3: memref<1x32xf32, #tpu.memory_space<vmem>>, %arg4: memref<2x32xbf16, #tpu.memory_space<vmem>>, %arg5: memref<32x32xbf16, #tpu.memory_space<vmem>>, %arg6: memref<1x32xf32, #tpu.memory_space<vmem>>, %arg7: memref<32x2xbf16, #tpu.memory_space<vmem>>, %arg8: memref<1x2xf32, #tpu.memory_space<vmem>>, %arg9: memref<2x2xf32, #tpu.memory_space<vmem>>, %arg10: memref<2x32xbf16, #tpu.memory_space<vmem>>) attributes {dimension_semantics = [#tpu.dimension_semantics<arbitrary>], iteration_bounds = array<i64: 1>, scalar_prefetch = 0 : i64, scratch_operands = 0 : i64, tpu.core_type = #tpu.core_type<tc>, window_params = [{pipeline_mode = #tpu.pipeline_mode<synchronous>, transform_indices = @transform_0, window_bounds = array<i64: 32, 288>}, {pipeline_mode = #tpu.pipeline_mode<synchronous>, transform_indices = @transform_1, window_bounds = array<i64: 288, 32>}, {pipeline_mode = #tpu.pipeline_mode<synchronous>, transform_indices = @transform_2, window_bounds = array<i64: 1, 32>}, {pipeline_mode = #tpu.pipeline_mode<synchronous>, transform_indices = @transform_3, window_bounds = array<i64: 2, 32>}, {pipeline_mode = #tpu.pipeline_mode<synchronous>, transform_indices = @transform_4, window_bounds = array<i64: 32, 32>}, {pipeline_mode = #tpu.pipeline_mode<synchronous>, transform_indices = @transform_5, window_bounds = array<i64: 1, 32>}, {pipeline_mode = #tpu.pipeline_mode<synchronous>, transform_indices = @transform_6, window_bounds = array<i64: 32, 2>}, {pipeline_mode = #tpu.pipeline_mode<synchronous>, transform_indices = @transform_7, window_bounds = array<i64: 1, 2>}, {pipeline_mode = #tpu.pipeline_mode<synchronous>, transform_indices = @transform_8, window_bounds = array<i64: 2, 2>}, {pipeline_mode = #tpu.pipeline_mode<synchronous>, transform_indices = @transform_9, window_bounds = array<i64: 2, 32>}]} {
    %c0 = arith.constant 0 : index
    %c0_0 = arith.constant 0 : index
    %0 = vector.load %arg1[%c0, %c0_0] : memref<32x288xbf16, #tpu.memory_space<vmem>>, vector<32x288xbf16>
    %c0_1 = arith.constant 0 : index
    %c0_2 = arith.constant 0 : index
    %1 = vector.load %arg2[%c0_1, %c0_2] : memref<288x32xbf16, #tpu.memory_space<vmem>>, vector<288x32xbf16>
    %cst = arith.constant dense<0.000000e+00> : vector<32x32xf32>
    %2 = tpu.matmul %0, %1, %cst {dimension_numbers = #tpu.dot_dimension_numbers<[1], [0], [0], [1], [0, 0, 1, 1], [], []>} : vector<32x288xbf16>, vector<288x32xbf16>, vector<32x32xf32> -> vector<32x32xf32>
    %c0_3 = arith.constant 0 : index
    %c0_4 = arith.constant 0 : index
    %3 = vector.load %arg3[%c0_3, %c0_4] : memref<1x32xf32, #tpu.memory_space<vmem>>, vector<1x32xf32>
    %4 = vector.broadcast %3 : vector<1x32xf32> to vector<32x32xf32>
    %5 = arith.addf %2, %4 : vector<32x32xf32>
    %cst_5 = arith.constant 0.000000e+00 : f32
    %6 = vector.broadcast %cst_5 : f32 to vector<32x32xf32>
    %7 = arith.maximumf %5, %6 : vector<32x32xf32>
    %8 = arith.truncf %7 : vector<32x32xf32> to vector<32x32xbf16>
    %c0_6 = arith.constant 0 : index
    %c0_7 = arith.constant 0 : index
    %9 = vector.load %arg4[%c0_6, %c0_7] : memref<2x32xbf16, #tpu.memory_space<vmem>>, vector<2x32xbf16>
    %cst_8 = arith.constant dense<0.000000e+00> : vector<2x32xf32>
    %10 = tpu.matmul %9, %8, %cst_8 {dimension_numbers = #tpu.dot_dimension_numbers<[1], [0], [0], [1], [0, 0, 1, 1], [], []>} : vector<2x32xbf16>, vector<32x32xbf16>, vector<2x32xf32> -> vector<2x32xf32>
    %11 = arith.truncf %10 : vector<2x32xf32> to vector<2x32xbf16>
    %c0_9 = arith.constant 0 : index
    %c0_10 = arith.constant 0 : index
    %12 = vector.load %arg5[%c0_9, %c0_10] : memref<32x32xbf16, #tpu.memory_space<vmem>>, vector<32x32xbf16>
    %cst_11 = arith.constant dense<0.000000e+00> : vector<2x32xf32>
    %13 = tpu.matmul %11, %12, %cst_11 {dimension_numbers = #tpu.dot_dimension_numbers<[1], [0], [0], [1], [0, 0, 1, 1], [], []>} : vector<2x32xbf16>, vector<32x32xbf16>, vector<2x32xf32> -> vector<2x32xf32>
    %c0_12 = arith.constant 0 : index
    %c0_13 = arith.constant 0 : index
    %14 = vector.load %arg6[%c0_12, %c0_13] : memref<1x32xf32, #tpu.memory_space<vmem>>, vector<1x32xf32>
    %15 = vector.broadcast %14 : vector<1x32xf32> to vector<2x32xf32>
    %16 = arith.addf %13, %15 : vector<2x32xf32>
    %cst_14 = arith.constant 0.000000e+00 : f32
    %17 = vector.broadcast %cst_14 : f32 to vector<2x32xf32>
    %18 = arith.maximumf %16, %17 : vector<2x32xf32>
    %19 = arith.truncf %18 : vector<2x32xf32> to vector<2x32xbf16>
    %c0_15 = arith.constant 0 : index
    %c0_16 = arith.constant 0 : index
    %20 = vector.load %arg10[%c0_15, %c0_16] : memref<2x32xbf16, #tpu.memory_space<vmem>>, vector<2x32xbf16>
    tpu.vector_store %arg10[%c0_15, %c0_16], %19 {strides = array<i32>} : memref<2x32xbf16, #tpu.memory_space<vmem>>, vector<2x32xbf16>,
    %21 = arith.truncf %18 : vector<2x32xf32> to vector<2x32xbf16>
    %c0_17 = arith.constant 0 : index
    %c0_18 = arith.constant 0 : index
    %22 = vector.load %arg7[%c0_17, %c0_18] : memref<32x2xbf16, #tpu.memory_space<vmem>>, vector<32x2xbf16>
    %cst_19 = arith.constant dense<0.000000e+00> : vector<2x2xf32>
    %23 = tpu.matmul %21, %22, %cst_19 {dimension_numbers = #tpu.dot_dimension_numbers<[1], [0], [0], [1], [0, 0, 1, 1], [], []>} : vector<2x32xbf16>, vector<32x2xbf16>, vector<2x2xf32> -> vector<2x2xf32>
    %c0_20 = arith.constant 0 : index
    %c0_21 = arith.constant 0 : index
    %24 = vector.load %arg8[%c0_20, %c0_21] : memref<1x2xf32, #tpu.memory_space<vmem>>, vector<1x2xf32>
    %25 = vector.broadcast %24 : vector<1x2xf32> to vector<2x2xf32>
    %26 = arith.addf %23, %25 : vector<2x2xf32>
    %c0_22 = arith.constant 0 : index
    %c0_23 = arith.constant 0 : index
    %27 = vector.load %arg9[%c0_22, %c0_23] : memref<2x2xf32, #tpu.memory_space<vmem>>, vector<2x2xf32>
    tpu.vector_store %arg9[%c0_22, %c0_23], %26 {strides = array<i32>} : memref<2x2xf32, #tpu.memory_space<vmem>>, vector<2x2xf32>,
    return
  }
  func.func @transform_0(%arg0: i32) -> (i32, i32) {
    %c0_i32 = arith.constant 0 : i32
    %c0_i32_0 = arith.constant 0 : i32
    %c0_i32_1 = arith.constant 0 : i32
    return %c0_i32, %c0_i32_0 : i32, i32
  }
  func.func @transform_1(%arg0: i32) -> (i32, i32) {
    %c0_i32 = arith.constant 0 : i32
    %c0_i32_0 = arith.constant 0 : i32
    %c0_i32_1 = arith.constant 0 : i32
    return %c0_i32, %c0_i32_0 : i32, i32
  }
  func.func @transform_2(%arg0: i32) -> (i32, i32) {
    %c0_i32 = arith.constant 0 : i32
    %c0_i32_0 = arith.constant 0 : i32
    %c0_i32_1 = arith.constant 0 : i32
    return %c0_i32, %c0_i32_0 : i32, i32
  }
  func.func @transform_3(%arg0: i32) -> (i32, i32) {
    %c0_i32 = arith.constant 0 : i32
    %c0_i32_0 = arith.constant 0 : i32
    %c0_i32_1 = arith.constant 0 : i32
    return %c0_i32, %c0_i32_0 : i32, i32
  }
  func.func @transform_4(%arg0: i32) -> (i32, i32) {
    %c0_i32 = arith.constant 0 : i32
    %c0_i32_0 = arith.constant 0 : i32
    %c0_i32_1 = arith.constant 0 : i32
    return %c0_i32, %c0_i32_0 : i32, i32
  }
  func.func @transform_5(%arg0: i32) -> (i32, i32) {
    %c0_i32 = arith.constant 0 : i32
    %c0_i32_0 = arith.constant 0 : i32
    %c0_i32_1 = arith.constant 0 : i32
    return %c0_i32, %c0_i32_0 : i32, i32
  }
  func.func @transform_6(%arg0: i32) -> (i32, i32) {
    %c0_i32 = arith.constant 0 : i32
    %c0_i32_0 = arith.constant 0 : i32
    %c0_i32_1 = arith.constant 0 : i32
    return %c0_i32, %c0_i32_0 : i32, i32
  }
  func.func @transform_7(%arg0: i32) -> (i32, i32) {
    %c0_i32 = arith.constant 0 : i32
    %c0_i32_0 = arith.constant 0 : i32
    %c0_i32_1 = arith.constant 0 : i32
    return %c0_i32, %c0_i32_0 : i32, i32
  }
  func.func @transform_8(%arg0: i32) -> (i32, i32) {
    %c0_i32 = arith.constant 0 : i32
    %c0_i32_0 = arith.constant 0 : i32
    %c0_i32_1 = arith.constant 0 : i32
    return %c0_i32, %c0_i32_0 : i32, i32
  }
  func.func @transform_9(%arg0: i32) -> (i32, i32) {
    %c0_i32 = arith.constant 0 : i32
    %c0_i32_0 = arith.constant 0 : i32
    %c0_i32_1 = arith.constant 0 : i32
    return %c0_i32, %c0_i32_0 : i32, i32
  }
}

module attributes {stable_mosaic.version = 11 : i64} {
  func.func @_roi_head_kernel(%arg0: i32, %arg1: memref<16x512xbf16, #tpu.memory_space<vmem>>, %arg2: memref<512x64xbf16, #tpu.memory_space<vmem>>, %arg3: memref<1x64xf32, #tpu.memory_space<vmem>>, %arg4: memref<1x64xbf16, #tpu.memory_space<vmem>>, %arg5: memref<1x32xbf16, #tpu.memory_space<vmem>>, %arg6: memref<64x3xbf16, #tpu.memory_space<vmem>>, %arg7: memref<32x3xbf16, #tpu.memory_space<vmem>>, %arg8: memref<64x3xbf16, #tpu.memory_space<vmem>>, %arg9: memref<1x3xf32, #tpu.memory_space<vmem>>, %arg10: memref<64x12xbf16, #tpu.memory_space<vmem>>, %arg11: memref<32x12xbf16, #tpu.memory_space<vmem>>, %arg12: memref<64x12xbf16, #tpu.memory_space<vmem>>, %arg13: memref<1x12xf32, #tpu.memory_space<vmem>>, %arg14: memref<16x3xf32, #tpu.memory_space<vmem>>, %arg15: memref<16x12xf32, #tpu.memory_space<vmem>>) attributes {dimension_semantics = [#tpu.dimension_semantics<arbitrary>], iteration_bounds = array<i64: 1>, scalar_prefetch = 0 : i64, scratch_operands = 0 : i64, tpu.core_type = #tpu.core_type<tc>, window_params = [{pipeline_mode = #tpu.pipeline_mode<synchronous>, transform_indices = @transform_0, window_bounds = array<i64: 16, 512>}, {pipeline_mode = #tpu.pipeline_mode<synchronous>, transform_indices = @transform_1, window_bounds = array<i64: 512, 64>}, {pipeline_mode = #tpu.pipeline_mode<synchronous>, transform_indices = @transform_2, window_bounds = array<i64: 1, 64>}, {pipeline_mode = #tpu.pipeline_mode<synchronous>, transform_indices = @transform_3, window_bounds = array<i64: 1, 64>}, {pipeline_mode = #tpu.pipeline_mode<synchronous>, transform_indices = @transform_4, window_bounds = array<i64: 1, 32>}, {pipeline_mode = #tpu.pipeline_mode<synchronous>, transform_indices = @transform_5, window_bounds = array<i64: 64, 3>}, {pipeline_mode = #tpu.pipeline_mode<synchronous>, transform_indices = @transform_6, window_bounds = array<i64: 32, 3>}, {pipeline_mode = #tpu.pipeline_mode<synchronous>, transform_indices = @transform_7, window_bounds = array<i64: 64, 3>}, {pipeline_mode = #tpu.pipeline_mode<synchronous>, transform_indices = @transform_8, window_bounds = array<i64: 1, 3>}, {pipeline_mode = #tpu.pipeline_mode<synchronous>, transform_indices = @transform_9, window_bounds = array<i64: 64, 12>}, {pipeline_mode = #tpu.pipeline_mode<synchronous>, transform_indices = @transform_10, window_bounds = array<i64: 32, 12>}, {pipeline_mode = #tpu.pipeline_mode<synchronous>, transform_indices = @transform_11, window_bounds = array<i64: 64, 12>}, {pipeline_mode = #tpu.pipeline_mode<synchronous>, transform_indices = @transform_12, window_bounds = array<i64: 1, 12>}, {pipeline_mode = #tpu.pipeline_mode<synchronous>, transform_indices = @transform_13, window_bounds = array<i64: 16, 3>}, {pipeline_mode = #tpu.pipeline_mode<synchronous>, transform_indices = @transform_14, window_bounds = array<i64: 16, 12>}]} {
    %c0 = arith.constant 0 : index
    %c0_0 = arith.constant 0 : index
    %0 = vector.load %arg1[%c0, %c0_0] : memref<16x512xbf16, #tpu.memory_space<vmem>>, vector<16x512xbf16>
    %c0_1 = arith.constant 0 : index
    %c0_2 = arith.constant 0 : index
    %1 = vector.load %arg2[%c0_1, %c0_2] : memref<512x64xbf16, #tpu.memory_space<vmem>>, vector<512x64xbf16>
    %cst = arith.constant dense<0.000000e+00> : vector<16x64xf32>
    %2 = tpu.matmul %0, %1, %cst {dimension_numbers = #tpu.dot_dimension_numbers<[1], [0], [0], [1], [0, 0, 1, 1], [], []>} : vector<16x512xbf16>, vector<512x64xbf16>, vector<16x64xf32> -> vector<16x64xf32>
    %c0_3 = arith.constant 0 : index
    %c0_4 = arith.constant 0 : index
    %3 = vector.load %arg3[%c0_3, %c0_4] : memref<1x64xf32, #tpu.memory_space<vmem>>, vector<1x64xf32>
    %4 = vector.broadcast %3 : vector<1x64xf32> to vector<16x64xf32>
    %5 = arith.addf %2, %4 : vector<16x64xf32>
    %cst_5 = arith.constant 0.000000e+00 : f32
    %6 = vector.broadcast %cst_5 : f32 to vector<16x64xf32>
    %7 = arith.maximumf %5, %6 : vector<16x64xf32>
    %8 = arith.truncf %7 : vector<16x64xf32> to vector<16x64xbf16>
    %c0_6 = arith.constant 0 : index
    %c0_7 = arith.constant 0 : index
    %9 = vector.load %arg4[%c0_6, %c0_7] : memref<1x64xbf16, #tpu.memory_space<vmem>>, vector<1x64xbf16>
    %c0_8 = arith.constant 0 : index
    %c0_9 = arith.constant 0 : index
    %10 = vector.load %arg5[%c0_8, %c0_9] : memref<1x32xbf16, #tpu.memory_space<vmem>>, vector<1x32xbf16>
    %c0_10 = arith.constant 0 : index
    %c0_11 = arith.constant 0 : index
    %11 = vector.load %arg6[%c0_10, %c0_11] : memref<64x3xbf16, #tpu.memory_space<vmem>>, vector<64x3xbf16>
    %cst_12 = arith.constant dense<0.000000e+00> : vector<1x3xf32>
    %12 = tpu.matmul %9, %11, %cst_12 {dimension_numbers = #tpu.dot_dimension_numbers<[1], [0], [0], [1], [0, 0, 1, 1], [], []>} : vector<1x64xbf16>, vector<64x3xbf16>, vector<1x3xf32> -> vector<1x3xf32>
    %c0_13 = arith.constant 0 : index
    %c0_14 = arith.constant 0 : index
    %13 = vector.load %arg7[%c0_13, %c0_14] : memref<32x3xbf16, #tpu.memory_space<vmem>>, vector<32x3xbf16>
    %cst_15 = arith.constant dense<0.000000e+00> : vector<1x3xf32>
    %14 = tpu.matmul %10, %13, %cst_15 {dimension_numbers = #tpu.dot_dimension_numbers<[1], [0], [0], [1], [0, 0, 1, 1], [], []>} : vector<1x32xbf16>, vector<32x3xbf16>, vector<1x3xf32> -> vector<1x3xf32>
    %15 = arith.addf %12, %14 : vector<1x3xf32>
    %c0_16 = arith.constant 0 : index
    %c0_17 = arith.constant 0 : index
    %16 = vector.load %arg9[%c0_16, %c0_17] : memref<1x3xf32, #tpu.memory_space<vmem>>, vector<1x3xf32>
    %17 = arith.addf %15, %16 : vector<1x3xf32>
    %c0_18 = arith.constant 0 : index
    %c0_19 = arith.constant 0 : index
    %18 = vector.load %arg8[%c0_18, %c0_19] : memref<64x3xbf16, #tpu.memory_space<vmem>>, vector<64x3xbf16>
    %cst_20 = arith.constant dense<0.000000e+00> : vector<16x3xf32>
    %19 = tpu.matmul %8, %18, %cst_20 {dimension_numbers = #tpu.dot_dimension_numbers<[1], [0], [0], [1], [0, 0, 1, 1], [], []>} : vector<16x64xbf16>, vector<64x3xbf16>, vector<16x3xf32> -> vector<16x3xf32>
    %20 = vector.broadcast %17 : vector<1x3xf32> to vector<16x3xf32>
    %21 = arith.addf %19, %20 : vector<16x3xf32>
    %cst_21 = arith.constant dense<0xFF800000> : vector<16xf32>
    %22 = vector.multi_reduction <maximumf>, %21, %cst_21 [1] : vector<16x3xf32> to vector<16xf32>
    %23 = vector.shape_cast %22 : vector<16xf32> to vector<16x1xf32>
    %24 = vector.broadcast %23 : vector<16x1xf32> to vector<16x3xf32>
    %25 = arith.subf %21, %24 : vector<16x3xf32>
    %26 = math.exp %25 : vector<16x3xf32>
    %cst_22 = arith.constant dense<0.000000e+00> : vector<16xf32>
    %27 = vector.multi_reduction <add>, %26, %cst_22 [1] : vector<16x3xf32> to vector<16xf32>
    %28 = vector.shape_cast %27 : vector<16xf32> to vector<16x1xf32>
    %29 = vector.broadcast %28 : vector<16x1xf32> to vector<16x3xf32>
    %30 = arith.divf %26, %29 : vector<16x3xf32>
    %c0_23 = arith.constant 0 : index
    %c0_24 = arith.constant 0 : index
    %31 = vector.load %arg14[%c0_23, %c0_24] : memref<16x3xf32, #tpu.memory_space<vmem>>, vector<16x3xf32>
    tpu.vector_store %arg14[%c0_23, %c0_24], %30 {strides = array<i32>} : memref<16x3xf32, #tpu.memory_space<vmem>>, vector<16x3xf32>,
    %c0_25 = arith.constant 0 : index
    %c0_26 = arith.constant 0 : index
    %32 = vector.load %arg10[%c0_25, %c0_26] : memref<64x12xbf16, #tpu.memory_space<vmem>>, vector<64x12xbf16>
    %cst_27 = arith.constant dense<0.000000e+00> : vector<1x12xf32>
    %33 = tpu.matmul %9, %32, %cst_27 {dimension_numbers = #tpu.dot_dimension_numbers<[1], [0], [0], [1], [0, 0, 1, 1], [], []>} : vector<1x64xbf16>, vector<64x12xbf16>, vector<1x12xf32> -> vector<1x12xf32>
    %c0_28 = arith.constant 0 : index
    %c0_29 = arith.constant 0 : index
    %34 = vector.load %arg11[%c0_28, %c0_29] : memref<32x12xbf16, #tpu.memory_space<vmem>>, vector<32x12xbf16>
    %cst_30 = arith.constant dense<0.000000e+00> : vector<1x12xf32>
    %35 = tpu.matmul %10, %34, %cst_30 {dimension_numbers = #tpu.dot_dimension_numbers<[1], [0], [0], [1], [0, 0, 1, 1], [], []>} : vector<1x32xbf16>, vector<32x12xbf16>, vector<1x12xf32> -> vector<1x12xf32>
    %36 = arith.addf %33, %35 : vector<1x12xf32>
    %c0_31 = arith.constant 0 : index
    %c0_32 = arith.constant 0 : index
    %37 = vector.load %arg13[%c0_31, %c0_32] : memref<1x12xf32, #tpu.memory_space<vmem>>, vector<1x12xf32>
    %38 = arith.addf %36, %37 : vector<1x12xf32>
    %c0_33 = arith.constant 0 : index
    %c0_34 = arith.constant 0 : index
    %39 = vector.load %arg12[%c0_33, %c0_34] : memref<64x12xbf16, #tpu.memory_space<vmem>>, vector<64x12xbf16>
    %cst_35 = arith.constant dense<0.000000e+00> : vector<16x12xf32>
    %40 = tpu.matmul %8, %39, %cst_35 {dimension_numbers = #tpu.dot_dimension_numbers<[1], [0], [0], [1], [0, 0, 1, 1], [], []>} : vector<16x64xbf16>, vector<64x12xbf16>, vector<16x12xf32> -> vector<16x12xf32>
    %41 = vector.broadcast %38 : vector<1x12xf32> to vector<16x12xf32>
    %42 = arith.addf %40, %41 : vector<16x12xf32>
    %c0_36 = arith.constant 0 : index
    %c0_37 = arith.constant 0 : index
    %43 = vector.load %arg15[%c0_36, %c0_37] : memref<16x12xf32, #tpu.memory_space<vmem>>, vector<16x12xf32>
    tpu.vector_store %arg15[%c0_36, %c0_37], %42 {strides = array<i32>} : memref<16x12xf32, #tpu.memory_space<vmem>>, vector<16x12xf32>,
    return
  }
  func.func @transform_0(%arg0: i32) -> (i32, i32) {
    %c0_i32 = arith.constant 0 : i32
    %c0_i32_0 = arith.constant 0 : i32
    %c0_i32_1 = arith.constant 0 : i32
    return %c0_i32, %c0_i32_0 : i32, i32
  }
  func.func @transform_1(%arg0: i32) -> (i32, i32) {
    %c0_i32 = arith.constant 0 : i32
    %c0_i32_0 = arith.constant 0 : i32
    %c0_i32_1 = arith.constant 0 : i32
    return %c0_i32, %c0_i32_0 : i32, i32
  }
  func.func @transform_2(%arg0: i32) -> (i32, i32) {
    %c0_i32 = arith.constant 0 : i32
    %c0_i32_0 = arith.constant 0 : i32
    %c0_i32_1 = arith.constant 0 : i32
    return %c0_i32, %c0_i32_0 : i32, i32
  }
  func.func @transform_3(%arg0: i32) -> (i32, i32) {
    %c0_i32 = arith.constant 0 : i32
    %c0_i32_0 = arith.constant 0 : i32
    %c0_i32_1 = arith.constant 0 : i32
    return %c0_i32, %c0_i32_0 : i32, i32
  }
  func.func @transform_4(%arg0: i32) -> (i32, i32) {
    %c0_i32 = arith.constant 0 : i32
    %c0_i32_0 = arith.constant 0 : i32
    %c0_i32_1 = arith.constant 0 : i32
    return %c0_i32, %c0_i32_0 : i32, i32
  }
  func.func @transform_5(%arg0: i32) -> (i32, i32) {
    %c0_i32 = arith.constant 0 : i32
    %c0_i32_0 = arith.constant 0 : i32
    %c0_i32_1 = arith.constant 0 : i32
    return %c0_i32, %c0_i32_0 : i32, i32
  }
  func.func @transform_6(%arg0: i32) -> (i32, i32) {
    %c0_i32 = arith.constant 0 : i32
    %c0_i32_0 = arith.constant 0 : i32
    %c0_i32_1 = arith.constant 0 : i32
    return %c0_i32, %c0_i32_0 : i32, i32
  }
  func.func @transform_7(%arg0: i32) -> (i32, i32) {
    %c0_i32 = arith.constant 0 : i32
    %c0_i32_0 = arith.constant 0 : i32
    %c0_i32_1 = arith.constant 0 : i32
    return %c0_i32, %c0_i32_0 : i32, i32
  }
  func.func @transform_8(%arg0: i32) -> (i32, i32) {
    %c0_i32 = arith.constant 0 : i32
    %c0_i32_0 = arith.constant 0 : i32
    %c0_i32_1 = arith.constant 0 : i32
    return %c0_i32, %c0_i32_0 : i32, i32
  }
  func.func @transform_9(%arg0: i32) -> (i32, i32) {
    %c0_i32 = arith.constant 0 : i32
    %c0_i32_0 = arith.constant 0 : i32
    %c0_i32_1 = arith.constant 0 : i32
    return %c0_i32, %c0_i32_0 : i32, i32
  }
  func.func @transform_10(%arg0: i32) -> (i32, i32) {
    %c0_i32 = arith.constant 0 : i32
    %c0_i32_0 = arith.constant 0 : i32
    %c0_i32_1 = arith.constant 0 : i32
    return %c0_i32, %c0_i32_0 : i32, i32
  }
  func.func @transform_11(%arg0: i32) -> (i32, i32) {
    %c0_i32 = arith.constant 0 : i32
    %c0_i32_0 = arith.constant 0 : i32
    %c0_i32_1 = arith.constant 0 : i32
    return %c0_i32, %c0_i32_0 : i32, i32
  }
  func.func @transform_12(%arg0: i32) -> (i32, i32) {
    %c0_i32 = arith.constant 0 : i32
    %c0_i32_0 = arith.constant 0 : i32
    %c0_i32_1 = arith.constant 0 : i32
    return %c0_i32, %c0_i32_0 : i32, i32
  }
  func.func @transform_13(%arg0: i32) -> (i32, i32) {
    %c0_i32 = arith.constant 0 : i32
    %c0_i32_0 = arith.constant 0 : i32
    %c0_i32_1 = arith.constant 0 : i32
    return %c0_i32, %c0_i32_0 : i32, i32
  }
  func.func @transform_14(%arg0: i32) -> (i32, i32) {
    %c0_i32 = arith.constant 0 : i32
    %c0_i32_0 = arith.constant 0 : i32
    %c0_i32_1 = arith.constant 0 : i32
    return %c0_i32, %c0_i32_0 : i32, i32
  }
}

</mosaic_0001>

<llo_original>
// kernel: faster_rcnn_forward.4
$region0: #{faster_rcnn_forward.4}
  #allocation0 [shape = 'u32[]', space=smem, size = 0x4, offset = 0x4, fixed_abs, tag = 'smem constant byte address 0x4 - core index']
  #allocation1 [shape = 'u32[144,128]{1,0:T(1,128)}', space=vmem, size = 0x12000, scoped, tag = 'internal scratch']
  #allocation2 [shape = 'f32[1,1]{1,0:T(1,128)S(1)}', space=vmem, size = 0x200, scoped, tag = 'scoped memory for faster_rcnn_forward.4']
  %s0 = inlined_call_operand.vmem [shape: bf16[512,32], index: 0, kind: input, shape index: {}]
  %s1 = inlined_call_operand.vmem [shape: bf16[32,32], index: 1, kind: input, shape index: {}]
  %s2 = inlined_call_operand.vmem [shape: f32[1,32], index: 2, kind: input, shape index: {}]
  %s3 = inlined_call_operand.vmem [shape: bf16[32,32], index: 3, kind: input, shape index: {}]
  %s4 = inlined_call_operand.vmem [shape: f32[1,32], index: 4, kind: input, shape index: {}]
  %s5 = inlined_call_operand.vmem [shape: bf16[32,16], index: 5, kind: input, shape index: {}]
  %s6 = inlined_call_operand.vmem [shape: f32[1,16], index: 6, kind: input, shape index: {}]
  %s7 = inlined_call_operand.vmem [shape: bf16[16,1], index: 7, kind: input, shape index: {}]
  %s8 = inlined_call_operand.<no memory space> [shape: f32[1,1], index: 8, kind: input, shape index: {}]
  %s9 = inlined_call_operand.vmem [shape: bf16[2,512], index: 9, kind: input, shape index: {}]
  %s10 = inlined_call_operand.vmem [shape: bf16[512,32], index: 10, kind: output, shape index: {0}]
  %s11 = inlined_call_operand.vmem [shape: f32[512,1], index: 11, kind: output, shape index: {1}]
  %s12 = inlined_call_operand.vmem [shape: bf16[2,16], index: 12, kind: output, shape index: {2}]
  %13 = xla_tuple %s10, %s11, %s12
  %s14 = sld [smem:[#allocation0]]
  $region66: #{faster_rcnn_forward.4} parent=0
    _
  %s16 = ssub.s32 1, %s14
  %s17 = scalar_select 0, %s16, %s14
  %v18 = vstv %s8
  %19 = vst [vmem:[#allocation2] sm:$0x1] %v18
  // Predicated region
  $region2: #{faster_rcnn_forward.4} parent=0 // pred_check
    _
  $region3: #{faster_rcnn_forward.4} parent=0 // pred_check_branch
    %21 = sbr.rel (0) target = $region5
  $region4: #{faster_rcnn_forward.4} parent=0 // pred_region
    _
  $region5: #{faster_rcnn_forward.4} parent=0 // pred_fallthru
    _
  // Predicated region
  $region6: #{faster_rcnn_forward.4} parent=0 // pred_check
    _
  $region7: #{faster_rcnn_forward.4} parent=0 // pred_check_branch
    %23 = sbr.rel (0) target = $region9
  $region8: #{faster_rcnn_forward.4} parent=0 // pred_region
    _
  $region9: #{faster_rcnn_forward.4} parent=0 // pred_fallthru
    _
  // Predicated region
  $region10: #{faster_rcnn_forward.4} parent=0 // pred_check
    _
  $region11: #{faster_rcnn_forward.4} parent=0 // pred_check_branch
    %25 = sbr.rel (0) target = $region13
  $region12: #{faster_rcnn_forward.4} parent=0 // pred_region
    _
  $region13: #{faster_rcnn_forward.4} parent=0 // pred_fallthru
    _
  // Predicated region
  $region14: #{faster_rcnn_forward.4} parent=0 // pred_check
    _
  $region15: #{faster_rcnn_forward.4} parent=0 // pred_check_branch
    %27 = sbr.rel (0) target = $region17
  $region16: #{faster_rcnn_forward.4} parent=0 // pred_region
    _
  $region17: #{faster_rcnn_forward.4} parent=0 // pred_fallthru
    _
  // Predicated region
  $region18: #{faster_rcnn_forward.4} parent=0 // pred_check
    _
  $region19: #{faster_rcnn_forward.4} parent=0 // pred_check_branch
    %29 = sbr.rel (0) target = $region21
  $region20: #{faster_rcnn_forward.4} parent=0 // pred_region
    _
  $region21: #{faster_rcnn_forward.4} parent=0 // pred_fallthru
    _
  // Predicated region
  $region22: #{faster_rcnn_forward.4} parent=0 // pred_check
    _
  $region23: #{faster_rcnn_forward.4} parent=0 // pred_check_branch
    %31 = sbr.rel (0) target = $region25
  $region24: #{faster_rcnn_forward.4} parent=0 // pred_region
    _
  $region25: #{faster_rcnn_forward.4} parent=0 // pred_fallthru
    _
  // Predicated region
  $region26: #{faster_rcnn_forward.4} parent=0 // pred_check
    _
  $region27: #{faster_rcnn_forward.4} parent=0 // pred_check_branch
    %33 = sbr.rel (0) target = $region29
  $region28: #{faster_rcnn_forward.4} parent=0 // pred_region
    _
  $region29: #{faster_rcnn_forward.4} parent=0 // pred_fallthru
    _
  // Predicated region
  $region30: #{faster_rcnn_forward.4} parent=0 // pred_check
    _
  $region31: #{faster_rcnn_forward.4} parent=0 // pred_check_branch
    %35 = sbr.rel (0) target = $region33
  $region32: #{faster_rcnn_forward.4} parent=0 // pred_region
    _
  $region33: #{faster_rcnn_forward.4} parent=0 // pred_fallthru
    _
  // Predicated region
  $region34: #{faster_rcnn_forward.4} parent=0 // pred_check
    _
  $region35: #{faster_rcnn_forward.4} parent=0 // pred_check_branch
    %37 = sbr.rel (0) target = $region37
  $region36: #{faster_rcnn_forward.4} parent=0 // pred_region
    _
  $region37: #{faster_rcnn_forward.4} parent=0 // pred_fallthru
    _
  // Predicated region
  $region38: #{faster_rcnn_forward.4} parent=0 // pred_check
    _
  $region39: #{faster_rcnn_forward.4} parent=0 // pred_check_branch
    %39 = sbr.rel (0) target = $region41
  $region40: #{faster_rcnn_forward.4} parent=0 // pred_region
    _
  $region41: #{faster_rcnn_forward.4} parent=0 // pred_fallthru
    _
  %v41 = vld [vmem:[%s0] sm:$0xf]
  %v42 = vld [vmem:[%s0 + $0x4] sm:$0xf]
  %v43 = vld [vmem:[%s0 + $0x8] sm:$0xf]
  %v44 = vld [vmem:[%s0 + $0xc] sm:$0xf]
  %v45 = vld [vmem:[%s0 + $0x10] sm:$0xf]
  %v46 = vld [vmem:[%s0 + $0x14] sm:$0xf]
  %v47 = vld [vmem:[%s0 + $0x18] sm:$0xf]
  %v48 = vld [vmem:[%s0 + $0x1c] sm:$0xf]
  %v49 = vld [vmem:[%s0 + $0x20] sm:$0xf]
  %v50 = vld [vmem:[%s0 + $0x24] sm:$0xf]
  %v51 = vld [vmem:[%s0 + $0x28] sm:$0xf]
  %v52 = vld [vmem:[%s0 + $0x2c] sm:$0xf]
  %v53 = vld [vmem:[%s0 + $0x30] sm:$0xf]
  %v54 = vld [vmem:[%s0 + $0x34] sm:$0xf]
  %v55 = vld [vmem:[%s0 + $0x38] sm:$0xf]
  %v56 = vld [vmem:[%s0 + $0x3c] sm:$0xf]
  %v57 = vld [vmem:[%s0 + $0x40] sm:$0xf]
  %v58 = vld [vmem:[%s0 + $0x44] sm:$0xf]
  %v59 = vld [vmem:[%s0 + $0x48] sm:$0xf]
  %v60 = vld [vmem:[%s0 + $0x4c] sm:$0xf]
  %v61 = vld [vmem:[%s0 + $0x50] sm:$0xf]
  %v62 = vld [vmem:[%s0 + $0x54] sm:$0xf]
  %v63 = vld [vmem:[%s0 + $0x58] sm:$0xf]
  %v64 = vld [vmem:[%s0 + $0x5c] sm:$0xf]
  %v65 = vld [vmem:[%s0 + $0x60] sm:$0xf]
  %v66 = vld [vmem:[%s0 + $0x64] sm:$0xf]
  %v67 = vld [vmem:[%s0 + $0x68] sm:$0xf]
  %v68 = vld [vmem:[%s0 + $0x6c] sm:$0xf]
  %v69 = vld [vmem:[%s0 + $0x70] sm:$0xf]
  %v70 = vld [vmem:[%s0 + $0x74] sm:$0xf]
  %v71 = vld [vmem:[%s0 + $0x78] sm:$0xf]
  %v72 = vld [vmem:[%s0 + $0x7c] sm:$0xf]
  %v73 = vld [vmem:[%s0 + $0x80] sm:$0xf]
  %v74 = vld [vmem:[%s0 + $0x84] sm:$0xf]
  %v75 = vld [vmem:[%s0 + $0x88] sm:$0xf]
  %v76 = vld [vmem:[%s0 + $0x8c] sm:$0xf]
  %v77 = vld [vmem:[%s0 + $0x90] sm:$0xf]
  %v78 = vld [vmem:[%s0 + $0x94] sm:$0xf]
  %v79 = vld [vmem:[%s0 + $0x98] sm:$0xf]
  %v80 = vld [vmem:[%s0 + $0x9c] sm:$0xf]
  %v81 = vld [vmem:[%s0 + $0xa0] sm:$0xf]
  %v82 = vld [vmem:[%s0 + $0xa4] sm:$0xf]
  %v83 = vld [vmem:[%s0 + $0xa8] sm:$0xf]
  %v84 = vld [vmem:[%s0 + $0xac] sm:$0xf]
  %v85 = vld [vmem:[%s0 + $0xb0] sm:$0xf]
  %v86 = vld [vmem:[%s0 + $0xb4] sm:$0xf]
  %v87 = vld [vmem:[%s0 + $0xb8] sm:$0xf]
  %v88 = vld [vmem:[%s0 + $0xbc] sm:$0xf]
  %v89 = vld [vmem:[%s0 + $0xc0] sm:$0xf]
  %v90 = vld [vmem:[%s0 + $0xc4] sm:$0xf]
  %v91 = vld [vmem:[%s0 + $0xc8] sm:$0xf]
  %v92 = vld [vmem:[%s0 + $0xcc] sm:$0xf]
  %v93 = vld [vmem:[%s0 + $0xd0] sm:$0xf]
  %v94 = vld [vmem:[%s0 + $0xd4] sm:$0xf]
  %v95 = vld [vmem:[%s0 + $0xd8] sm:$0xf]
  %v96 = vld [vmem:[%s0 + $0xdc] sm:$0xf]
  %v97 = vld [vmem:[%s0 + $0xe0] sm:$0xf]
  %v98 = vld [vmem:[%s0 + $0xe4] sm:$0xf]
  %v99 = vld [vmem:[%s0 + $0xe8] sm:$0xf]
  %v100 = vld [vmem:[%s0 + $0xec] sm:$0xf]
  %v101 = vld [vmem:[%s0 + $0xf0] sm:$0xf]
  %v102 = vld [vmem:[%s0 + $0xf4] sm:$0xf]
  %v103 = vld [vmem:[%s0 + $0xf8] sm:$0xf]
  %v104 = vld [vmem:[%s0 + $0xfc] sm:$0xf]
  %v105 = vld [vmem:[%s1] sm:$0xf]
  %v106 = vld [vmem:[%s1 + $0x4] sm:$0xf]
  %v107 = vld [vmem:[%s1 + $0x8] sm:$0xf]
  %v108 = vld [vmem:[%s1 + $0xc] sm:$0xf]
  %v109 = vld [vmem:[%s2] sm:$0x1]
  %v111 = vlaneseq
  %v112 = vshrl.u32 %v111, 7
  %v113 = vsub.s32 0, %v112
  %v114 = vrot.slane %v109, %v113
  %v180 = vunpack.c.l.b16 %v41
  %v181 = vunpack.c.l.b16 %v42
  %v182 = vunpack.c.l.b16 %v43
  %v183 = vunpack.c.l.b16 %v44
  %v184 = vunpack.c.l.b16 %v45
  %v185 = vunpack.c.l.b16 %v46
  %v186 = vunpack.c.l.b16 %v47
  %v187 = vunpack.c.l.b16 %v48
  %v188 = vunpack.c.l.b16 %v49
  %v189 = vunpack.c.l.b16 %v50
  %v190 = vunpack.c.l.b16 %v51
  %v191 = vunpack.c.l.b16 %v52
  %v192 = vunpack.c.l.b16 %v53
  %v193 = vunpack.c.l.b16 %v54
  %v194 = vunpack.c.l.b16 %v55
  %v195 = vunpack.c.l.b16 %v56
  %v196 = vunpack.c.l.b16 %v57
  %v197 = vunpack.c.l.b16 %v58
  %v198 = vunpack.c.l.b16 %v59
  %v199 = vunpack.c.l.b16 %v60
  %v200 = vunpack.c.l.b16 %v61
  %v201 = vunpack.c.l.b16 %v62
  %v202 = vunpack.c.l.b16 %v63
  %v203 = vunpack.c.l.b16 %v64
  %v204 = vunpack.c.l.b16 %v65
  %v205 = vunpack.c.l.b16 %v66
  %v206 = vunpack.c.l.b16 %v67
  %v207 = vunpack.c.l.b16 %v68
  %v208 = vunpack.c.l.b16 %v69
  %v209 = vunpack.c.l.b16 %v70
  %v210 = vunpack.c.l.b16 %v71
  %v211 = vunpack.c.l.b16 %v72
  %v212 = vunpack.c.l.b16 %v73
  %v213 = vunpack.c.l.b16 %v74
  %v214 = vunpack.c.l.b16 %v75
  %v215 = vunpack.c.l.b16 %v76
  %v216 = vunpack.c.l.b16 %v77
  %v217 = vunpack.c.l.b16 %v78
  %v218 = vunpack.c.l.b16 %v79
  %v219 = vunpack.c.l.b16 %v80
  %v220 = vunpack.c.l.b16 %v81
  %v221 = vunpack.c.l.b16 %v82
  %v222 = vunpack.c.l.b16 %v83
  %v223 = vunpack.c.l.b16 %v84
  %v224 = vunpack.c.l.b16 %v85
  %v225 = vunpack.c.l.b16 %v86
  %v226 = vunpack.c.l.b16 %v87
  %v227 = vunpack.c.l.b16 %v88
  %v228 = vunpack.c.l.b16 %v89
  %v229 = vunpack.c.l.b16 %v90
  %v230 = vunpack.c.l.b16 %v91
  %v231 = vunpack.c.l.b16 %v92
  %v232 = vunpack.c.l.b16 %v93
  %v233 = vunpack.c.l.b16 %v94
  %v234 = vunpack.c.l.b16 %v95
  %v235 = vunpack.c.l.b16 %v96
  %v236 = vunpack.c.l.b16 %v97
  %v237 = vunpack.c.l.b16 %v98
  %v238 = vunpack.c.l.b16 %v99
  %v239 = vunpack.c.l.b16 %v100
  %v240 = vunpack.c.l.b16 %v101
  %v241 = vunpack.c.l.b16 %v102
  %v242 = vunpack.c.l.b16 %v103
  %v243 = vunpack.c.l.b16 %v104
  %v244 = vpack.c.b16 %v181, %v180
  %v245 = vpack.c.b16 %v183, %v182
  %v246 = vpack.c.b16 %v185, %v184
  %v247 = vpack.c.b16 %v187, %v186
  %v248 = vpack.c.b16 %v189, %v188
  %v249 = vpack.c.b16 %v191, %v190
  %v250 = vpack.c.b16 %v193, %v192
  %v251 = vpack.c.b16 %v195, %v194
  %v252 = vpack.c.b16 %v197, %v196
  %v253 = vpack.c.b16 %v199, %v198
  %v254 = vpack.c.b16 %v201, %v200
  %v255 = vpack.c.b16 %v203, %v202
  %v256 = vpack.c.b16 %v205, %v204
  %v257 = vpack.c.b16 %v207, %v206
  %v258 = vpack.c.b16 %v209, %v208
  %v259 = vpack.c.b16 %v211, %v210
  %v260 = vpack.c.b16 %v213, %v212
  %v261 = vpack.c.b16 %v215, %v214
  %v262 = vpack.c.b16 %v217, %v216
  %v263 = vpack.c.b16 %v219, %v218
  %v264 = vpack.c.b16 %v221, %v220
  %v265 = vpack.c.b16 %v223, %v222
  %v266 = vpack.c.b16 %v225, %v224
  %v267 = vpack.c.b16 %v227, %v226
  %v268 = vpack.c.b16 %v229, %v228
  %v269 = vpack.c.b16 %v231, %v230
  %v270 = vpack.c.b16 %v233, %v232
  %v271 = vpack.c.b16 %v235, %v234
  %v272 = vpack.c.b16 %v237, %v236
  %v273 = vpack.c.b16 %v239, %v238
  %v274 = vpack.c.b16 %v241, %v240
  %v275 = vpack.c.b16 %v243, %v242
  %v280 = vunpack.c.l.b16 %v105
  %v281 = vunpack.c.l.b16 %v106
  %v282 = vunpack.c.l.b16 %v107
  %v283 = vunpack.c.l.b16 %v108
  %v284 = vpack.c.b16 %v281, %v280
  %v285 = vpack.c.b16 %v283, %v282
  %vm288 = vcmask 261120
  %v290 = vsel %vm288, %v244, 0
  %v293 = vsel %vm288, %v245, 0
  %v296 = vsel %vm288, %v246, 0
  %v299 = vsel %vm288, %v247, 0
  %v302 = vsel %vm288, %v248, 0
  %v305 = vsel %vm288, %v249, 0
  %v308 = vsel %vm288, %v250, 0
  %v311 = vsel %vm288, %v251, 0
  %v314 = vsel %vm288, %v252, 0
  %v317 = vsel %vm288, %v253, 0
  %v320 = vsel %vm288, %v254, 0
  %v323 = vsel %vm288, %v255, 0
  %v326 = vsel %vm288, %v256, 0
  %v329 = vsel %vm288, %v257, 0
  %v332 = vsel %vm288, %v258, 0
  %v335 = vsel %vm288, %v259, 0
  %v338 = vsel %vm288, %v260, 0
  %v341 = vsel %vm288, %v261, 0
  %v344 = vsel %vm288, %v262, 0
  %v347 = vsel %vm288, %v263, 0
  %v350 = vsel %vm288, %v264, 0
  %v353 = vsel %vm288, %v265, 0
  %v356 = vsel %vm288, %v266, 0
  %v359 = vsel %vm288, %v267, 0
  %v362 = vsel %vm288, %v268, 0
  %v365 = vsel %vm288, %v269, 0
  %v368 = vsel %vm288, %v270, 0
  %v371 = vsel %vm288, %v271, 0
  %v374 = vsel %vm288, %v272, 0
  %v377 = vsel %vm288, %v273, 0
  %v380 = vsel %vm288, %v274, 0
  %v383 = vsel %vm288, %v275, 0
  %385 = vmatprep.subr.bf16.mxu0 0
  %386 = vmatpush1.bf16.msra.mxu0 %v284
  %387 = vmatprep.subr.bf16.mxu0 0
  %388 = vmatpush1.bf16.msra.mxu0 %v285
  %389 = vmatprep.subr.bf16.mxu0 0
  %390 = vmatpush1.bf16.msra.mxu0 0
  %391 = vmatprep.subr.bf16.mxu0 0
  %392 = vmatpush1.bf16.msra.mxu0 0
  %393 = vmatprep.subr.bf16.mxu0 0
  %394 = vmatpush1.bf16.msra.mxu0 0
  %395 = vmatprep.subr.bf16.mxu0 0
  %396 = vmatpush1.bf16.msra.mxu0 0
  %397 = vmatprep.subr.bf16.mxu0 0
  %398 = vmatpush1.bf16.msra.mxu0 0
  %399 = vmatprep.subr.bf16.mxu0 0
  %400 = vmatpush1.bf16.msra.mxu0 0
  %401 = vmatprep.subr.bf16.mxu0 0
  %402 = vmatpush1.bf16.msra.mxu0 0
  %403 = vmatprep.subr.bf16.mxu0 0
  %404 = vmatpush1.bf16.msra.mxu0 0
  %405 = vmatprep.subr.bf16.mxu0 0
  %406 = vmatpush1.bf16.msra.mxu0 0
  %407 = vmatprep.subr.bf16.mxu0 0
  %408 = vmatpush1.bf16.msra.mxu0 0
  %409 = vmatprep.subr.bf16.mxu0 0
  %410 = vmatpush1.bf16.msra.mxu0 0
  %411 = vmatprep.subr.bf16.mxu0 0
  %412 = vmatpush1.bf16.msra.mxu0 0
  %413 = vmatprep.subr.bf16.mxu0 0
  %414 = vmatpush1.bf16.msra.mxu0 0
  %415 = vmatprep.subr.bf16.mxu0 0
  %416 = vmatpush1.bf16.msra.mxu0 0
  %417 = vmatprep.mubr.bf16.mxu0 0
  %418 = vmatmul.mubr.bf16.gmra.mrb[0].mxu0 %v290
  %v419 = vpop.f32.mrb[0].mxu0
  %v420 = vadd.f32 %v114, %v419
  %v421 = vpop.f32.mrb[0].mxu0
  %v422 = vpop.f32.mrb[0].mxu0
  %v423 = vadd.f32 %v114, %v422
  %v424 = vpop.f32.mrb[0].mxu0
  %425 = vmatprep.mubr.bf16.mxu0 0
  %426 = vmatmul.mubr.bf16.gmra.mrb[0].mxu0 %v293
  %v427 = vpop.f32.mrb[0].mxu0
  %v428 = vadd.f32 %v114, %v427
  %v429 = vpop.f32.mrb[0].mxu0
  %v430 = vpop.f32.mrb[0].mxu0
  %v431 = vadd.f32 %v114, %v430
  %v432 = vpop.f32.mrb[0].mxu0
  %433 = vmatprep.mubr.bf16.mxu0 0
  %434 = vmatmul.mubr.bf16.gmra.mrb[0].mxu0 %v296
  %v435 = vpop.f32.mrb[0].mxu0
  %v436 = vadd.f32 %v114, %v435
  %v437 = vpop.f32.mrb[0].mxu0
  %v438 = vpop.f32.mrb[0].mxu0
  %v439 = vadd.f32 %v114, %v438
  %v440 = vpop.f32.mrb[0].mxu0
  %441 = vmatprep.mubr.bf16.mxu0 0
  %442 = vmatmul.mubr.bf16.gmra.mrb[0].mxu0 %v299
  %v443 = vpop.f32.mrb[0].mxu0
  %v444 = vadd.f32 %v114, %v443
  %v445 = vpop.f32.mrb[0].mxu0
  %v446 = vpop.f32.mrb[0].mxu0
  %v447 = vadd.f32 %v114, %v446
  %v448 = vpop.f32.mrb[0].mxu0
  %449 = vmatprep.mubr.bf16.mxu0 0
  %450 = vmatmul.mubr.bf16.gmra.mrb[0].mxu0 %v302
  %v451 = vpop.f32.mrb[0].mxu0
  %v452 = vadd.f32 %v114, %v451
  %v453 = vpop.f32.mrb[0].mxu0
  %v454 = vpop.f32.mrb[0].mxu0
  %v455 = vadd.f32 %v114, %v454
  %v456 = vpop.f32.mrb[0].mxu0
  %457 = vmatprep.mubr.bf16.mxu0 0
  %458 = vmatmul.mubr.bf16.gmra.mrb[0].mxu0 %v305
  %v459 = vpop.f32.mrb[0].mxu0
  %v460 = vadd.f32 %v114, %v459
  %v461 = vpop.f32.mrb[0].mxu0
  %v462 = vpop.f32.mrb[0].mxu0
  %v463 = vadd.f32 %v114, %v462
  %v464 = vpop.f32.mrb[0].mxu0
  %465 = vmatprep.mubr.bf16.mxu0 0
  %466 = vmatmul.mubr.bf16.gmra.mrb[0].mxu0 %v308
  %v467 = vpop.f32.mrb[0].mxu0
  %v468 = vadd.f32 %v114, %v467
  %v469 = vpop.f32.mrb[0].mxu0
  %v470 = vpop.f32.mrb[0].mxu0
  %v471 = vadd.f32 %v114, %v470
  %v472 = vpop.f32.mrb[0].mxu0
  %473 = vmatprep.mubr.bf16.mxu0 0
  %474 = vmatmul.mubr.bf16.gmra.mrb[0].mxu0 %v311
  %v475 = vpop.f32.mrb[0].mxu0
  %v476 = vadd.f32 %v114, %v475
  %v477 = vpop.f32.mrb[0].mxu0
  %v478 = vpop.f32.mrb[0].mxu0
  %v479 = vadd.f32 %v114, %v478
  %v480 = vpop.f32.mrb[0].mxu0
  %481 = vmatprep.mubr.bf16.mxu0 0
  %482 = vmatmul.mubr.bf16.gmra.mrb[0].mxu0 %v314
  %v483 = vpop.f32.mrb[0].mxu0
  %v484 = vadd.f32 %v114, %v483
  %v485 = vpop.f32.mrb[0].mxu0
  %v486 = vpop.f32.mrb[0].mxu0
  %v487 = vadd.f32 %v114, %v486
  %v488 = vpop.f32.mrb[0].mxu0
  %489 = vmatprep.mubr.bf16.mxu0 0
  %490 = vmatmul.mubr.bf16.gmra.mrb[0].mxu0 %v317
  %v491 = vpop.f32.mrb[0].mxu0
  %v492 = vadd.f32 %v114, %v491
  %v493 = vpop.f32.mrb[0].mxu0
  %v494 = vpop.f32.mrb[0].mxu0
  %v495 = vadd.f32 %v114, %v494
  %v496 = vpop.f32.mrb[0].mxu0
  %497 = vmatprep.mubr.bf16.mxu0 0
  %498 = vmatmul.mubr.bf16.gmra.mrb[0].mxu0 %v320
  %v499 = vpop.f32.mrb[0].mxu0
  %v500 = vadd.f32 %v114, %v499
  %v501 = vpop.f32.mrb[0].mxu0
  %v502 = vpop.f32.mrb[0].mxu0
  %v503 = vadd.f32 %v114, %v502
  %v504 = vpop.f32.mrb[0].mxu0
  %505 = vmatprep.mubr.bf16.mxu0 0
  %506 = vmatmul.mubr.bf16.gmra.mrb[0].mxu0 %v323
  %v507 = vpop.f32.mrb[0].mxu0
  %v508 = vadd.f32 %v114, %v507
  %v509 = vpop.f32.mrb[0].mxu0
  %v510 = vpop.f32.mrb[0].mxu0
  %v511 = vadd.f32 %v114, %v510
  %v512 = vpop.f32.mrb[0].mxu0
  %513 = vmatprep.mubr.bf16.mxu0 0
  %514 = vmatmul.mubr.bf16.gmra.mrb[0].mxu0 %v326
  %v515 = vpop.f32.mrb[0].mxu0
  %v516 = vadd.f32 %v114, %v515
  %v517 = vpop.f32.mrb[0].mxu0
  %v518 = vpop.f32.mrb[0].mxu0
  %v519 = vadd.f32 %v114, %v518
  %v520 = vpop.f32.mrb[0].mxu0
  %521 = vmatprep.mubr.bf16.mxu0 0
  %522 = vmatmul.mubr.bf16.gmra.mrb[0].mxu0 %v329
  %v523 = vpop.f32.mrb[0].mxu0
  %v524 = vadd.f32 %v114, %v523
  %v525 = vpop.f32.mrb[0].mxu0
  %v526 = vpop.f32.mrb[0].mxu0
  %v527 = vadd.f32 %v114, %v526
  %v528 = vpop.f32.mrb[0].mxu0
  %529 = vmatprep.mubr.bf16.mxu0 0
  %530 = vmatmul.mubr.bf16.gmra.mrb[0].mxu0 %v332
  %v531 = vpop.f32.mrb[0].mxu0
  %v532 = vadd.f32 %v114, %v531
  %v533 = vpop.f32.mrb[0].mxu0
  %v534 = vpop.f32.mrb[0].mxu0
  %v535 = vadd.f32 %v114, %v534
  %v536 = vpop.f32.mrb[0].mxu0
  %537 = vmatprep.mubr.bf16.mxu0 0
  %538 = vmatmul.mubr.bf16.gmra.mrb[0].mxu0 %v335
  %v539 = vpop.f32.mrb[0].mxu0
  %v540 = vadd.f32 %v114, %v539
  %v541 = vpop.f32.mrb[0].mxu0
  %v542 = vpop.f32.mrb[0].mxu0
  %v543 = vadd.f32 %v114, %v542
  %v544 = vpop.f32.mrb[0].mxu0
  %545 = vmatprep.mubr.bf16.mxu0 0
  %546 = vmatmul.mubr.bf16.gmra.mrb[0].mxu0 %v338
  %v547 = vpop.f32.mrb[0].mxu0
  %v548 = vadd.f32 %v114, %v547
  %v549 = vpop.f32.mrb[0].mxu0
  %v550 = vpop.f32.mrb[0].mxu0
  %v551 = vadd.f32 %v114, %v550
  %v552 = vpop.f32.mrb[0].mxu0
  %553 = vmatprep.mubr.bf16.mxu0 0
  %554 = vmatmul.mubr.bf16.gmra.mrb[0].mxu0 %v341
  %v555 = vpop.f32.mrb[0].mxu0
  %v556 = vadd.f32 %v114, %v555
  %v557 = vpop.f32.mrb[0].mxu0
  %v558 = vpop.f32.mrb[0].mxu0
  %v559 = vadd.f32 %v114, %v558
  %v560 = vpop.f32.mrb[0].mxu0
  %561 = vmatprep.mubr.bf16.mxu0 0
  %562 = vmatmul.mubr.bf16.gmra.mrb[0].mxu0 %v344
  %v563 = vpop.f32.mrb[0].mxu0
  %v564 = vadd.f32 %v114, %v563
  %v565 = vpop.f32.mrb[0].mxu0
  %v566 = vpop.f32.mrb[0].mxu0
  %v567 = vadd.f32 %v114, %v566
  %v568 = vpop.f32.mrb[0].mxu0
  %569 = vmatprep.mubr.bf16.mxu0 0
  %570 = vmatmul.mubr.bf16.gmra.mrb[0].mxu0 %v347
  %v571 = vpop.f32.mrb[0].mxu0
  %v572 = vadd.f32 %v114, %v571
  %v573 = vpop.f32.mrb[0].mxu0
  %v574 = vpop.f32.mrb[0].mxu0
  %v575 = vadd.f32 %v114, %v574
  %v576 = vpop.f32.mrb[0].mxu0
  %577 = vmatprep.mubr.bf16.mxu0 0
  %578 = vmatmul.mubr.bf16.gmra.mrb[0].mxu0 %v350
  %v579 = vpop.f32.mrb[0].mxu0
  %v580 = vadd.f32 %v114, %v579
  %v581 = vpop.f32.mrb[0].mxu0
  %v582 = vpop.f32.mrb[0].mxu0
  %v583 = vadd.f32 %v114, %v582
  %v584 = vpop.f32.mrb[0].mxu0
  %585 = vmatprep.mubr.bf16.mxu0 0
  %586 = vmatmul.mubr.bf16.gmra.mrb[0].mxu0 %v353
  %v587 = vpop.f32.mrb[0].mxu0
  %v588 = vadd.f32 %v114, %v587
  %v589 = vpop.f32.mrb[0].mxu0
  %v590 = vpop.f32.mrb[0].mxu0
  %v591 = vadd.f32 %v114, %v590
  %v592 = vpop.f32.mrb[0].mxu0
  %593 = vmatprep.mubr.bf16.mxu0 0
  %594 = vmatmul.mubr.bf16.gmra.mrb[0].mxu0 %v356
  %v595 = vpop.f32.mrb[0].mxu0
  %v596 = vadd.f32 %v114, %v595
  %v597 = vpop.f32.mrb[0].mxu0
  %v598 = vpop.f32.mrb[0].mxu0
  %v599 = vadd.f32 %v114, %v598
  %v600 = vpop.f32.mrb[0].mxu0
  %601 = vmatprep.mubr.bf16.mxu0 0
  %602 = vmatmul.mubr.bf16.gmra.mrb[0].mxu0 %v359
  %v603 = vpop.f32.mrb[0].mxu0
  %v604 = vadd.f32 %v114, %v603
  %v605 = vpop.f32.mrb[0].mxu0
  %v606 = vpop.f32.mrb[0].mxu0
  %v607 = vadd.f32 %v114, %v606
  %v608 = vpop.f32.mrb[0].mxu0
  %609 = vmatprep.mubr.bf16.mxu0 0
  %610 = vmatmul.mubr.bf16.gmra.mrb[0].mxu0 %v362
  %v611 = vpop.f32.mrb[0].mxu0
  %v612 = vadd.f32 %v114, %v611
  %v613 = vpop.f32.mrb[0].mxu0
  %v614 = vpop.f32.mrb[0].mxu0
  %v615 = vadd.f32 %v114, %v614
  %v616 = vpop.f32.mrb[0].mxu0
  %617 = vmatprep.mubr.bf16.mxu0 0
  %618 = vmatmul.mubr.bf16.gmra.mrb[0].mxu0 %v365
  %v619 = vpop.f32.mrb[0].mxu0
  %v620 = vadd.f32 %v114, %v619
  %v621 = vpop.f32.mrb[0].mxu0
  %v622 = vpop.f32.mrb[0].mxu0
  %v623 = vadd.f32 %v114, %v622
  %v624 = vpop.f32.mrb[0].mxu0
  %625 = vmatprep.mubr.bf16.mxu0 0
  %626 = vmatmul.mubr.bf16.gmra.mrb[0].mxu0 %v368
  %v627 = vpop.f32.mrb[0].mxu0
  %v628 = vadd.f32 %v114, %v627
  %v629 = vpop.f32.mrb[0].mxu0
  %v630 = vpop.f32.mrb[0].mxu0
  %v631 = vadd.f32 %v114, %v630
  %v632 = vpop.f32.mrb[0].mxu0
  %633 = vmatprep.mubr.bf16.mxu0 0
  %634 = vmatmul.mubr.bf16.gmra.mrb[0].mxu0 %v371
  %v635 = vpop.f32.mrb[0].mxu0
  %v636 = vadd.f32 %v114, %v635
  %v637 = vpop.f32.mrb[0].mxu0
  %v638 = vpop.f32.mrb[0].mxu0
  %v639 = vadd.f32 %v114, %v638
  %v640 = vpop.f32.mrb[0].mxu0
  %641 = vmatprep.mubr.bf16.mxu0 0
  %642 = vmatmul.mubr.bf16.gmra.mrb[0].mxu0 %v374
  %v643 = vpop.f32.mrb[0].mxu0
  %v644 = vadd.f32 %v114, %v643
  %v645 = vpop.f32.mrb[0].mxu0
  %v646 = vpop.f32.mrb[0].mxu0
  %v647 = vadd.f32 %v114, %v646
  %v648 = vpop.f32.mrb[0].mxu0
  %649 = vmatprep.mubr.bf16.mxu0 0
  %650 = vmatmul.mubr.bf16.gmra.mrb[0].mxu0 %v377
  %v651 = vpop.f32.mrb[0].mxu0
  %v652 = vadd.f32 %v114, %v651
  %v653 = vpop.f32.mrb[0].mxu0
  %v654 = vpop.f32.mrb[0].mxu0
  %v655 = vadd.f32 %v114, %v654
  %v656 = vpop.f32.mrb[0].mxu0
  %657 = vmatprep.mubr.bf16.mxu0 0
  %658 = vmatmul.mubr.bf16.gmra.mrb[0].mxu0 %v380
  %v659 = vpop.f32.mrb[0].mxu0
  %v660 = vadd.f32 %v114, %v659
  %v661 = vpop.f32.mrb[0].mxu0
  %v662 = vpop.f32.mrb[0].mxu0
  %v663 = vadd.f32 %v114, %v662
  %v664 = vpop.f32.mrb[0].mxu0
  %665 = vmatprep.mubr.bf16.mxu0 0
  %666 = vmatmul.mubr.bf16.gmra.mrb[0].mxu0 %v383
  %v667 = vpop.f32.mrb[0].mxu0
  %v668 = vadd.f32 %v114, %v667
  %v669 = vpop.f32.mrb[0].mxu0
  %v670 = vpop.f32.mrb[0].mxu0
  %v671 = vadd.f32 %v114, %v670
  %v672 = vpop.f32.mrb[0].mxu0
  %673 = vdwg.mxu0
  %v674 = vmax.f32 %v420, 0.0
  %v675 = vmax.f32 %v423, 0.0
  %v676 = vmax.f32 %v428, 0.0
  %v677 = vmax.f32 %v431, 0.0
  %v678 = vmax.f32 %v436, 0.0
  %v679 = vmax.f32 %v439, 0.0
  %v680 = vmax.f32 %v444, 0.0
  %v681 = vmax.f32 %v447, 0.0
  %v682 = vmax.f32 %v452, 0.0
  %v683 = vmax.f32 %v455, 0.0
  %v684 = vmax.f32 %v460, 0.0
  %v685 = vmax.f32 %v463, 0.0
  %v686 = vmax.f32 %v468, 0.0
  %v687 = vmax.f32 %v471, 0.0
  %v688 = vmax.f32 %v476, 0.0
  %v689 = vmax.f32 %v479, 0.0
  %v690 = vmax.f32 %v484, 0.0
  %v691 = vmax.f32 %v487, 0.0
  %v692 = vmax.f32 %v492, 0.0
  %v693 = vmax.f32 %v495, 0.0
  %v694 = vmax.f32 %v500, 0.0
  %v695 = vmax.f32 %v503, 0.0
  %v696 = vmax.f32 %v508, 0.0
  %v697 = vmax.f32 %v511, 0.0
  %v698 = vmax.f32 %v516, 0.0
  %v699 = vmax.f32 %v519, 0.0
  %v700 = vmax.f32 %v524, 0.0
  %v701 = vmax.f32 %v527, 0.0
  %v702 = vmax.f32 %v532, 0.0
  %v703 = vmax.f32 %v535, 0.0
  %v704 = vmax.f32 %v540, 0.0
  %v705 = vmax.f32 %v543, 0.0
  %v706 = vmax.f32 %v548, 0.0
  %v707 = vmax.f32 %v551, 0.0
  %v708 = vmax.f32 %v556, 0.0
  %v709 = vmax.f32 %v559, 0.0
  %v710 = vmax.f32 %v564, 0.0
  %v711 = vmax.f32 %v567, 0.0
  %v712 = vmax.f32 %v572, 0.0
  %v713 = vmax.f32 %v575, 0.0
  %v714 = vmax.f32 %v580, 0.0
  %v715 = vmax.f32 %v583, 0.0
  %v716 = vmax.f32 %v588, 0.0
  %v717 = vmax.f32 %v591, 0.0
  %v718 = vmax.f32 %v596, 0.0
  %v719 = vmax.f32 %v599, 0.0
  %v720 = vmax.f32 %v604, 0.0
  %v721 = vmax.f32 %v607, 0.0
  %v722 = vmax.f32 %v612, 0.0
  %v723 = vmax.f32 %v615, 0.0
  %v724 = vmax.f32 %v620, 0.0
  %v725 = vmax.f32 %v623, 0.0
  %v726 = vmax.f32 %v628, 0.0
  %v727 = vmax.f32 %v631, 0.0
  %v728 = vmax.f32 %v636, 0.0
  %v729 = vmax.f32 %v639, 0.0
  %v730 = vmax.f32 %v644, 0.0
  %v731 = vmax.f32 %v647, 0.0
  %v732 = vmax.f32 %v652, 0.0
  %v733 = vmax.f32 %v655, 0.0
  %v734 = vmax.f32 %v660, 0.0
  %v735 = vmax.f32 %v663, 0.0
  %v736 = vmax.f32 %v668, 0.0
  %v737 = vmax.f32 %v671, 0.0
  %v738 = vpack.c.bf16 %v675, %v674
  %v739 = vpack.c.bf16 %v677, %v676
  %v740 = vpack.c.bf16 %v679, %v678
  %v741 = vpack.c.bf16 %v681, %v680
  %v742 = vpack.c.bf16 %v683, %v682
  %v743 = vpack.c.bf16 %v685, %v684
  %v744 = vpack.c.bf16 %v687, %v686
  %v745 = vpack.c.bf16 %v689, %v688
  %v746 = vpack.c.bf16 %v691, %v690
  %v747 = vpack.c.bf16 %v693, %v692
  %v748 = vpack.c.bf16 %v695, %v694
  %v749 = vpack.c.bf16 %v697, %v696
  %v750 = vpack.c.bf16 %v699, %v698
  %v751 = vpack.c.bf16 %v701, %v700
  %v752 = vpack.c.bf16 %v703, %v702
  %v753 = vpack.c.bf16 %v705, %v704
  %v754 = vpack.c.bf16 %v707, %v706
  %v755 = vpack.c.bf16 %v709, %v708
  %v756 = vpack.c.bf16 %v711, %v710
  %v757 = vpack.c.bf16 %v713, %v712
  %v758 = vpack.c.bf16 %v715, %v714
  %v759 = vpack.c.bf16 %v717, %v716
  %v760 = vpack.c.bf16 %v719, %v718
  %v761 = vpack.c.bf16 %v721, %v720
  %v762 = vpack.c.bf16 %v723, %v722
  %v763 = vpack.c.bf16 %v725, %v724
  %v764 = vpack.c.bf16 %v727, %v726
  %v765 = vpack.c.bf16 %v729, %v728
  %v766 = vpack.c.bf16 %v731, %v730
  %v767 = vpack.c.bf16 %v733, %v732
  %v768 = vpack.c.bf16 %v735, %v734
  %v769 = vpack.c.bf16 %v737, %v736
  %v802 = vunpack.c.l.b16 %v738
  %v803 = vunpack.c.h.b16 %v738
  %v804 = vunpack.c.l.b16 %v739
  %v805 = vunpack.c.h.b16 %v739
  %v806 = vunpack.c.l.b16 %v740
  %v807 = vunpack.c.h.b16 %v740
  %v808 = vunpack.c.l.b16 %v741
  %v809 = vunpack.c.h.b16 %v741
  %v810 = vunpack.c.l.b16 %v742
  %v811 = vunpack.c.h.b16 %v742
  %v812 = vunpack.c.l.b16 %v743
  %v813 = vunpack.c.h.b16 %v743
  %v814 = vunpack.c.l.b16 %v744
  %v815 = vunpack.c.h.b16 %v744
  %v816 = vunpack.c.l.b16 %v745
  %v817 = vunpack.c.h.b16 %v745
  %v818 = vunpack.c.l.b16 %v746
  %v819 = vunpack.c.h.b16 %v746
  %v820 = vunpack.c.l.b16 %v747
  %v821 = vunpack.c.h.b16 %v747
  %v822 = vunpack.c.l.b16 %v748
  %v823 = vunpack.c.h.b16 %v748
  %v824 = vunpack.c.l.b16 %v749
  %v825 = vunpack.c.h.b16 %v749
  %v826 = vunpack.c.l.b16 %v750
  %v827 = vunpack.c.h.b16 %v750
  %v828 = vunpack.c.l.b16 %v751
  %v829 = vunpack.c.h.b16 %v751
  %v830 = vunpack.c.l.b16 %v752
  %v831 = vunpack.c.h.b16 %v752
  %v832 = vunpack.c.l.b16 %v753
  %v833 = vunpack.c.h.b16 %v753
  %v834 = vunpack.c.l.b16 %v754
  %v835 = vunpack.c.h.b16 %v754
  %v836 = vunpack.c.l.b16 %v755
  %v837 = vunpack.c.h.b16 %v755
  %v838 = vunpack.c.l.b16 %v756
  %v839 = vunpack.c.h.b16 %v756
  %v840 = vunpack.c.l.b16 %v757
  %v841 = vunpack.c.h.b16 %v757
  %v842 = vunpack.c.l.b16 %v758
  %v843 = vunpack.c.h.b16 %v758
  %v844 = vunpack.c.l.b16 %v759
  %v845 = vunpack.c.h.b16 %v759
  %v846 = vunpack.c.l.b16 %v760
  %v847 = vunpack.c.h.b16 %v760
  %v848 = vunpack.c.l.b16 %v761
  %v849 = vunpack.c.h.b16 %v761
  %v850 = vunpack.c.l.b16 %v762
  %v851 = vunpack.c.h.b16 %v762
  %v852 = vunpack.c.l.b16 %v763
  %v853 = vunpack.c.h.b16 %v763
  %v854 = vunpack.c.l.b16 %v764
  %v855 = vunpack.c.h.b16 %v764
  %v856 = vunpack.c.l.b16 %v765
  %v857 = vunpack.c.h.b16 %v765
  %v858 = vunpack.c.l.b16 %v766
  %v859 = vunpack.c.h.b16 %v766
  %v860 = vunpack.c.l.b16 %v767
  %v861 = vunpack.c.h.b16 %v767
  %v862 = vunpack.c.l.b16 %v768
  %v863 = vunpack.c.h.b16 %v768
  %v864 = vunpack.c.l.b16 %v769
  %v865 = vunpack.c.h.b16 %v769
  %v866 = vpack.c.b16 %v802, %v802
  %v867 = vpack.c.b16 %v803, %v803
  %v868 = vpack.c.b16 %v804, %v804
  %v869 = vpack.c.b16 %v805, %v805
  %v870 = vpack.c.b16 %v806, %v806
  %v871 = vpack.c.b16 %v807, %v807
  %v872 = vpack.c.b16 %v808, %v808
  %v873 = vpack.c.b16 %v809, %v809
  %v874 = vpack.c.b16 %v810, %v810
  %v875 = vpack.c.b16 %v811, %v811
  %v876 = vpack.c.b16 %v812, %v812
  %v877 = vpack.c.b16 %v813, %v813
  %v878 = vpack.c.b16 %v814, %v814
  %v879 = vpack.c.b16 %v815, %v815
  %v880 = vpack.c.b16 %v816, %v816
  %v881 = vpack.c.b16 %v817, %v817
  %v882 = vpack.c.b16 %v818, %v818
  %v883 = vpack.c.b16 %v819, %v819
  %v884 = vpack.c.b16 %v820, %v820
  %v885 = vpack.c.b16 %v821, %v821
  %v886 = vpack.c.b16 %v822, %v822
  %v887 = vpack.c.b16 %v823, %v823
  %v888 = vpack.c.b16 %v824, %v824
  %v889 = vpack.c.b16 %v825, %v825
  %v890 = vpack.c.b16 %v826, %v826
  %v891 = vpack.c.b16 %v827, %v827
  %v892 = vpack.c.b16 %v828, %v828
  %v893 = vpack.c.b16 %v829, %v829
  %v894 = vpack.c.b16 %v830, %v830
  %v895 = vpack.c.b16 %v831, %v831
  %v896 = vpack.c.b16 %v832, %v832
  %v897 = vpack.c.b16 %v833, %v833
  %v898 = vpack.c.b16 %v834, %v834
  %v899 = vpack.c.b16 %v835, %v835
  %v900 = vpack.c.b16 %v836, %v836
  %v901 = vpack.c.b16 %v837, %v837
  %v902 = vpack.c.b16 %v838, %v838
  %v903 = vpack.c.b16 %v839, %v839
  %v904 = vpack.c.b16 %v840, %v840
  %v905 = vpack.c.b16 %v841, %v841
  %v906 = vpack.c.b16 %v842, %v842
  %v907 = vpack.c.b16 %v843, %v843
  %v908 = vpack.c.b16 %v844, %v844
  %v909 = vpack.c.b16 %v845, %v845
  %v910 = vpack.c.b16 %v846, %v846
  %v911 = vpack.c.b16 %v847, %v847
  %v912 = vpack.c.b16 %v848, %v848
  %v913 = vpack.c.b16 %v849, %v849
  %v914 = vpack.c.b16 %v850, %v850
  %v915 = vpack.c.b16 %v851, %v851
  %v916 = vpack.c.b16 %v852, %v852
  %v917 = vpack.c.b16 %v853, %v853
  %v918 = vpack.c.b16 %v854, %v854
  %v919 = vpack.c.b16 %v855, %v855
  %v920 = vpack.c.b16 %v856, %v856
  %v921 = vpack.c.b16 %v857, %v857
  %v922 = vpack.c.b16 %v858, %v858
  %v923 = vpack.c.b16 %v859, %v859
  %v924 = vpack.c.b16 %v860, %v860
  %v925 = vpack.c.b16 %v861, %v861
  %v926 = vpack.c.b16 %v862, %v862
  %v927 = vpack.c.b16 %v863, %v863
  %v928 = vpack.c.b16 %v864, %v864
  %v929 = vpack.c.b16 %v865, %v865
  %vm994 = vcmask 257024
  %995 = vst.msk [vmem:[%s10] sm:$0xf] %vm994, %v866
  %996 = vst.msk [vmem:[%s10 + $0x4] sm:$0xf] %vm994, %v867
  %997 = vst.msk [vmem:[%s10 + $0x8] sm:$0xf] %vm994, %v868
  %998 = vst.msk [vmem:[%s10 + $0xc] sm:$0xf] %vm994, %v869
  %999 = vst.msk [vmem:[%s10 + $0x10] sm:$0xf] %vm994, %v870
  %1000 = vst.msk [vmem:[%s10 + $0x14] sm:$0xf] %vm994, %v871
  %1001 = vst.msk [vmem:[%s10 + $0x18] sm:$0xf] %vm994, %v872
  %1002 = vst.msk [vmem:[%s10 + $0x1c] sm:$0xf] %vm994, %v873
  %1003 = vst.msk [vmem:[%s10 + $0x20] sm:$0xf] %vm994, %v874
  %1004 = vst.msk [vmem:[%s10 + $0x24] sm:$0xf] %vm994, %v875
  %1005 = vst.msk [vmem:[%s10 + $0x28] sm:$0xf] %vm994, %v876
  %1006 = vst.msk [vmem:[%s10 + $0x2c] sm:$0xf] %vm994, %v877
  %1007 = vst.msk [vmem:[%s10 + $0x30] sm:$0xf] %vm994, %v878
  %1008 = vst.msk [vmem:[%s10 + $0x34] sm:$0xf] %vm994, %v879
  %1009 = vst.msk [vmem:[%s10 + $0x38] sm:$0xf] %vm994, %v880
  %1010 = vst.msk [vmem:[%s10 + $0x3c] sm:$0xf] %vm994, %v881
  %1011 = vst.msk [vmem:[%s10 + $0x40] sm:$0xf] %vm994, %v882
  %1012 = vst.msk [vmem:[%s10 + $0x44] sm:$0xf] %vm994, %v883
  %1013 = vst.msk [vmem:[%s10 + $0x48] sm:$0xf] %vm994, %v884
  %1014 = vst.msk [vmem:[%s10 + $0x4c] sm:$0xf] %vm994, %v885
  %1015 = vst.msk [vmem:[%s10 + $0x50] sm:$0xf] %vm994, %v886
  %1016 = vst.msk [vmem:[%s10 + $0x54] sm:$0xf] %vm994, %v887
  %1017 = vst.msk [vmem:[%s10 + $0x58] sm:$0xf] %vm994, %v888
  %1018 = vst.msk [vmem:[%s10 + $0x5c] sm:$0xf] %vm994, %v889
  %1019 = vst.msk [vmem:[%s10 + $0x60] sm:$0xf] %vm994, %v890
  %1020 = vst.msk [vmem:[%s10 + $0x64] sm:$0xf] %vm994, %v891
  %1021 = vst.msk [vmem:[%s10 + $0x68] sm:$0xf] %vm994, %v892
  %1022 = vst.msk [vmem:[%s10 + $0x6c] sm:$0xf] %vm994, %v893
  %1023 = vst.msk [vmem:[%s10 + $0x70] sm:$0xf] %vm994, %v894
  %1024 = vst.msk [vmem:[%s10 + $0x74] sm:$0xf] %vm994, %v895
  %1025 = vst.msk [vmem:[%s10 + $0x78] sm:$0xf] %vm994, %v896
  %1026 = vst.msk [vmem:[%s10 + $0x7c] sm:$0xf] %vm994, %v897
  %1027 = vst.msk [vmem:[%s10 + $0x80] sm:$0xf] %vm994, %v898
  %1028 = vst.msk [vmem:[%s10 + $0x84] sm:$0xf] %vm994, %v899
  %1029 = vst.msk [vmem:[%s10 + $0x88] sm:$0xf] %vm994, %v900
  %1030 = vst.msk [vmem:[%s10 + $0x8c] sm:$0xf] %vm994, %v901
  %1031 = vst.msk [vmem:[%s10 + $0x90] sm:$0xf] %vm994, %v902
  %1032 = vst.msk [vmem:[%s10 + $0x94] sm:$0xf] %vm994, %v903
  %1033 = vst.msk [vmem:[%s10 + $0x98] sm:$0xf] %vm994, %v904
  %1034 = vst.msk [vmem:[%s10 + $0x9c] sm:$0xf] %vm994, %v905
  %1035 = vst.msk [vmem:[%s10 + $0xa0] sm:$0xf] %vm994, %v906
  %1036 = vst.msk [vmem:[%s10 + $0xa4] sm:$0xf] %vm994, %v907
  %1037 = vst.msk [vmem:[%s10 + $0xa8] sm:$0xf] %vm994, %v908
  %1038 = vst.msk [vmem:[%s10 + $0xac] sm:$0xf] %vm994, %v909
  %1039 = vst.msk [vmem:[%s10 + $0xb0] sm:$0xf] %vm994, %v910
  %1040 = vst.msk [vmem:[%s10 + $0xb4] sm:$0xf] %vm994, %v911
  %1041 = vst.msk [vmem:[%s10 + $0xb8] sm:$0xf] %vm994, %v912
  %1042 = vst.msk [vmem:[%s10 + $0xbc] sm:$0xf] %vm994, %v913
  %1043 = vst.msk [vmem:[%s10 + $0xc0] sm:$0xf] %vm994, %v914
  %1044 = vst.msk [vmem:[%s10 + $0xc4] sm:$0xf] %vm994, %v915
  %1045 = vst.msk [vmem:[%s10 + $0xc8] sm:$0xf] %vm994, %v916
  %1046 = vst.msk [vmem:[%s10 + $0xcc] sm:$0xf] %vm994, %v917
  %1047 = vst.msk [vmem:[%s10 + $0xd0] sm:$0xf] %vm994, %v918
  %1048 = vst.msk [vmem:[%s10 + $0xd4] sm:$0xf] %vm994, %v919
  %1049 = vst.msk [vmem:[%s10 + $0xd8] sm:$0xf] %vm994, %v920
  %1050 = vst.msk [vmem:[%s10 + $0xdc] sm:$0xf] %vm994, %v921
  %1051 = vst.msk [vmem:[%s10 + $0xe0] sm:$0xf] %vm994, %v922
  %1052 = vst.msk [vmem:[%s10 + $0xe4] sm:$0xf] %vm994, %v923
  %1053 = vst.msk [vmem:[%s10 + $0xe8] sm:$0xf] %vm994, %v924
  %1054 = vst.msk [vmem:[%s10 + $0xec] sm:$0xf] %vm994, %v925
  %1055 = vst.msk [vmem:[%s10 + $0xf0] sm:$0xf] %vm994, %v926
  %1056 = vst.msk [vmem:[%s10 + $0xf4] sm:$0xf] %vm994, %v927
  %1057 = vst.msk [vmem:[%s10 + $0xf8] sm:$0xf] %vm994, %v928
  %1058 = vst.msk [vmem:[%s10 + $0xfc] sm:$0xf] %vm994, %v929
  %v1059 = vld [vmem:[%s3] sm:$0xf]
  %v1060 = vld [vmem:[%s3 + $0x4] sm:$0xf]
  %v1061 = vld [vmem:[%s3 + $0x8] sm:$0xf]
  %v1062 = vld [vmem:[%s3 + $0xc] sm:$0xf]
  %v1063 = vld [vmem:[%s4] sm:$0x1]
  %v1065 = vlaneseq
  %v1066 = vshrl.u32 %v1065, 7
  %v1067 = vsub.s32 0, %v1066
  %v1068 = vrot.slane %v1063, %v1067
  %v1074 = vunpack.c.l.b16 %v1059
  %v1075 = vunpack.c.l.b16 %v1060
  %v1076 = vunpack.c.l.b16 %v1061
  %v1077 = vunpack.c.l.b16 %v1062
  %v1078 = vpack.c.b16 %v1075, %v1074
  %v1079 = vpack.c.b16 %v1077, %v1076
  %v1083 = vsel %vm288, %v738, 0
  %v1086 = vsel %vm288, %v739, 0
  %v1089 = vsel %vm288, %v740, 0
  %v1092 = vsel %vm288, %v741, 0
  %v1095 = vsel %vm288, %v742, 0
  %v1098 = vsel %vm288, %v743, 0
  %v1101 = vsel %vm288, %v744, 0
  %v1104 = vsel %vm288, %v745, 0
  %v1107 = vsel %vm288, %v746, 0
  %v1110 = vsel %vm288, %v747, 0
  %v1113 = vsel %vm288, %v748, 0
  %v1116 = vsel %vm288, %v749, 0
  %v1119 = vsel %vm288, %v750, 0
  %v1122 = vsel %vm288, %v751, 0
  %v1125 = vsel %vm288, %v752, 0
  %v1128 = vsel %vm288, %v753, 0
  %v1131 = vsel %vm288, %v754, 0
  %v1134 = vsel %vm288, %v755, 0
  %v1137 = vsel %vm288, %v756, 0
  %v1140 = vsel %vm288, %v757, 0
  %v1143 = vsel %vm288, %v758, 0
  %v1146 = vsel %vm288, %v759, 0
  %v1149 = vsel %vm288, %v760, 0
  %v1152 = vsel %vm288, %v761, 0
  %v1155 = vsel %vm288, %v762, 0
  %v1158 = vsel %vm288, %v763, 0
  %v1161 = vsel %vm288, %v764, 0
  %v1164 = vsel %vm288, %v765, 0
  %v1167 = vsel %vm288, %v766, 0
  %v1170 = vsel %vm288, %v767, 0
  %v1173 = vsel %vm288, %v768, 0
  %v1176 = vsel %vm288, %v769, 0
  %1178 = vmatprep.subr.bf16.mxu0 0
  %1179 = vmatpush1.bf16.msra.mxu0 %v1078
  %1180 = vmatprep.subr.bf16.mxu0 0
  %1181 = vmatpush1.bf16.msra.mxu0 %v1079
  %1182 = vmatprep.subr.bf16.mxu0 0
  %1183 = vmatpush1.bf16.msra.mxu0 0
  %1184 = vmatprep.subr.bf16.mxu0 0
  %1185 = vmatpush1.bf16.msra.mxu0 0
  %1186 = vmatprep.subr.bf16.mxu0 0
  %1187 = vmatpush1.bf16.msra.mxu0 0
  %1188 = vmatprep.subr.bf16.mxu0 0
  %1189 = vmatpush1.bf16.msra.mxu0 0
  %1190 = vmatprep.subr.bf16.mxu0 0
  %1191 = vmatpush1.bf16.msra.mxu0 0
  %1192 = vmatprep.subr.bf16.mxu0 0
  %1193 = vmatpush1.bf16.msra.mxu0 0
  %1194 = vmatprep.subr.bf16.mxu0 0
  %1195 = vmatpush1.bf16.msra.mxu0 0
  %1196 = vmatprep.subr.bf16.mxu0 0
  %1197 = vmatpush1.bf16.msra.mxu0 0
  %1198 = vmatprep.subr.bf16.mxu0 0
  %1199 = vmatpush1.bf16.msra.mxu0 0
  %1200 = vmatprep.subr.bf16.mxu0 0
  %1201 = vmatpush1.bf16.msra.mxu0 0
  %1202 = vmatprep.subr.bf16.mxu0 0
  %1203 = vmatpush1.bf16.msra.mxu0 0
  %1204 = vmatprep.subr.bf16.mxu0 0
  %1205 = vmatpush1.bf16.msra.mxu0 0
  %1206 = vmatprep.subr.bf16.mxu0 0
  %1207 = vmatpush1.bf16.msra.mxu0 0
  %1208 = vmatprep.subr.bf16.mxu0 0
  %1209 = vmatpush1.bf16.msra.mxu0 0
  %1210 = vmatprep.mubr.bf16.mxu0 0
  %1211 = vmatmul.mubr.bf16.gmra.mrb[0].mxu0 %v1083
  %v1212 = vpop.f32.mrb[0].mxu0
  %v1213 = vadd.f32 %v1068, %v1212
  %v1214 = vpop.f32.mrb[0].mxu0
  %v1215 = vpop.f32.mrb[0].mxu0
  %v1216 = vadd.f32 %v1068, %v1215
  %v1217 = vpop.f32.mrb[0].mxu0
  %1218 = vmatprep.mubr.bf16.mxu0 0
  %1219 = vmatmul.mubr.bf16.gmra.mrb[0].mxu0 %v1086
  %v1220 = vpop.f32.mrb[0].mxu0
  %v1221 = vadd.f32 %v1068, %v1220
  %v1222 = vpop.f32.mrb[0].mxu0
  %v1223 = vpop.f32.mrb[0].mxu0
  %v1224 = vadd.f32 %v1068, %v1223
  %v1225 = vpop.f32.mrb[0].mxu0
  %1226 = vmatprep.mubr.bf16.mxu0 0
  %1227 = vmatmul.mubr.bf16.gmra.mrb[0].mxu0 %v1089
  %v1228 = vpop.f32.mrb[0].mxu0
  %v1229 = vadd.f32 %v1068, %v1228
  %v1230 = vpop.f32.mrb[0].mxu0
  %v1231 = vpop.f32.mrb[0].mxu0
  %v1232 = vadd.f32 %v1068, %v1231
  %v1233 = vpop.f32.mrb[0].mxu0
  %1234 = vmatprep.mubr.bf16.mxu0 0
  %1235 = vmatmul.mubr.bf16.gmra.mrb[0].mxu0 %v1092
  %v1236 = vpop.f32.mrb[0].mxu0
  %v1237 = vadd.f32 %v1068, %v1236
  %v1238 = vpop.f32.mrb[0].mxu0
  %v1239 = vpop.f32.mrb[0].mxu0
  %v1240 = vadd.f32 %v1068, %v1239
  %v1241 = vpop.f32.mrb[0].mxu0
  %1242 = vmatprep.mubr.bf16.mxu0 0
  %1243 = vmatmul.mubr.bf16.gmra.mrb[0].mxu0 %v1095
  %v1244 = vpop.f32.mrb[0].mxu0
  %v1245 = vadd.f32 %v1068, %v1244
  %v1246 = vpop.f32.mrb[0].mxu0
  %v1247 = vpop.f32.mrb[0].mxu0
  %v1248 = vadd.f32 %v1068, %v1247
  %v1249 = vpop.f32.mrb[0].mxu0
  %1250 = vmatprep.mubr.bf16.mxu0 0
  %1251 = vmatmul.mubr.bf16.gmra.mrb[0].mxu0 %v1098
  %v1252 = vpop.f32.mrb[0].mxu0
  %v1253 = vadd.f32 %v1068, %v1252
  %v1254 = vpop.f32.mrb[0].mxu0
  %v1255 = vpop.f32.mrb[0].mxu0
  %v1256 = vadd.f32 %v1068, %v1255
  %v1257 = vpop.f32.mrb[0].mxu0
  %1258 = vmatprep.mubr.bf16.mxu0 0
  %1259 = vmatmul.mubr.bf16.gmra.mrb[0].mxu0 %v1101
  %v1260 = vpop.f32.mrb[0].mxu0
  %v1261 = vadd.f32 %v1068, %v1260
  %v1262 = vpop.f32.mrb[0].mxu0
  %v1263 = vpop.f32.mrb[0].mxu0
  %v1264 = vadd.f32 %v1068, %v1263
  %v1265 = vpop.f32.mrb[0].mxu0
  %1266 = vmatprep.mubr.bf16.mxu0 0
  %1267 = vmatmul.mubr.bf16.gmra.mrb[0].mxu0 %v1104
  %v1268 = vpop.f32.mrb[0].mxu0
  %v1269 = vadd.f32 %v1068, %v1268
  %v1270 = vpop.f32.mrb[0].mxu0
  %v1271 = vpop.f32.mrb[0].mxu0
  %v1272 = vadd.f32 %v1068, %v1271
  %v1273 = vpop.f32.mrb[0].mxu0
  %1274 = vmatprep.mubr.bf16.mxu0 0
  %1275 = vmatmul.mubr.bf16.gmra.mrb[0].mxu0 %v1107
  %v1276 = vpop.f32.mrb[0].mxu0
  %v1277 = vadd.f32 %v1068, %v1276
  %v1278 = vpop.f32.mrb[0].mxu0
  %v1279 = vpop.f32.mrb[0].mxu0
  %v1280 = vadd.f32 %v1068, %v1279
  %v1281 = vpop.f32.mrb[0].mxu0
  %1282 = vmatprep.mubr.bf16.mxu0 0
  %1283 = vmatmul.mubr.bf16.gmra.mrb[0].mxu0 %v1110
  %v1284 = vpop.f32.mrb[0].mxu0
  %v1285 = vadd.f32 %v1068, %v1284
  %v1286 = vpop.f32.mrb[0].mxu0
  %v1287 = vpop.f32.mrb[0].mxu0
  %v1288 = vadd.f32 %v1068, %v1287
  %v1289 = vpop.f32.mrb[0].mxu0
  %1290 = vmatprep.mubr.bf16.mxu0 0
  %1291 = vmatmul.mubr.bf16.gmra.mrb[0].mxu0 %v1113
  %v1292 = vpop.f32.mrb[0].mxu0
  %v1293 = vadd.f32 %v1068, %v1292
  %v1294 = vpop.f32.mrb[0].mxu0
  %v1295 = vpop.f32.mrb[0].mxu0
  %v1296 = vadd.f32 %v1068, %v1295
  %v1297 = vpop.f32.mrb[0].mxu0
  %1298 = vmatprep.mubr.bf16.mxu0 0
  %1299 = vmatmul.mubr.bf16.gmra.mrb[0].mxu0 %v1116
  %v1300 = vpop.f32.mrb[0].mxu0
  %v1301 = vadd.f32 %v1068, %v1300
  %v1302 = vpop.f32.mrb[0].mxu0
  %v1303 = vpop.f32.mrb[0].mxu0
  %v1304 = vadd.f32 %v1068, %v1303
  %v1305 = vpop.f32.mrb[0].mxu0
  %1306 = vmatprep.mubr.bf16.mxu0 0
  %1307 = vmatmul.mubr.bf16.gmra.mrb[0].mxu0 %v1119
  %v1308 = vpop.f32.mrb[0].mxu0
  %v1309 = vadd.f32 %v1068, %v1308
  %v1310 = vpop.f32.mrb[0].mxu0
  %v1311 = vpop.f32.mrb[0].mxu0
  %v1312 = vadd.f32 %v1068, %v1311
  %v1313 = vpop.f32.mrb[0].mxu0
  %1314 = vmatprep.mubr.bf16.mxu0 0
  %1315 = vmatmul.mubr.bf16.gmra.mrb[0].mxu0 %v1122
  %v1316 = vpop.f32.mrb[0].mxu0
  %v1317 = vadd.f32 %v1068, %v1316
  %v1318 = vpop.f32.mrb[0].mxu0
  %v1319 = vpop.f32.mrb[0].mxu0
  %v1320 = vadd.f32 %v1068, %v1319
  %v1321 = vpop.f32.mrb[0].mxu0
  %1322 = vmatprep.mubr.bf16.mxu0 0
  %1323 = vmatmul.mubr.bf16.gmra.mrb[0].mxu0 %v1125
  %v1324 = vpop.f32.mrb[0].mxu0
  %v1325 = vadd.f32 %v1068, %v1324
  %v1326 = vpop.f32.mrb[0].mxu0
  %v1327 = vpop.f32.mrb[0].mxu0
  %v1328 = vadd.f32 %v1068, %v1327
  %v1329 = vpop.f32.mrb[0].mxu0
  %1330 = vmatprep.mubr.bf16.mxu0 0
  %1331 = vmatmul.mubr.bf16.gmra.mrb[0].mxu0 %v1128
  %v1332 = vpop.f32.mrb[0].mxu0
  %v1333 = vadd.f32 %v1068, %v1332
  %v1334 = vpop.f32.mrb[0].mxu0
  %v1335 = vpop.f32.mrb[0].mxu0
  %v1336 = vadd.f32 %v1068, %v1335
  %v1337 = vpop.f32.mrb[0].mxu0
  %1338 = vmatprep.mubr.bf16.mxu0 0
  %1339 = vmatmul.mubr.bf16.gmra.mrb[0].mxu0 %v1131
  %v1340 = vpop.f32.mrb[0].mxu0
  %v1341 = vadd.f32 %v1068, %v1340
  %v1342 = vpop.f32.mrb[0].mxu0
  %v1343 = vpop.f32.mrb[0].mxu0
  %v1344 = vadd.f32 %v1068, %v1343
  %v1345 = vpop.f32.mrb[0].mxu0
  %1346 = vmatprep.mubr.bf16.mxu0 0
  %1347 = vmatmul.mubr.bf16.gmra.mrb[0].mxu0 %v1134
  %v1348 = vpop.f32.mrb[0].mxu0
  %v1349 = vadd.f32 %v1068, %v1348
  %v1350 = vpop.f32.mrb[0].mxu0
  %v1351 = vpop.f32.mrb[0].mxu0
  %v1352 = vadd.f32 %v1068, %v1351
  %v1353 = vpop.f32.mrb[0].mxu0
  %1354 = vmatprep.mubr.bf16.mxu0 0
  %1355 = vmatmul.mubr.bf16.gmra.mrb[0].mxu0 %v1137
  %v1356 = vpop.f32.mrb[0].mxu0
  %v1357 = vadd.f32 %v1068, %v1356
  %v1358 = vpop.f32.mrb[0].mxu0
  %v1359 = vpop.f32.mrb[0].mxu0
  %v1360 = vadd.f32 %v1068, %v1359
  %v1361 = vpop.f32.mrb[0].mxu0
  %1362 = vmatprep.mubr.bf16.mxu0 0
  %1363 = vmatmul.mubr.bf16.gmra.mrb[0].mxu0 %v1140
  %v1364 = vpop.f32.mrb[0].mxu0
  %v1365 = vadd.f32 %v1068, %v1364
  %v1366 = vpop.f32.mrb[0].mxu0
  %v1367 = vpop.f32.mrb[0].mxu0
  %v1368 = vadd.f32 %v1068, %v1367
  %v1369 = vpop.f32.mrb[0].mxu0
  %1370 = vmatprep.mubr.bf16.mxu0 0
  %1371 = vmatmul.mubr.bf16.gmra.mrb[0].mxu0 %v1143
  %v1372 = vpop.f32.mrb[0].mxu0
  %v1373 = vadd.f32 %v1068, %v1372
  %v1374 = vpop.f32.mrb[0].mxu0
  %v1375 = vpop.f32.mrb[0].mxu0
  %v1376 = vadd.f32 %v1068, %v1375
  %v1377 = vpop.f32.mrb[0].mxu0
  %1378 = vmatprep.mubr.bf16.mxu0 0
  %1379 = vmatmul.mubr.bf16.gmra.mrb[0].mxu0 %v1146
  %v1380 = vpop.f32.mrb[0].mxu0
  %v1381 = vadd.f32 %v1068, %v1380
  %v1382 = vpop.f32.mrb[0].mxu0
  %v1383 = vpop.f32.mrb[0].mxu0
  %v1384 = vadd.f32 %v1068, %v1383
  %v1385 = vpop.f32.mrb[0].mxu0
  %1386 = vmatprep.mubr.bf16.mxu0 0
  %1387 = vmatmul.mubr.bf16.gmra.mrb[0].mxu0 %v1149
  %v1388 = vpop.f32.mrb[0].mxu0
  %v1389 = vadd.f32 %v1068, %v1388
  %v1390 = vpop.f32.mrb[0].mxu0
  %v1391 = vpop.f32.mrb[0].mxu0
  %v1392 = vadd.f32 %v1068, %v1391
  %v1393 = vpop.f32.mrb[0].mxu0
  %1394 = vmatprep.mubr.bf16.mxu0 0
  %1395 = vmatmul.mubr.bf16.gmra.mrb[0].mxu0 %v1152
  %v1396 = vpop.f32.mrb[0].mxu0
  %v1397 = vadd.f32 %v1068, %v1396
  %v1398 = vpop.f32.mrb[0].mxu0
  %v1399 = vpop.f32.mrb[0].mxu0
  %v1400 = vadd.f32 %v1068, %v1399
  %v1401 = vpop.f32.mrb[0].mxu0
  %1402 = vmatprep.mubr.bf16.mxu0 0
  %1403 = vmatmul.mubr.bf16.gmra.mrb[0].mxu0 %v1155
  %v1404 = vpop.f32.mrb[0].mxu0
  %v1405 = vadd.f32 %v1068, %v1404
  %v1406 = vpop.f32.mrb[0].mxu0
  %v1407 = vpop.f32.mrb[0].mxu0
  %v1408 = vadd.f32 %v1068, %v1407
  %v1409 = vpop.f32.mrb[0].mxu0
  %1410 = vmatprep.mubr.bf16.mxu0 0
  %1411 = vmatmul.mubr.bf16.gmra.mrb[0].mxu0 %v1158
  %v1412 = vpop.f32.mrb[0].mxu0
  %v1413 = vadd.f32 %v1068, %v1412
  %v1414 = vpop.f32.mrb[0].mxu0
  %v1415 = vpop.f32.mrb[0].mxu0
  %v1416 = vadd.f32 %v1068, %v1415
  %v1417 = vpop.f32.mrb[0].mxu0
  %1418 = vmatprep.mubr.bf16.mxu0 0
  %1419 = vmatmul.mubr.bf16.gmra.mrb[0].mxu0 %v1161
  %v1420 = vpop.f32.mrb[0].mxu0
  %v1421 = vadd.f32 %v1068, %v1420
  %v1422 = vpop.f32.mrb[0].mxu0
  %v1423 = vpop.f32.mrb[0].mxu0
  %v1424 = vadd.f32 %v1068, %v1423
  %v1425 = vpop.f32.mrb[0].mxu0
  %1426 = vmatprep.mubr.bf16.mxu0 0
  %1427 = vmatmul.mubr.bf16.gmra.mrb[0].mxu0 %v1164
  %v1428 = vpop.f32.mrb[0].mxu0
  %v1429 = vadd.f32 %v1068, %v1428
  %v1430 = vpop.f32.mrb[0].mxu0
  %v1431 = vpop.f32.mrb[0].mxu0
  %v1432 = vadd.f32 %v1068, %v1431
  %v1433 = vpop.f32.mrb[0].mxu0
  %1434 = vmatprep.mubr.bf16.mxu0 0
  %1435 = vmatmul.mubr.bf16.gmra.mrb[0].mxu0 %v1167
  %v1436 = vpop.f32.mrb[0].mxu0
  %v1437 = vadd.f32 %v1068, %v1436
  %v1438 = vpop.f32.mrb[0].mxu0
  %v1439 = vpop.f32.mrb[0].mxu0
  %v1440 = vadd.f32 %v1068, %v1439
  %v1441 = vpop.f32.mrb[0].mxu0
  %1442 = vmatprep.mubr.bf16.mxu0 0
  %1443 = vmatmul.mubr.bf16.gmra.mrb[0].mxu0 %v1170
  %v1444 = vpop.f32.mrb[0].mxu0
  %v1445 = vadd.f32 %v1068, %v1444
  %v1446 = vpop.f32.mrb[0].mxu0
  %v1447 = vpop.f32.mrb[0].mxu0
  %v1448 = vadd.f32 %v1068, %v1447
  %v1449 = vpop.f32.mrb[0].mxu0
  %1450 = vmatprep.mubr.bf16.mxu0 0
  %1451 = vmatmul.mubr.bf16.gmra.mrb[0].mxu0 %v1173
  %v1452 = vpop.f32.mrb[0].mxu0
  %v1453 = vadd.f32 %v1068, %v1452
  %v1454 = vpop.f32.mrb[0].mxu0
  %v1455 = vpop.f32.mrb[0].mxu0
  %v1456 = vadd.f32 %v1068, %v1455
  %v1457 = vpop.f32.mrb[0].mxu0
  %1458 = vmatprep.mubr.bf16.mxu0 0
  %1459 = vmatmul.mubr.bf16.gmra.mrb[0].mxu0 %v1176
  %v1460 = vpop.f32.mrb[0].mxu0
  %v1461 = vadd.f32 %v1068, %v1460
  %v1462 = vpop.f32.mrb[0].mxu0
  %v1463 = vpop.f32.mrb[0].mxu0
  %v1464 = vadd.f32 %v1068, %v1463
  %v1465 = vpop.f32.mrb[0].mxu0
  %1466 = vdwg.mxu0
  %v1467 = vmax.f32 %v1213, 0.0
  %v1468 = vmax.f32 %v1216, 0.0
  %v1469 = vmax.f32 %v1221, 0.0
  %v1470 = vmax.f32 %v1224, 0.0
  %v1471 = vmax.f32 %v1229, 0.0
  %v1472 = vmax.f32 %v1232, 0.0
  %v1473 = vmax.f32 %v1237, 0.0
  %v1474 = vmax.f32 %v1240, 0.0
  %v1475 = vmax.f32 %v1245, 0.0
  %v1476 = vmax.f32 %v1248, 0.0
  %v1477 = vmax.f32 %v1253, 0.0
  %v1478 = vmax.f32 %v1256, 0.0
  %v1479 = vmax.f32 %v1261, 0.0
  %v1480 = vmax.f32 %v1264, 0.0
  %v1481 = vmax.f32 %v1269, 0.0
  %v1482 = vmax.f32 %v1272, 0.0
  %v1483 = vmax.f32 %v1277, 0.0
  %v1484 = vmax.f32 %v1280, 0.0
  %v1485 = vmax.f32 %v1285, 0.0
  %v1486 = vmax.f32 %v1288, 0.0
  %v1487 = vmax.f32 %v1293, 0.0
  %v1488 = vmax.f32 %v1296, 0.0
  %v1489 = vmax.f32 %v1301, 0.0
  %v1490 = vmax.f32 %v1304, 0.0
  %v1491 = vmax.f32 %v1309, 0.0
  %v1492 = vmax.f32 %v1312, 0.0
  %v1493 = vmax.f32 %v1317, 0.0
  %v1494 = vmax.f32 %v1320, 0.0
  %v1495 = vmax.f32 %v1325, 0.0
  %v1496 = vmax.f32 %v1328, 0.0
  %v1497 = vmax.f32 %v1333, 0.0
  %v1498 = vmax.f32 %v1336, 0.0
  %v1499 = vmax.f32 %v1341, 0.0
  %v1500 = vmax.f32 %v1344, 0.0
  %v1501 = vmax.f32 %v1349, 0.0
  %v1502 = vmax.f32 %v1352, 0.0
  %v1503 = vmax.f32 %v1357, 0.0
  %v1504 = vmax.f32 %v1360, 0.0
  %v1505 = vmax.f32 %v1365, 0.0
  %v1506 = vmax.f32 %v1368, 0.0
  %v1507 = vmax.f32 %v1373, 0.0
  %v1508 = vmax.f32 %v1376, 0.0
  %v1509 = vmax.f32 %v1381, 0.0
  %v1510 = vmax.f32 %v1384, 0.0
  %v1511 = vmax.f32 %v1389, 0.0
  %v1512 = vmax.f32 %v1392, 0.0
  %v1513 = vmax.f32 %v1397, 0.0
  %v1514 = vmax.f32 %v1400, 0.0
  %v1515 = vmax.f32 %v1405, 0.0
  %v1516 = vmax.f32 %v1408, 0.0
  %v1517 = vmax.f32 %v1413, 0.0
  %v1518 = vmax.f32 %v1416, 0.0
  %v1519 = vmax.f32 %v1421, 0.0
  %v1520 = vmax.f32 %v1424, 0.0
  %v1521 = vmax.f32 %v1429, 0.0
  %v1522 = vmax.f32 %v1432, 0.0
  %v1523 = vmax.f32 %v1437, 0.0
  %v1524 = vmax.f32 %v1440, 0.0
  %v1525 = vmax.f32 %v1445, 0.0
  %v1526 = vmax.f32 %v1448, 0.0
  %v1527 = vmax.f32 %v1453, 0.0
  %v1528 = vmax.f32 %v1456, 0.0
  %v1529 = vmax.f32 %v1461, 0.0
  %v1530 = vmax.f32 %v1464, 0.0
  %v1531 = vpack.c.bf16 %v1468, %v1467
  %v1532 = vpack.c.bf16 %v1470, %v1469
  %v1533 = vpack.c.bf16 %v1472, %v1471
  %v1534 = vpack.c.bf16 %v1474, %v1473
  %v1535 = vpack.c.bf16 %v1476, %v1475
  %v1536 = vpack.c.bf16 %v1478, %v1477
  %v1537 = vpack.c.bf16 %v1480, %v1479
  %v1538 = vpack.c.bf16 %v1482, %v1481
  %v1539 = vpack.c.bf16 %v1484, %v1483
  %v1540 = vpack.c.bf16 %v1486, %v1485
  %v1541 = vpack.c.bf16 %v1488, %v1487
  %v1542 = vpack.c.bf16 %v1490, %v1489
  %v1543 = vpack.c.bf16 %v1492, %v1491
  %v1544 = vpack.c.bf16 %v1494, %v1493
  %v1545 = vpack.c.bf16 %v1496, %v1495
  %v1546 = vpack.c.bf16 %v1498, %v1497
  %v1547 = vpack.c.bf16 %v1500, %v1499
  %v1548 = vpack.c.bf16 %v1502, %v1501
  %v1549 = vpack.c.bf16 %v1504, %v1503
  %v1550 = vpack.c.bf16 %v1506, %v1505
  %v1551 = vpack.c.bf16 %v1508, %v1507
  %v1552 = vpack.c.bf16 %v1510, %v1509
  %v1553 = vpack.c.bf16 %v1512, %v1511
  %v1554 = vpack.c.bf16 %v1514, %v1513
  %v1555 = vpack.c.bf16 %v1516, %v1515
  %v1556 = vpack.c.bf16 %v1518, %v1517
  %v1557 = vpack.c.bf16 %v1520, %v1519
  %v1558 = vpack.c.bf16 %v1522, %v1521
  %v1559 = vpack.c.bf16 %v1524, %v1523
  %v1560 = vpack.c.bf16 %v1526, %v1525
  %v1561 = vpack.c.bf16 %v1528, %v1527
  %v1562 = vpack.c.bf16 %v1530, %v1529
  %v1563 = vld [vmem:[%s5] sm:$0xf]
  %v1564 = vld [vmem:[%s5 + $0x4] sm:$0xf]
  %v1565 = vld [vmem:[%s5 + $0x8] sm:$0xf]
  %v1566 = vld [vmem:[%s5 + $0xc] sm:$0xf]
  %v1567 = vld [vmem:[%s6] sm:$0x1]
  %v1569 = vlaneseq
  %v1570 = vshrl.u32 %v1569, 7
  %v1571 = vsub.s32 0, %v1570
  %v1572 = vrot.slane %v1567, %v1571
  %v1578 = vunpack.c.l.b16 %v1563
  %v1579 = vunpack.c.l.b16 %v1564
  %v1580 = vunpack.c.l.b16 %v1565
  %v1581 = vunpack.c.l.b16 %v1566
  %v1582 = vpack.c.b16 %v1579, %v1578
  %v1583 = vpack.c.b16 %v1581, %v1580
  %v1587 = vsel %vm288, %v1531, 0
  %v1590 = vsel %vm288, %v1532, 0
  %v1593 = vsel %vm288, %v1533, 0
  %v1596 = vsel %vm288, %v1534, 0
  %v1599 = vsel %vm288, %v1535, 0
  %v1602 = vsel %vm288, %v1536, 0
  %v1605 = vsel %vm288, %v1537, 0
  %v1608 = vsel %vm288, %v1538, 0
  %v1611 = vsel %vm288, %v1539, 0
  %v1614 = vsel %vm288, %v1540, 0
  %v1617 = vsel %vm288, %v1541, 0
  %v1620 = vsel %vm288, %v1542, 0
  %v1623 = vsel %vm288, %v1543, 0
  %v1626 = vsel %vm288, %v1544, 0
  %v1629 = vsel %vm288, %v1545, 0
  %v1632 = vsel %vm288, %v1546, 0
  %v1635 = vsel %vm288, %v1547, 0
  %v1638 = vsel %vm288, %v1548, 0
  %v1641 = vsel %vm288, %v1549, 0
  %v1644 = vsel %vm288, %v1550, 0
  %v1647 = vsel %vm288, %v1551, 0
  %v1650 = vsel %vm288, %v1552, 0
  %v1653 = vsel %vm288, %v1553, 0
  %v1656 = vsel %vm288, %v1554, 0
  %v1659 = vsel %vm288, %v1555, 0
  %v1662 = vsel %vm288, %v1556, 0
  %v1665 = vsel %vm288, %v1557, 0
  %v1668 = vsel %vm288, %v1558, 0
  %v1671 = vsel %vm288, %v1559, 0
  %v1674 = vsel %vm288, %v1560, 0
  %v1677 = vsel %vm288, %v1561, 0
  %v1680 = vsel %vm288, %v1562, 0
  %1682 = vmatprep.subr.bf16.mxu0 0
  %1683 = vmatpush1.bf16.msra.mxu0 %v1582
  %1684 = vmatprep.subr.bf16.mxu0 0
  %1685 = vmatpush1.bf16.msra.mxu0 %v1583
  %1686 = vmatprep.subr.bf16.mxu0 0
  %1687 = vmatpush1.bf16.msra.mxu0 0
  %1688 = vmatprep.subr.bf16.mxu0 0
  %1689 = vmatpush1.bf16.msra.mxu0 0
  %1690 = vmatprep.subr.bf16.mxu0 0
  %1691 = vmatpush1.bf16.msra.mxu0 0
  %1692 = vmatprep.subr.bf16.mxu0 0
  %1693 = vmatpush1.bf16.msra.mxu0 0
  %1694 = vmatprep.subr.bf16.mxu0 0
  %1695 = vmatpush1.bf16.msra.mxu0 0
  %1696 = vmatprep.subr.bf16.mxu0 0
  %1697 = vmatpush1.bf16.msra.mxu0 0
  %1698 = vmatprep.subr.bf16.mxu0 0
  %1699 = vmatpush1.bf16.msra.mxu0 0
  %1700 = vmatprep.subr.bf16.mxu0 0
  %1701 = vmatpush1.bf16.msra.mxu0 0
  %1702 = vmatprep.subr.bf16.mxu0 0
  %1703 = vmatpush1.bf16.msra.mxu0 0
  %1704 = vmatprep.subr.bf16.mxu0 0
  %1705 = vmatpush1.bf16.msra.mxu0 0
  %1706 = vmatprep.subr.bf16.mxu0 0
  %1707 = vmatpush1.bf16.msra.mxu0 0
  %1708 = vmatprep.subr.bf16.mxu0 0
  %1709 = vmatpush1.bf16.msra.mxu0 0
  %1710 = vmatprep.subr.bf16.mxu0 0
  %1711 = vmatpush1.bf16.msra.mxu0 0
  %1712 = vmatprep.subr.bf16.mxu0 0
  %1713 = vmatpush1.bf16.msra.mxu0 0
  %1714 = vmatprep.mubr.bf16.mxu0 0
  %1715 = vmatmul.mubr.bf16.gmra.mrb[0].mxu0 %v1587
  %v1716 = vpop.f32.mrb[0].mxu0
  %v1717 = vadd.f32 %v1572, %v1716
  %v1718 = vpop.f32.mrb[0].mxu0
  %v1719 = vpop.f32.mrb[0].mxu0
  %v1720 = vadd.f32 %v1572, %v1719
  %v1721 = vpop.f32.mrb[0].mxu0
  %1722 = vmatprep.mubr.bf16.mxu0 0
  %1723 = vmatmul.mubr.bf16.gmra.mrb[0].mxu0 %v1590
  %v1724 = vpop.f32.mrb[0].mxu0
  %v1725 = vadd.f32 %v1572, %v1724
  %v1726 = vpop.f32.mrb[0].mxu0
  %v1727 = vpop.f32.mrb[0].mxu0
  %v1728 = vadd.f32 %v1572, %v1727
  %v1729 = vpop.f32.mrb[0].mxu0
  %1730 = vmatprep.mubr.bf16.mxu0 0
  %1731 = vmatmul.mubr.bf16.gmra.mrb[0].mxu0 %v1593
  %v1732 = vpop.f32.mrb[0].mxu0
  %v1733 = vadd.f32 %v1572, %v1732
  %v1734 = vpop.f32.mrb[0].mxu0
  %v1735 = vpop.f32.mrb[0].mxu0
  %v1736 = vadd.f32 %v1572, %v1735
  %v1737 = vpop.f32.mrb[0].mxu0
  %1738 = vmatprep.mubr.bf16.mxu0 0
  %1739 = vmatmul.mubr.bf16.gmra.mrb[0].mxu0 %v1596
  %v1740 = vpop.f32.mrb[0].mxu0
  %v1741 = vadd.f32 %v1572, %v1740
  %v1742 = vpop.f32.mrb[0].mxu0
  %v1743 = vpop.f32.mrb[0].mxu0
  %v1744 = vadd.f32 %v1572, %v1743
  %v1745 = vpop.f32.mrb[0].mxu0
  %1746 = vmatprep.mubr.bf16.mxu0 0
  %1747 = vmatmul.mubr.bf16.gmra.mrb[0].mxu0 %v1599
  %v1748 = vpop.f32.mrb[0].mxu0
  %v1749 = vadd.f32 %v1572, %v1748
  %v1750 = vpop.f32.mrb[0].mxu0
  %v1751 = vpop.f32.mrb[0].mxu0
  %v1752 = vadd.f32 %v1572, %v1751
  %v1753 = vpop.f32.mrb[0].mxu0
  %1754 = vmatprep.mubr.bf16.mxu0 0
  %1755 = vmatmul.mubr.bf16.gmra.mrb[0].mxu0 %v1602
  %v1756 = vpop.f32.mrb[0].mxu0
  %v1757 = vadd.f32 %v1572, %v1756
  %v1758 = vpop.f32.mrb[0].mxu0
  %v1759 = vpop.f32.mrb[0].mxu0
  %v1760 = vadd.f32 %v1572, %v1759
  %v1761 = vpop.f32.mrb[0].mxu0
  %1762 = vmatprep.mubr.bf16.mxu0 0
  %1763 = vmatmul.mubr.bf16.gmra.mrb[0].mxu0 %v1605
  %v1764 = vpop.f32.mrb[0].mxu0
  %v1765 = vadd.f32 %v1572, %v1764
  %v1766 = vpop.f32.mrb[0].mxu0
  %v1767 = vpop.f32.mrb[0].mxu0
  %v1768 = vadd.f32 %v1572, %v1767
  %v1769 = vpop.f32.mrb[0].mxu0
  %1770 = vmatprep.mubr.bf16.mxu0 0
  %1771 = vmatmul.mubr.bf16.gmra.mrb[0].mxu0 %v1608
  %v1772 = vpop.f32.mrb[0].mxu0
  %v1773 = vadd.f32 %v1572, %v1772
  %v1774 = vpop.f32.mrb[0].mxu0
  %v1775 = vpop.f32.mrb[0].mxu0
  %v1776 = vadd.f32 %v1572, %v1775
  %v1777 = vpop.f32.mrb[0].mxu0
  %1778 = vmatprep.mubr.bf16.mxu0 0
  %1779 = vmatmul.mubr.bf16.gmra.mrb[0].mxu0 %v1611
  %v1780 = vpop.f32.mrb[0].mxu0
  %v1781 = vadd.f32 %v1572, %v1780
  %v1782 = vpop.f32.mrb[0].mxu0
  %v1783 = vpop.f32.mrb[0].mxu0
  %v1784 = vadd.f32 %v1572, %v1783
  %v1785 = vpop.f32.mrb[0].mxu0
  %1786 = vmatprep.mubr.bf16.mxu0 0
  %1787 = vmatmul.mubr.bf16.gmra.mrb[0].mxu0 %v1614
  %v1788 = vpop.f32.mrb[0].mxu0
  %v1789 = vadd.f32 %v1572, %v1788
  %v1790 = vpop.f32.mrb[0].mxu0
  %v1791 = vpop.f32.mrb[0].mxu0
  %v1792 = vadd.f32 %v1572, %v1791
  %v1793 = vpop.f32.mrb[0].mxu0
  %1794 = vmatprep.mubr.bf16.mxu0 0
  %1795 = vmatmul.mubr.bf16.gmra.mrb[0].mxu0 %v1617
  %v1796 = vpop.f32.mrb[0].mxu0
  %v1797 = vadd.f32 %v1572, %v1796
  %v1798 = vpop.f32.mrb[0].mxu0
  %v1799 = vpop.f32.mrb[0].mxu0
  %v1800 = vadd.f32 %v1572, %v1799
  %v1801 = vpop.f32.mrb[0].mxu0
  %1802 = vmatprep.mubr.bf16.mxu0 0
  %1803 = vmatmul.mubr.bf16.gmra.mrb[0].mxu0 %v1620
  %v1804 = vpop.f32.mrb[0].mxu0
  %v1805 = vadd.f32 %v1572, %v1804
  %v1806 = vpop.f32.mrb[0].mxu0
  %v1807 = vpop.f32.mrb[0].mxu0
  %v1808 = vadd.f32 %v1572, %v1807
  %v1809 = vpop.f32.mrb[0].mxu0
  %1810 = vmatprep.mubr.bf16.mxu0 0
  %1811 = vmatmul.mubr.bf16.gmra.mrb[0].mxu0 %v1623
  %v1812 = vpop.f32.mrb[0].mxu0
  %v1813 = vadd.f32 %v1572, %v1812
  %v1814 = vpop.f32.mrb[0].mxu0
  %v1815 = vpop.f32.mrb[0].mxu0
  %v1816 = vadd.f32 %v1572, %v1815
  %v1817 = vpop.f32.mrb[0].mxu0
  %1818 = vmatprep.mubr.bf16.mxu0 0
  %1819 = vmatmul.mubr.bf16.gmra.mrb[0].mxu0 %v1626
  %v1820 = vpop.f32.mrb[0].mxu0
  %v1821 = vadd.f32 %v1572, %v1820
  %v1822 = vpop.f32.mrb[0].mxu0
  %v1823 = vpop.f32.mrb[0].mxu0
  %v1824 = vadd.f32 %v1572, %v1823
  %v1825 = vpop.f32.mrb[0].mxu0
  %1826 = vmatprep.mubr.bf16.mxu0 0
  %1827 = vmatmul.mubr.bf16.gmra.mrb[0].mxu0 %v1629
  %v1828 = vpop.f32.mrb[0].mxu0
  %v1829 = vadd.f32 %v1572, %v1828
  %v1830 = vpop.f32.mrb[0].mxu0
  %v1831 = vpop.f32.mrb[0].mxu0
  %v1832 = vadd.f32 %v1572, %v1831
  %v1833 = vpop.f32.mrb[0].mxu0
  %1834 = vmatprep.mubr.bf16.mxu0 0
  %1835 = vmatmul.mubr.bf16.gmra.mrb[0].mxu0 %v1632
  %v1836 = vpop.f32.mrb[0].mxu0
  %v1837 = vadd.f32 %v1572, %v1836
  %v1838 = vpop.f32.mrb[0].mxu0
  %v1839 = vpop.f32.mrb[0].mxu0
  %v1840 = vadd.f32 %v1572, %v1839
  %v1841 = vpop.f32.mrb[0].mxu0
  %1842 = vmatprep.mubr.bf16.mxu0 0
  %1843 = vmatmul.mubr.bf16.gmra.mrb[0].mxu0 %v1635
  %v1844 = vpop.f32.mrb[0].mxu0
  %v1845 = vadd.f32 %v1572, %v1844
  %v1846 = vpop.f32.mrb[0].mxu0
  %v1847 = vpop.f32.mrb[0].mxu0
  %v1848 = vadd.f32 %v1572, %v1847
  %v1849 = vpop.f32.mrb[0].mxu0
  %1850 = vmatprep.mubr.bf16.mxu0 0
  %1851 = vmatmul.mubr.bf16.gmra.mrb[0].mxu0 %v1638
  %v1852 = vpop.f32.mrb[0].mxu0
  %v1853 = vadd.f32 %v1572, %v1852
  %v1854 = vpop.f32.mrb[0].mxu0
  %v1855 = vpop.f32.mrb[0].mxu0
  %v1856 = vadd.f32 %v1572, %v1855
  %v1857 = vpop.f32.mrb[0].mxu0
  %1858 = vmatprep.mubr.bf16.mxu0 0
  %1859 = vmatmul.mubr.bf16.gmra.mrb[0].mxu0 %v1641
  %v1860 = vpop.f32.mrb[0].mxu0
  %v1861 = vadd.f32 %v1572, %v1860
  %v1862 = vpop.f32.mrb[0].mxu0
  %v1863 = vpop.f32.mrb[0].mxu0
  %v1864 = vadd.f32 %v1572, %v1863
  %v1865 = vpop.f32.mrb[0].mxu0
  %1866 = vmatprep.mubr.bf16.mxu0 0
  %1867 = vmatmul.mubr.bf16.gmra.mrb[0].mxu0 %v1644
  %v1868 = vpop.f32.mrb[0].mxu0
  %v1869 = vadd.f32 %v1572, %v1868
  %v1870 = vpop.f32.mrb[0].mxu0
  %v1871 = vpop.f32.mrb[0].mxu0
  %v1872 = vadd.f32 %v1572, %v1871
  %v1873 = vpop.f32.mrb[0].mxu0
  %1874 = vmatprep.mubr.bf16.mxu0 0
  %1875 = vmatmul.mubr.bf16.gmra.mrb[0].mxu0 %v1647
  %v1876 = vpop.f32.mrb[0].mxu0
  %v1877 = vadd.f32 %v1572, %v1876
  %v1878 = vpop.f32.mrb[0].mxu0
  %v1879 = vpop.f32.mrb[0].mxu0
  %v1880 = vadd.f32 %v1572, %v1879
  %v1881 = vpop.f32.mrb[0].mxu0
  %1882 = vmatprep.mubr.bf16.mxu0 0
  %1883 = vmatmul.mubr.bf16.gmra.mrb[0].mxu0 %v1650
  %v1884 = vpop.f32.mrb[0].mxu0
  %v1885 = vadd.f32 %v1572, %v1884
  %v1886 = vpop.f32.mrb[0].mxu0
  %v1887 = vpop.f32.mrb[0].mxu0
  %v1888 = vadd.f32 %v1572, %v1887
  %v1889 = vpop.f32.mrb[0].mxu0
  %1890 = vmatprep.mubr.bf16.mxu0 0
  %1891 = vmatmul.mubr.bf16.gmra.mrb[0].mxu0 %v1653
  %v1892 = vpop.f32.mrb[0].mxu0
  %v1893 = vadd.f32 %v1572, %v1892
  %v1894 = vpop.f32.mrb[0].mxu0
  %v1895 = vpop.f32.mrb[0].mxu0
  %v1896 = vadd.f32 %v1572, %v1895
  %v1897 = vpop.f32.mrb[0].mxu0
  %1898 = vmatprep.mubr.bf16.mxu0 0
  %1899 = vmatmul.mubr.bf16.gmra.mrb[0].mxu0 %v1656
  %v1900 = vpop.f32.mrb[0].mxu0
  %v1901 = vadd.f32 %v1572, %v1900
  %v1902 = vpop.f32.mrb[0].mxu0
  %v1903 = vpop.f32.mrb[0].mxu0
  %v1904 = vadd.f32 %v1572, %v1903
  %v1905 = vpop.f32.mrb[0].mxu0
  %1906 = vmatprep.mubr.bf16.mxu0 0
  %1907 = vmatmul.mubr.bf16.gmra.mrb[0].mxu0 %v1659
  %v1908 = vpop.f32.mrb[0].mxu0
  %v1909 = vadd.f32 %v1572, %v1908
  %v1910 = vpop.f32.mrb[0].mxu0
  %v1911 = vpop.f32.mrb[0].mxu0
  %v1912 = vadd.f32 %v1572, %v1911
  %v1913 = vpop.f32.mrb[0].mxu0
  %1914 = vmatprep.mubr.bf16.mxu0 0
  %1915 = vmatmul.mubr.bf16.gmra.mrb[0].mxu0 %v1662
  %v1916 = vpop.f32.mrb[0].mxu0
  %v1917 = vadd.f32 %v1572, %v1916
  %v1918 = vpop.f32.mrb[0].mxu0
  %v1919 = vpop.f32.mrb[0].mxu0
  %v1920 = vadd.f32 %v1572, %v1919
  %v1921 = vpop.f32.mrb[0].mxu0
  %1922 = vmatprep.mubr.bf16.mxu0 0
  %1923 = vmatmul.mubr.bf16.gmra.mrb[0].mxu0 %v1665
  %v1924 = vpop.f32.mrb[0].mxu0
  %v1925 = vadd.f32 %v1572, %v1924
  %v1926 = vpop.f32.mrb[0].mxu0
  %v1927 = vpop.f32.mrb[0].mxu0
  %v1928 = vadd.f32 %v1572, %v1927
  %v1929 = vpop.f32.mrb[0].mxu0
  %1930 = vmatprep.mubr.bf16.mxu0 0
  %1931 = vmatmul.mubr.bf16.gmra.mrb[0].mxu0 %v1668
  %v1932 = vpop.f32.mrb[0].mxu0
  %v1933 = vadd.f32 %v1572, %v1932
  %v1934 = vpop.f32.mrb[0].mxu0
  %v1935 = vpop.f32.mrb[0].mxu0
  %v1936 = vadd.f32 %v1572, %v1935
  %v1937 = vpop.f32.mrb[0].mxu0
  %1938 = vmatprep.mubr.bf16.mxu0 0
  %1939 = vmatmul.mubr.bf16.gmra.mrb[0].mxu0 %v1671
  %v1940 = vpop.f32.mrb[0].mxu0
  %v1941 = vadd.f32 %v1572, %v1940
  %v1942 = vpop.f32.mrb[0].mxu0
  %v1943 = vpop.f32.mrb[0].mxu0
  %v1944 = vadd.f32 %v1572, %v1943
  %v1945 = vpop.f32.mrb[0].mxu0
  %1946 = vmatprep.mubr.bf16.mxu0 0
  %1947 = vmatmul.mubr.bf16.gmra.mrb[0].mxu0 %v1674
  %v1948 = vpop.f32.mrb[0].mxu0
  %v1949 = vadd.f32 %v1572, %v1948
  %v1950 = vpop.f32.mrb[0].mxu0
  %v1951 = vpop.f32.mrb[0].mxu0
  %v1952 = vadd.f32 %v1572, %v1951
  %v1953 = vpop.f32.mrb[0].mxu0
  %1954 = vmatprep.mubr.bf16.mxu0 0
  %1955 = vmatmul.mubr.bf16.gmra.mrb[0].mxu0 %v1677
  %v1956 = vpop.f32.mrb[0].mxu0
  %v1957 = vadd.f32 %v1572, %v1956
  %v1958 = vpop.f32.mrb[0].mxu0
  %v1959 = vpop.f32.mrb[0].mxu0
  %v1960 = vadd.f32 %v1572, %v1959
  %v1961 = vpop.f32.mrb[0].mxu0
  %1962 = vmatprep.mubr.bf16.mxu0 0
  %1963 = vmatmul.mubr.bf16.gmra.mrb[0].mxu0 %v1680
  %v1964 = vpop.f32.mrb[0].mxu0
  %v1965 = vadd.f32 %v1572, %v1964
  %v1966 = vpop.f32.mrb[0].mxu0
  %v1967 = vpop.f32.mrb[0].mxu0
  %v1968 = vadd.f32 %v1572, %v1967
  %v1969 = vpop.f32.mrb[0].mxu0
  %1970 = vdwg.mxu0
  %v1971 = vmax.f32 %v1717, 0.0
  %v1972 = vmax.f32 %v1720, 0.0
  %v1973 = vmax.f32 %v1725, 0.0
  %v1974 = vmax.f32 %v1728, 0.0
  %v1975 = vmax.f32 %v1733, 0.0
  %v1976 = vmax.f32 %v1736, 0.0
  %v1977 = vmax.f32 %v1741, 0.0
  %v1978 = vmax.f32 %v1744, 0.0
  %v1979 = vmax.f32 %v1749, 0.0
  %v1980 = vmax.f32 %v1752, 0.0
  %v1981 = vmax.f32 %v1757, 0.0
  %v1982 = vmax.f32 %v1760, 0.0
  %v1983 = vmax.f32 %v1765, 0.0
  %v1984 = vmax.f32 %v1768, 0.0
  %v1985 = vmax.f32 %v1773, 0.0
  %v1986 = vmax.f32 %v1776, 0.0
  %v1987 = vmax.f32 %v1781, 0.0
  %v1988 = vmax.f32 %v1784, 0.0
  %v1989 = vmax.f32 %v1789, 0.0
  %v1990 = vmax.f32 %v1792, 0.0
  %v1991 = vmax.f32 %v1797, 0.0
  %v1992 = vmax.f32 %v1800, 0.0
  %v1993 = vmax.f32 %v1805, 0.0
  %v1994 = vmax.f32 %v1808, 0.0
  %v1995 = vmax.f32 %v1813, 0.0
  %v1996 = vmax.f32 %v1816, 0.0
  %v1997 = vmax.f32 %v1821, 0.0
  %v1998 = vmax.f32 %v1824, 0.0
  %v1999 = vmax.f32 %v1829, 0.0
  %v2000 = vmax.f32 %v1832, 0.0
  %v2001 = vmax.f32 %v1837, 0.0
  %v2002 = vmax.f32 %v1840, 0.0
  %v2003 = vmax.f32 %v1845, 0.0
  %v2004 = vmax.f32 %v1848, 0.0
  %v2005 = vmax.f32 %v1853, 0.0
  %v2006 = vmax.f32 %v1856, 0.0
  %v2007 = vmax.f32 %v1861, 0.0
  %v2008 = vmax.f32 %v1864, 0.0
  %v2009 = vmax.f32 %v1869, 0.0
  %v2010 = vmax.f32 %v1872, 0.0
  %v2011 = vmax.f32 %v1877, 0.0
  %v2012 = vmax.f32 %v1880, 0.0
  %v2013 = vmax.f32 %v1885, 0.0
  %v2014 = vmax.f32 %v1888, 0.0
  %v2015 = vmax.f32 %v1893, 0.0
  %v2016 = vmax.f32 %v1896, 0.0
  %v2017 = vmax.f32 %v1901, 0.0
  %v2018 = vmax.f32 %v1904, 0.0
  %v2019 = vmax.f32 %v1909, 0.0
  %v2020 = vmax.f32 %v1912, 0.0
  %v2021 = vmax.f32 %v1917, 0.0
  %v2022 = vmax.f32 %v1920, 0.0
  %v2023 = vmax.f32 %v1925, 0.0
  %v2024 = vmax.f32 %v1928, 0.0
  %v2025 = vmax.f32 %v1933, 0.0
  %v2026 = vmax.f32 %v1936, 0.0
  %v2027 = vmax.f32 %v1941, 0.0
  %v2028 = vmax.f32 %v1944, 0.0
  %v2029 = vmax.f32 %v1949, 0.0
  %v2030 = vmax.f32 %v1952, 0.0
  %v2031 = vmax.f32 %v1957, 0.0
  %v2032 = vmax.f32 %v1960, 0.0
  %v2033 = vmax.f32 %v1965, 0.0
  %v2034 = vmax.f32 %v1968, 0.0
  %v2035 = vpack.c.bf16 %v1972, %v1971
  %v2036 = vpack.c.bf16 %v1974, %v1973
  %v2037 = vpack.c.bf16 %v1976, %v1975
  %v2038 = vpack.c.bf16 %v1978, %v1977
  %v2039 = vpack.c.bf16 %v1980, %v1979
  %v2040 = vpack.c.bf16 %v1982, %v1981
  %v2041 = vpack.c.bf16 %v1984, %v1983
  %v2042 = vpack.c.bf16 %v1986, %v1985
  %v2043 = vpack.c.bf16 %v1988, %v1987
  %v2044 = vpack.c.bf16 %v1990, %v1989
  %v2045 = vpack.c.bf16 %v1992, %v1991
  %v2046 = vpack.c.bf16 %v1994, %v1993
  %v2047 = vpack.c.bf16 %v1996, %v1995
  %v2048 = vpack.c.bf16 %v1998, %v1997
  %v2049 = vpack.c.bf16 %v2000, %v1999
  %v2050 = vpack.c.bf16 %v2002, %v2001
  %v2051 = vpack.c.bf16 %v2004, %v2003
  %v2052 = vpack.c.bf16 %v2006, %v2005
  %v2053 = vpack.c.bf16 %v2008, %v2007
  %v2054 = vpack.c.bf16 %v2010, %v2009
  %v2055 = vpack.c.bf16 %v2012, %v2011
  %v2056 = vpack.c.bf16 %v2014, %v2013
  %v2057 = vpack.c.bf16 %v2016, %v2015
  %v2058 = vpack.c.bf16 %v2018, %v2017
  %v2059 = vpack.c.bf16 %v2020, %v2019
  %v2060 = vpack.c.bf16 %v2022, %v2021
  %v2061 = vpack.c.bf16 %v2024, %v2023
  %v2062 = vpack.c.bf16 %v2026, %v2025
  %v2063 = vpack.c.bf16 %v2028, %v2027
  %v2064 = vpack.c.bf16 %v2030, %v2029
  %v2065 = vpack.c.bf16 %v2032, %v2031
  %v2066 = vpack.c.bf16 %v2034, %v2033
  %v2067 = vld [vmem:[%s7] sm:$0xf]
  %v2068 = vld [vmem:[%s7 + $0x4] sm:$0xf]
  %v2069 = vld [vmem:[#allocation2] sm:$0x1]
  %v2071 = vlaneseq
  %v2072 = vshrl.u32 %v2071, 7
  %v2073 = vsub.s32 0, %v2072
  %v2074 = vrot.slane %v2069, %v2073
  %v2078 = vunpack.c.l.b16 %v2067
  %v2079 = vunpack.c.l.b16 %v2068
  %v2080 = vpack.c.b16 %v2079, %v2078
  %vm2082 = vcmask 130048
  %v2084 = vsel %vm2082, %v2035, 0
  %v2087 = vsel %vm2082, %v2036, 0
  %v2090 = vsel %vm2082, %v2037, 0
  %v2093 = vsel %vm2082, %v2038, 0
  %v2096 = vsel %vm2082, %v2039, 0
  %v2099 = vsel %vm2082, %v2040, 0
  %v2102 = vsel %vm2082, %v2041, 0
  %v2105 = vsel %vm2082, %v2042, 0
  %v2108 = vsel %vm2082, %v2043, 0
  %v2111 = vsel %vm2082, %v2044, 0
  %v2114 = vsel %vm2082, %v2045, 0
  %v2117 = vsel %vm2082, %v2046, 0
  %v2120 = vsel %vm2082, %v2047, 0
  %v2123 = vsel %vm2082, %v2048, 0
  %v2126 = vsel %vm2082, %v2049, 0
  %v2129 = vsel %vm2082, %v2050, 0
  %v2132 = vsel %vm2082, %v2051, 0
  %v2135 = vsel %vm2082, %v2052, 0
  %v2138 = vsel %vm2082, %v2053, 0
  %v2141 = vsel %vm2082, %v2054, 0
  %v2144 = vsel %vm2082, %v2055, 0
  %v2147 = vsel %vm2082, %v2056, 0
  %v2150 = vsel %vm2082, %v2057, 0
  %v2153 = vsel %vm2082, %v2058, 0
  %v2156 = vsel %vm2082, %v2059, 0
  %v2159 = vsel %vm2082, %v2060, 0
  %v2162 = vsel %vm2082, %v2061, 0
  %v2165 = vsel %vm2082, %v2062, 0
  %v2168 = vsel %vm2082, %v2063, 0
  %v2171 = vsel %vm2082, %v2064, 0
  %v2174 = vsel %vm2082, %v2065, 0
  %v2177 = vsel %vm2082, %v2066, 0
  %2179 = vmatprep.subr.bf16.mxu0 0
  %2180 = vmatpush1.bf16.msra.mxu0 %v2080
  %2181 = vmatprep.subr.bf16.mxu0 0
  %2182 = vmatpush1.bf16.msra.mxu0 0
  %2183 = vmatprep.subr.bf16.mxu0 0
  %2184 = vmatpush1.bf16.msra.mxu0 0
  %2185 = vmatprep.subr.bf16.mxu0 0
  %2186 = vmatpush1.bf16.msra.mxu0 0
  %2187 = vmatprep.subr.bf16.mxu0 0
  %2188 = vmatpush1.bf16.msra.mxu0 0
  %2189 = vmatprep.subr.bf16.mxu0 0
  %2190 = vmatpush1.bf16.msra.mxu0 0
  %2191 = vmatprep.subr.bf16.mxu0 0
  %2192 = vmatpush1.bf16.msra.mxu0 0
  %2193 = vmatprep.subr.bf16.mxu0 0
  %2194 = vmatpush1.bf16.msra.mxu0 0
  %2195 = vmatprep.subr.bf16.mxu0 0
  %2196 = vmatpush1.bf16.msra.mxu0 0
  %2197 = vmatprep.subr.bf16.mxu0 0
  %2198 = vmatpush1.bf16.msra.mxu0 0
  %2199 = vmatprep.subr.bf16.mxu0 0
  %2200 = vmatpush1.bf16.msra.mxu0 0
  %2201 = vmatprep.subr.bf16.mxu0 0
  %2202 = vmatpush1.bf16.msra.mxu0 0
  %2203 = vmatprep.subr.bf16.mxu0 0
  %2204 = vmatpush1.bf16.msra.mxu0 0
  %2205 = vmatprep.subr.bf16.mxu0 0
  %2206 = vmatpush1.bf16.msra.mxu0 0
  %2207 = vmatprep.subr.bf16.mxu0 0
  %2208 = vmatpush1.bf16.msra.mxu0 0
  %2209 = vmatprep.subr.bf16.mxu0 0
  %2210 = vmatpush1.bf16.msra.mxu0 0
  %2211 = vmatprep.mubr.bf16.mxu0 0
  %2212 = vmatmul.mubr.bf16.gmra.mrb[0].mxu0 %v2084
  %v2213 = vpop.f32.mrb[0].mxu0
  %v2214 = vadd.f32 %v2074, %v2213
  %v2215 = vpop.f32.mrb[0].mxu0
  %v2216 = vpop.f32.mrb[0].mxu0
  %v2217 = vadd.f32 %v2074, %v2216
  %v2218 = vpop.f32.mrb[0].mxu0
  %2219 = vmatprep.mubr.bf16.mxu0 0
  %2220 = vmatmul.mubr.bf16.gmra.mrb[0].mxu0 %v2087
  %v2221 = vpop.f32.mrb[0].mxu0
  %v2222 = vadd.f32 %v2074, %v2221
  %v2223 = vpop.f32.mrb[0].mxu0
  %v2224 = vpop.f32.mrb[0].mxu0
  %v2225 = vadd.f32 %v2074, %v2224
  %v2226 = vpop.f32.mrb[0].mxu0
  %2227 = vmatprep.mubr.bf16.mxu0 0
  %2228 = vmatmul.mubr.bf16.gmra.mrb[0].mxu0 %v2090
  %v2229 = vpop.f32.mrb[0].mxu0
  %v2230 = vadd.f32 %v2074, %v2229
  %v2231 = vpop.f32.mrb[0].mxu0
  %v2232 = vpop.f32.mrb[0].mxu0
  %v2233 = vadd.f32 %v2074, %v2232
  %v2234 = vpop.f32.mrb[0].mxu0
  %2235 = vmatprep.mubr.bf16.mxu0 0
  %2236 = vmatmul.mubr.bf16.gmra.mrb[0].mxu0 %v2093
  %v2237 = vpop.f32.mrb[0].mxu0
  %v2238 = vadd.f32 %v2074, %v2237
  %v2239 = vpop.f32.mrb[0].mxu0
  %v2240 = vpop.f32.mrb[0].mxu0
  %v2241 = vadd.f32 %v2074, %v2240
  %v2242 = vpop.f32.mrb[0].mxu0
  %2243 = vmatprep.mubr.bf16.mxu0 0
  %2244 = vmatmul.mubr.bf16.gmra.mrb[0].mxu0 %v2096
  %v2245 = vpop.f32.mrb[0].mxu0
  %v2246 = vadd.f32 %v2074, %v2245
  %v2247 = vpop.f32.mrb[0].mxu0
  %v2248 = vpop.f32.mrb[0].mxu0
  %v2249 = vadd.f32 %v2074, %v2248
  %v2250 = vpop.f32.mrb[0].mxu0
  %2251 = vmatprep.mubr.bf16.mxu0 0
  %2252 = vmatmul.mubr.bf16.gmra.mrb[0].mxu0 %v2099
  %v2253 = vpop.f32.mrb[0].mxu0
  %v2254 = vadd.f32 %v2074, %v2253
  %v2255 = vpop.f32.mrb[0].mxu0
  %v2256 = vpop.f32.mrb[0].mxu0
  %v2257 = vadd.f32 %v2074, %v2256
  %v2258 = vpop.f32.mrb[0].mxu0
  %2259 = vmatprep.mubr.bf16.mxu0 0
  %2260 = vmatmul.mubr.bf16.gmra.mrb[0].mxu0 %v2102
  %v2261 = vpop.f32.mrb[0].mxu0
  %v2262 = vadd.f32 %v2074, %v2261
  %v2263 = vpop.f32.mrb[0].mxu0
  %v2264 = vpop.f32.mrb[0].mxu0
  %v2265 = vadd.f32 %v2074, %v2264
  %v2266 = vpop.f32.mrb[0].mxu0
  %2267 = vmatprep.mubr.bf16.mxu0 0
  %2268 = vmatmul.mubr.bf16.gmra.mrb[0].mxu0 %v2105
  %v2269 = vpop.f32.mrb[0].mxu0
  %v2270 = vadd.f32 %v2074, %v2269
  %v2271 = vpop.f32.mrb[0].mxu0
  %v2272 = vpop.f32.mrb[0].mxu0
  %v2273 = vadd.f32 %v2074, %v2272
  %v2274 = vpop.f32.mrb[0].mxu0
  %2275 = vmatprep.mubr.bf16.mxu0 0
  %2276 = vmatmul.mubr.bf16.gmra.mrb[0].mxu0 %v2108
  %v2277 = vpop.f32.mrb[0].mxu0
  %v2278 = vadd.f32 %v2074, %v2277
  %v2279 = vpop.f32.mrb[0].mxu0
  %v2280 = vpop.f32.mrb[0].mxu0
  %v2281 = vadd.f32 %v2074, %v2280
  %v2282 = vpop.f32.mrb[0].mxu0
  %2283 = vmatprep.mubr.bf16.mxu0 0
  %2284 = vmatmul.mubr.bf16.gmra.mrb[0].mxu0 %v2111
  %v2285 = vpop.f32.mrb[0].mxu0
  %v2286 = vadd.f32 %v2074, %v2285
  %v2287 = vpop.f32.mrb[0].mxu0
  %v2288 = vpop.f32.mrb[0].mxu0
  %v2289 = vadd.f32 %v2074, %v2288
  %v2290 = vpop.f32.mrb[0].mxu0
  %2291 = vmatprep.mubr.bf16.mxu0 0
  %2292 = vmatmul.mubr.bf16.gmra.mrb[0].mxu0 %v2114
  %v2293 = vpop.f32.mrb[0].mxu0
  %v2294 = vadd.f32 %v2074, %v2293
  %v2295 = vpop.f32.mrb[0].mxu0
  %v2296 = vpop.f32.mrb[0].mxu0
  %v2297 = vadd.f32 %v2074, %v2296
  %v2298 = vpop.f32.mrb[0].mxu0
  %2299 = vmatprep.mubr.bf16.mxu0 0
  %2300 = vmatmul.mubr.bf16.gmra.mrb[0].mxu0 %v2117
  %v2301 = vpop.f32.mrb[0].mxu0
  %v2302 = vadd.f32 %v2074, %v2301
  %v2303 = vpop.f32.mrb[0].mxu0
  %v2304 = vpop.f32.mrb[0].mxu0
  %v2305 = vadd.f32 %v2074, %v2304
  %v2306 = vpop.f32.mrb[0].mxu0
  %2307 = vmatprep.mubr.bf16.mxu0 0
  %2308 = vmatmul.mubr.bf16.gmra.mrb[0].mxu0 %v2120
  %v2309 = vpop.f32.mrb[0].mxu0
  %v2310 = vadd.f32 %v2074, %v2309
  %v2311 = vpop.f32.mrb[0].mxu0
  %v2312 = vpop.f32.mrb[0].mxu0
  %v2313 = vadd.f32 %v2074, %v2312
  %v2314 = vpop.f32.mrb[0].mxu0
  %2315 = vmatprep.mubr.bf16.mxu0 0
  %2316 = vmatmul.mubr.bf16.gmra.mrb[0].mxu0 %v2123
  %v2317 = vpop.f32.mrb[0].mxu0
  %v2318 = vadd.f32 %v2074, %v2317
  %v2319 = vpop.f32.mrb[0].mxu0
  %v2320 = vpop.f32.mrb[0].mxu0
  %v2321 = vadd.f32 %v2074, %v2320
  %v2322 = vpop.f32.mrb[0].mxu0
  %2323 = vmatprep.mubr.bf16.mxu0 0
  %2324 = vmatmul.mubr.bf16.gmra.mrb[0].mxu0 %v2126
  %v2325 = vpop.f32.mrb[0].mxu0
  %v2326 = vadd.f32 %v2074, %v2325
  %v2327 = vpop.f32.mrb[0].mxu0
  %v2328 = vpop.f32.mrb[0].mxu0
  %v2329 = vadd.f32 %v2074, %v2328
  %v2330 = vpop.f32.mrb[0].mxu0
  %2331 = vmatprep.mubr.bf16.mxu0 0
  %2332 = vmatmul.mubr.bf16.gmra.mrb[0].mxu0 %v2129
  %v2333 = vpop.f32.mrb[0].mxu0
  %v2334 = vadd.f32 %v2074, %v2333
  %v2335 = vpop.f32.mrb[0].mxu0
  %v2336 = vpop.f32.mrb[0].mxu0
  %v2337 = vadd.f32 %v2074, %v2336
  %v2338 = vpop.f32.mrb[0].mxu0
  %2339 = vmatprep.mubr.bf16.mxu0 0
  %2340 = vmatmul.mubr.bf16.gmra.mrb[0].mxu0 %v2132
  %v2341 = vpop.f32.mrb[0].mxu0
  %v2342 = vadd.f32 %v2074, %v2341
  %v2343 = vpop.f32.mrb[0].mxu0
  %v2344 = vpop.f32.mrb[0].mxu0
  %v2345 = vadd.f32 %v2074, %v2344
  %v2346 = vpop.f32.mrb[0].mxu0
  %2347 = vmatprep.mubr.bf16.mxu0 0
  %2348 = vmatmul.mubr.bf16.gmra.mrb[0].mxu0 %v2135
  %v2349 = vpop.f32.mrb[0].mxu0
  %v2350 = vadd.f32 %v2074, %v2349
  %v2351 = vpop.f32.mrb[0].mxu0
  %v2352 = vpop.f32.mrb[0].mxu0
  %v2353 = vadd.f32 %v2074, %v2352
  %v2354 = vpop.f32.mrb[0].mxu0
  %2355 = vmatprep.mubr.bf16.mxu0 0
  %2356 = vmatmul.mubr.bf16.gmra.mrb[0].mxu0 %v2138
  %v2357 = vpop.f32.mrb[0].mxu0
  %v2358 = vadd.f32 %v2074, %v2357
  %v2359 = vpop.f32.mrb[0].mxu0
  %v2360 = vpop.f32.mrb[0].mxu0
  %v2361 = vadd.f32 %v2074, %v2360
  %v2362 = vpop.f32.mrb[0].mxu0
  %2363 = vmatprep.mubr.bf16.mxu0 0
  %2364 = vmatmul.mubr.bf16.gmra.mrb[0].mxu0 %v2141
  %v2365 = vpop.f32.mrb[0].mxu0
  %v2366 = vadd.f32 %v2074, %v2365
  %v2367 = vpop.f32.mrb[0].mxu0
  %v2368 = vpop.f32.mrb[0].mxu0
  %v2369 = vadd.f32 %v2074, %v2368
  %v2370 = vpop.f32.mrb[0].mxu0
  %2371 = vmatprep.mubr.bf16.mxu0 0
  %2372 = vmatmul.mubr.bf16.gmra.mrb[0].mxu0 %v2144
  %v2373 = vpop.f32.mrb[0].mxu0
  %v2374 = vadd.f32 %v2074, %v2373
  %v2375 = vpop.f32.mrb[0].mxu0
  %v2376 = vpop.f32.mrb[0].mxu0
  %v2377 = vadd.f32 %v2074, %v2376
  %v2378 = vpop.f32.mrb[0].mxu0
  %2379 = vmatprep.mubr.bf16.mxu0 0
  %2380 = vmatmul.mubr.bf16.gmra.mrb[0].mxu0 %v2147
  %v2381 = vpop.f32.mrb[0].mxu0
  %v2382 = vadd.f32 %v2074, %v2381
  %v2383 = vpop.f32.mrb[0].mxu0
  %v2384 = vpop.f32.mrb[0].mxu0
  %v2385 = vadd.f32 %v2074, %v2384
  %v2386 = vpop.f32.mrb[0].mxu0
  %2387 = vmatprep.mubr.bf16.mxu0 0
  %2388 = vmatmul.mubr.bf16.gmra.mrb[0].mxu0 %v2150
  %v2389 = vpop.f32.mrb[0].mxu0
  %v2390 = vadd.f32 %v2074, %v2389
  %v2391 = vpop.f32.mrb[0].mxu0
  %v2392 = vpop.f32.mrb[0].mxu0
  %v2393 = vadd.f32 %v2074, %v2392
  %v2394 = vpop.f32.mrb[0].mxu0
  %2395 = vmatprep.mubr.bf16.mxu0 0
  %2396 = vmatmul.mubr.bf16.gmra.mrb[0].mxu0 %v2153
  %v2397 = vpop.f32.mrb[0].mxu0
  %v2398 = vadd.f32 %v2074, %v2397
  %v2399 = vpop.f32.mrb[0].mxu0
  %v2400 = vpop.f32.mrb[0].mxu0
  %v2401 = vadd.f32 %v2074, %v2400
  %v2402 = vpop.f32.mrb[0].mxu0
  %2403 = vmatprep.mubr.bf16.mxu0 0
  %2404 = vmatmul.mubr.bf16.gmra.mrb[0].mxu0 %v2156
  %v2405 = vpop.f32.mrb[0].mxu0
  %v2406 = vadd.f32 %v2074, %v2405
  %v2407 = vpop.f32.mrb[0].mxu0
  %v2408 = vpop.f32.mrb[0].mxu0
  %v2409 = vadd.f32 %v2074, %v2408
  %v2410 = vpop.f32.mrb[0].mxu0
  %2411 = vmatprep.mubr.bf16.mxu0 0
  %2412 = vmatmul.mubr.bf16.gmra.mrb[0].mxu0 %v2159
  %v2413 = vpop.f32.mrb[0].mxu0
  %v2414 = vadd.f32 %v2074, %v2413
  %v2415 = vpop.f32.mrb[0].mxu0
  %v2416 = vpop.f32.mrb[0].mxu0
  %v2417 = vadd.f32 %v2074, %v2416
  %v2418 = vpop.f32.mrb[0].mxu0
  %2419 = vmatprep.mubr.bf16.mxu0 0
  %2420 = vmatmul.mubr.bf16.gmra.mrb[0].mxu0 %v2162
  %v2421 = vpop.f32.mrb[0].mxu0
  %v2422 = vadd.f32 %v2074, %v2421
  %v2423 = vpop.f32.mrb[0].mxu0
  %v2424 = vpop.f32.mrb[0].mxu0
  %v2425 = vadd.f32 %v2074, %v2424
  %v2426 = vpop.f32.mrb[0].mxu0
  %2427 = vmatprep.mubr.bf16.mxu0 0
  %2428 = vmatmul.mubr.bf16.gmra.mrb[0].mxu0 %v2165
  %v2429 = vpop.f32.mrb[0].mxu0
  %v2430 = vadd.f32 %v2074, %v2429
  %v2431 = vpop.f32.mrb[0].mxu0
  %v2432 = vpop.f32.mrb[0].mxu0
  %v2433 = vadd.f32 %v2074, %v2432
  %v2434 = vpop.f32.mrb[0].mxu0
  %2435 = vmatprep.mubr.bf16.mxu0 0
  %2436 = vmatmul.mubr.bf16.gmra.mrb[0].mxu0 %v2168
  %v2437 = vpop.f32.mrb[0].mxu0
  %v2438 = vadd.f32 %v2074, %v2437
  %v2439 = vpop.f32.mrb[0].mxu0
  %v2440 = vpop.f32.mrb[0].mxu0
  %v2441 = vadd.f32 %v2074, %v2440
  %v2442 = vpop.f32.mrb[0].mxu0
  %2443 = vmatprep.mubr.bf16.mxu0 0
  %2444 = vmatmul.mubr.bf16.gmra.mrb[0].mxu0 %v2171
  %v2445 = vpop.f32.mrb[0].mxu0
  %v2446 = vadd.f32 %v2074, %v2445
  %v2447 = vpop.f32.mrb[0].mxu0
  %v2448 = vpop.f32.mrb[0].mxu0
  %v2449 = vadd.f32 %v2074, %v2448
  %v2450 = vpop.f32.mrb[0].mxu0
  %2451 = vmatprep.mubr.bf16.mxu0 0
  %2452 = vmatmul.mubr.bf16.gmra.mrb[0].mxu0 %v2174
  %v2453 = vpop.f32.mrb[0].mxu0
  %v2454 = vadd.f32 %v2074, %v2453
  %v2455 = vpop.f32.mrb[0].mxu0
  %v2456 = vpop.f32.mrb[0].mxu0
  %v2457 = vadd.f32 %v2074, %v2456
  %v2458 = vpop.f32.mrb[0].mxu0
  %2459 = vmatprep.mubr.bf16.mxu0 0
  %2460 = vmatmul.mubr.bf16.gmra.mrb[0].mxu0 %v2177
  %v2461 = vpop.f32.mrb[0].mxu0
  %v2462 = vadd.f32 %v2074, %v2461
  %v2463 = vpop.f32.mrb[0].mxu0
  %v2464 = vpop.f32.mrb[0].mxu0
  %v2465 = vadd.f32 %v2074, %v2464
  %v2466 = vpop.f32.mrb[0].mxu0
  %2467 = vdwg.mxu0
  %v2468 = vsub.f32 0.0, %v2214
  %v2469 = vsub.f32 0.0, %v2217
  %v2470 = vsub.f32 0.0, %v2222
  %v2471 = vsub.f32 0.0, %v2225
  %v2472 = vsub.f32 0.0, %v2230
  %v2473 = vsub.f32 0.0, %v2233
  %v2474 = vsub.f32 0.0, %v2238
  %v2475 = vsub.f32 0.0, %v2241
  %v2476 = vsub.f32 0.0, %v2246
  %v2477 = vsub.f32 0.0, %v2249
  %v2478 = vsub.f32 0.0, %v2254
  %v2479 = vsub.f32 0.0, %v2257
  %v2480 = vsub.f32 0.0, %v2262
  %v2481 = vsub.f32 0.0, %v2265
  %v2482 = vsub.f32 0.0, %v2270
  %v2483 = vsub.f32 0.0, %v2273
  %v2484 = vsub.f32 0.0, %v2278
  %v2485 = vsub.f32 0.0, %v2281
  %v2486 = vsub.f32 0.0, %v2286
  %v2487 = vsub.f32 0.0, %v2289
  %v2488 = vsub.f32 0.0, %v2294
  %v2489 = vsub.f32 0.0, %v2297
  %v2490 = vsub.f32 0.0, %v2302
  %v2491 = vsub.f32 0.0, %v2305
  %v2492 = vsub.f32 0.0, %v2310
  %v2493 = vsub.f32 0.0, %v2313
  %v2494 = vsub.f32 0.0, %v2318
  %v2495 = vsub.f32 0.0, %v2321
  %v2496 = vsub.f32 0.0, %v2326
  %v2497 = vsub.f32 0.0, %v2329
  %v2498 = vsub.f32 0.0, %v2334
  %v2499 = vsub.f32 0.0, %v2337
  %v2500 = vsub.f32 0.0, %v2342
  %v2501 = vsub.f32 0.0, %v2345
  %v2502 = vsub.f32 0.0, %v2350
  %v2503 = vsub.f32 0.0, %v2353
  %v2504 = vsub.f32 0.0, %v2358
  %v2505 = vsub.f32 0.0, %v2361
  %v2506 = vsub.f32 0.0, %v2366
  %v2507 = vsub.f32 0.0, %v2369
  %v2508 = vsub.f32 0.0, %v2374
  %v2509 = vsub.f32 0.0, %v2377
  %v2510 = vsub.f32 0.0, %v2382
  %v2511 = vsub.f32 0.0, %v2385
  %v2512 = vsub.f32 0.0, %v2390
  %v2513 = vsub.f32 0.0, %v2393
  %v2514 = vsub.f32 0.0, %v2398
  %v2515 = vsub.f32 0.0, %v2401
  %v2516 = vsub.f32 0.0, %v2406
  %v2517 = vsub.f32 0.0, %v2409
  %v2518 = vsub.f32 0.0, %v2414
  %v2519 = vsub.f32 0.0, %v2417
  %v2520 = vsub.f32 0.0, %v2422
  %v2521 = vsub.f32 0.0, %v2425
  %v2522 = vsub.f32 0.0, %v2430
  %v2523 = vsub.f32 0.0, %v2433
  %v2524 = vsub.f32 0.0, %v2438
  %v2525 = vsub.f32 0.0, %v2441
  %v2526 = vsub.f32 0.0, %v2446
  %v2527 = vsub.f32 0.0, %v2449
  %v2528 = vsub.f32 0.0, %v2454
  %v2529 = vsub.f32 0.0, %v2457
  %v2530 = vsub.f32 0.0, %v2462
  %v2531 = vsub.f32 0.0, %v2465
  %v2532 = vmul.f32 %v2468, 1.442695
  %v2533 = vpow.pop %v2532
  %v2534 = vmul.f32 %v2469, 1.442695
  %v2535 = vpow.pop %v2534
  %v2536 = vmul.f32 %v2470, 1.442695
  %v2537 = vpow.pop %v2536
  %v2538 = vmul.f32 %v2471, 1.442695
  %v2539 = vpow.pop %v2538
  %v2540 = vmul.f32 %v2472, 1.442695
  %v2541 = vpow.pop %v2540
  %v2542 = vmul.f32 %v2473, 1.442695
  %v2543 = vpow.pop %v2542
  %v2544 = vmul.f32 %v2474, 1.442695
  %v2545 = vpow.pop %v2544
  %v2546 = vmul.f32 %v2475, 1.442695
  %v2547 = vpow.pop %v2546
  %v2548 = vmul.f32 %v2476, 1.442695
  %v2549 = vpow.pop %v2548
  %v2550 = vmul.f32 %v2477, 1.442695
  %v2551 = vpow.pop %v2550
  %v2552 = vmul.f32 %v2478, 1.442695
  %v2553 = vpow.pop %v2552
  %v2554 = vmul.f32 %v2479, 1.442695
  %v2555 = vpow.pop %v2554
  %v2556 = vmul.f32 %v2480, 1.442695
  %v2557 = vpow.pop %v2556
  %v2558 = vmul.f32 %v2481, 1.442695
  %v2559 = vpow.pop %v2558
  %v2560 = vmul.f32 %v2482, 1.442695
  %v2561 = vpow.pop %v2560
  %v2562 = vmul.f32 %v2483, 1.442695
  %v2563 = vpow.pop %v2562
  %v2564 = vmul.f32 %v2484, 1.442695
  %v2565 = vpow.pop %v2564
  %v2566 = vmul.f32 %v2485, 1.442695
  %v2567 = vpow.pop %v2566
  %v2568 = vmul.f32 %v2486, 1.442695
  %v2569 = vpow.pop %v2568
  %v2570 = vmul.f32 %v2487, 1.442695
  %v2571 = vpow.pop %v2570
  %v2572 = vmul.f32 %v2488, 1.442695
  %v2573 = vpow.pop %v2572
  %v2574 = vmul.f32 %v2489, 1.442695
  %v2575 = vpow.pop %v2574
  %v2576 = vmul.f32 %v2490, 1.442695
  %v2577 = vpow.pop %v2576
  %v2578 = vmul.f32 %v2491, 1.442695
  %v2579 = vpow.pop %v2578
  %v2580 = vmul.f32 %v2492, 1.442695
  %v2581 = vpow.pop %v2580
  %v2582 = vmul.f32 %v2493, 1.442695
  %v2583 = vpow.pop %v2582
  %v2584 = vmul.f32 %v2494, 1.442695
  %v2585 = vpow.pop %v2584
  %v2586 = vmul.f32 %v2495, 1.442695
  %v2587 = vpow.pop %v2586
  %v2588 = vmul.f32 %v2496, 1.442695
  %v2589 = vpow.pop %v2588
  %v2590 = vmul.f32 %v2497, 1.442695
  %v2591 = vpow.pop %v2590
  %v2592 = vmul.f32 %v2498, 1.442695
  %v2593 = vpow.pop %v2592
  %v2594 = vmul.f32 %v2499, 1.442695
  %v2595 = vpow.pop %v2594
  %v2596 = vmul.f32 %v2500, 1.442695
  %v2597 = vpow.pop %v2596
  %v2598 = vmul.f32 %v2501, 1.442695
  %v2599 = vpow.pop %v2598
  %v2600 = vmul.f32 %v2502, 1.442695
  %v2601 = vpow.pop %v2600
  %v2602 = vmul.f32 %v2503, 1.442695
  %v2603 = vpow.pop %v2602
  %v2604 = vmul.f32 %v2504, 1.442695
  %v2605 = vpow.pop %v2604
  %v2606 = vmul.f32 %v2505, 1.442695
  %v2607 = vpow.pop %v2606
  %v2608 = vmul.f32 %v2506, 1.442695
  %v2609 = vpow.pop %v2608
  %v2610 = vmul.f32 %v2507, 1.442695
  %v2611 = vpow.pop %v2610
  %v2612 = vmul.f32 %v2508, 1.442695
  %v2613 = vpow.pop %v2612
  %v2614 = vmul.f32 %v2509, 1.442695
  %v2615 = vpow.pop %v2614
  %v2616 = vmul.f32 %v2510, 1.442695
  %v2617 = vpow.pop %v2616
  %v2618 = vmul.f32 %v2511, 1.442695
  %v2619 = vpow.pop %v2618
  %v2620 = vmul.f32 %v2512, 1.442695
  %v2621 = vpow.pop %v2620
  %v2622 = vmul.f32 %v2513, 1.442695
  %v2623 = vpow.pop %v2622
  %v2624 = vmul.f32 %v2514, 1.442695
  %v2625 = vpow.pop %v2624
  %v2626 = vmul.f32 %v2515, 1.442695
  %v2627 = vpow.pop %v2626
  %v2628 = vmul.f32 %v2516, 1.442695
  %v2629 = vpow.pop %v2628
  %v2630 = vmul.f32 %v2517, 1.442695
  %v2631 = vpow.pop %v2630
  %v2632 = vmul.f32 %v2518, 1.442695
  %v2633 = vpow.pop %v2632
  %v2634 = vmul.f32 %v2519, 1.442695
  %v2635 = vpow.pop %v2634
  %v2636 = vmul.f32 %v2520, 1.442695
  %v2637 = vpow.pop %v2636
  %v2638 = vmul.f32 %v2521, 1.442695
  %v2639 = vpow.pop %v2638
  %v2640 = vmul.f32 %v2522, 1.442695
  %v2641 = vpow.pop %v2640
  %v2642 = vmul.f32 %v2523, 1.442695
  %v2643 = vpow.pop %v2642
  %v2644 = vmul.f32 %v2524, 1.442695
  %v2645 = vpow.pop %v2644
  %v2646 = vmul.f32 %v2525, 1.442695
  %v2647 = vpow.pop %v2646
  %v2648 = vmul.f32 %v2526, 1.442695
  %v2649 = vpow.pop %v2648
  %v2650 = vmul.f32 %v2527, 1.442695
  %v2651 = vpow.pop %v2650
  %v2652 = vmul.f32 %v2528, 1.442695
  %v2653 = vpow.pop %v2652
  %v2654 = vmul.f32 %v2529, 1.442695
  %v2655 = vpow.pop %v2654
  %v2656 = vmul.f32 %v2530, 1.442695
  %v2657 = vpow.pop %v2656
  %v2658 = vmul.f32 %v2531, 1.442695
  %v2659 = vpow.pop %v2658
  %v2660 = vadd.f32 %v2533, 1.0
  %v2661 = vadd.f32 %v2535, 1.0
  %v2662 = vadd.f32 %v2537, 1.0
  %v2663 = vadd.f32 %v2539, 1.0
  %v2664 = vadd.f32 %v2541, 1.0
  %v2665 = vadd.f32 %v2543, 1.0
  %v2666 = vadd.f32 %v2545, 1.0
  %v2667 = vadd.f32 %v2547, 1.0
  %v2668 = vadd.f32 %v2549, 1.0
  %v2669 = vadd.f32 %v2551, 1.0
  %v2670 = vadd.f32 %v2553, 1.0
  %v2671 = vadd.f32 %v2555, 1.0
  %v2672 = vadd.f32 %v2557, 1.0
  %v2673 = vadd.f32 %v2559, 1.0
  %v2674 = vadd.f32 %v2561, 1.0
  %v2675 = vadd.f32 %v2563, 1.0
  %v2676 = vadd.f32 %v2565, 1.0
  %v2677 = vadd.f32 %v2567, 1.0
  %v2678 = vadd.f32 %v2569, 1.0
  %v2679 = vadd.f32 %v2571, 1.0
  %v2680 = vadd.f32 %v2573, 1.0
  %v2681 = vadd.f32 %v2575, 1.0
  %v2682 = vadd.f32 %v2577, 1.0
  %v2683 = vadd.f32 %v2579, 1.0
  %v2684 = vadd.f32 %v2581, 1.0
  %v2685 = vadd.f32 %v2583, 1.0
  %v2686 = vadd.f32 %v2585, 1.0
  %v2687 = vadd.f32 %v2587, 1.0
  %v2688 = vadd.f32 %v2589, 1.0
  %v2689 = vadd.f32 %v2591, 1.0
  %v2690 = vadd.f32 %v2593, 1.0
  %v2691 = vadd.f32 %v2595, 1.0
  %v2692 = vadd.f32 %v2597, 1.0
  %v2693 = vadd.f32 %v2599, 1.0
  %v2694 = vadd.f32 %v2601, 1.0
  %v2695 = vadd.f32 %v2603, 1.0
  %v2696 = vadd.f32 %v2605, 1.0
  %v2697 = vadd.f32 %v2607, 1.0
  %v2698 = vadd.f32 %v2609, 1.0
  %v2699 = vadd.f32 %v2611, 1.0
  %v2700 = vadd.f32 %v2613, 1.0
  %v2701 = vadd.f32 %v2615, 1.0
  %v2702 = vadd.f32 %v2617, 1.0
  %v2703 = vadd.f32 %v2619, 1.0
  %v2704 = vadd.f32 %v2621, 1.0
  %v2705 = vadd.f32 %v2623, 1.0
  %v2706 = vadd.f32 %v2625, 1.0
  %v2707 = vadd.f32 %v2627, 1.0
  %v2708 = vadd.f32 %v2629, 1.0
  %v2709 = vadd.f32 %v2631, 1.0
  %v2710 = vadd.f32 %v2633, 1.0
  %v2711 = vadd.f32 %v2635, 1.0
  %v2712 = vadd.f32 %v2637, 1.0
  %v2713 = vadd.f32 %v2639, 1.0
  %v2714 = vadd.f32 %v2641, 1.0
  %v2715 = vadd.f32 %v2643, 1.0
  %v2716 = vadd.f32 %v2645, 1.0
  %v2717 = vadd.f32 %v2647, 1.0
  %v2718 = vadd.f32 %v2649, 1.0
  %v2719 = vadd.f32 %v2651, 1.0
  %v2720 = vadd.f32 %v2653, 1.0
  %v2721 = vadd.f32 %v2655, 1.0
  %v2722 = vadd.f32 %v2657, 1.0
  %v2723 = vadd.f32 %v2659, 1.0
  %v2724 = vrcp.pop %v2660
  %v2725 = vrcp.pop %v2661
  %v2726 = vrcp.pop %v2662
  %v2727 = vrcp.pop %v2663
  %v2728 = vrcp.pop %v2664
  %v2729 = vrcp.pop %v2665
  %v2730 = vrcp.pop %v2666
  %v2731 = vrcp.pop %v2667
  %v2732 = vrcp.pop %v2668
  %v2733 = vrcp.pop %v2669
  %v2734 = vrcp.pop %v2670
  %v2735 = vrcp.pop %v2671
  %v2736 = vrcp.pop %v2672
  %v2737 = vrcp.pop %v2673
  %v2738 = vrcp.pop %v2674
  %v2739 = vrcp.pop %v2675
  %v2740 = vrcp.pop %v2676
  %v2741 = vrcp.pop %v2677
  %v2742 = vrcp.pop %v2678
  %v2743 = vrcp.pop %v2679
  %v2744 = vrcp.pop %v2680
  %v2745 = vrcp.pop %v2681
  %v2746 = vrcp.pop %v2682
  %v2747 = vrcp.pop %v2683
  %v2748 = vrcp.pop %v2684
  %v2749 = vrcp.pop %v2685
  %v2750 = vrcp.pop %v2686
  %v2751 = vrcp.pop %v2687
  %v2752 = vrcp.pop %v2688
  %v2753 = vrcp.pop %v2689
  %v2754 = vrcp.pop %v2690
  %v2755 = vrcp.pop %v2691
  %v2756 = vrcp.pop %v2692
  %v2757 = vrcp.pop %v2693
  %v2758 = vrcp.pop %v2694
  %v2759 = vrcp.pop %v2695
  %v2760 = vrcp.pop %v2696
  %v2761 = vrcp.pop %v2697
  %v2762 = vrcp.pop %v2698
  %v2763 = vrcp.pop %v2699
  %v2764 = vrcp.pop %v2700
  %v2765 = vrcp.pop %v2701
  %v2766 = vrcp.pop %v2702
  %v2767 = vrcp.pop %v2703
  %v2768 = vrcp.pop %v2704
  %v2769 = vrcp.pop %v2705
  %v2770 = vrcp.pop %v2706
  %v2771 = vrcp.pop %v2707
  %v2772 = vrcp.pop %v2708
  %v2773 = vrcp.pop %v2709
  %v2774 = vrcp.pop %v2710
  %v2775 = vrcp.pop %v2711
  %v2776 = vrcp.pop %v2712
  %v2777 = vrcp.pop %v2713
  %v2778 = vrcp.pop %v2714
  %v2779 = vrcp.pop %v2715
  %v2780 = vrcp.pop %v2716
  %v2781 = vrcp.pop %v2717
  %v2782 = vrcp.pop %v2718
  %v2783 = vrcp.pop %v2719
  %v2784 = vrcp.pop %v2720
  %v2785 = vrcp.pop %v2721
  %v2786 = vrcp.pop %v2722
  %v2787 = vrcp.pop %v2723
  %vm2788 = vcmask 7168
  %2789 = vst.msk [vmem:[%s11] sm:$0xff] %vm2788, %v2724
  %2790 = vst.msk [vmem:[%s11 + $0x8] sm:$0xff] %vm2788, %v2725
  %2791 = vst.msk [vmem:[%s11 + $0x10] sm:$0xff] %vm2788, %v2726
  %2792 = vst.msk [vmem:[%s11 + $0x18] sm:$0xff] %vm2788, %v2727
  %2793 = vst.msk [vmem:[%s11 + $0x20] sm:$0xff] %vm2788, %v2728
  %2794 = vst.msk [vmem:[%s11 + $0x28] sm:$0xff] %vm2788, %v2729
  %2795 = vst.msk [vmem:[%s11 + $0x30] sm:$0xff] %vm2788, %v2730
  %2796 = vst.msk [vmem:[%s11 + $0x38] sm:$0xff] %vm2788, %v2731
  %2797 = vst.msk [vmem:[%s11 + $0x40] sm:$0xff] %vm2788, %v2732
  %2798 = vst.msk [vmem:[%s11 + $0x48] sm:$0xff] %vm2788, %v2733
  %2799 = vst.msk [vmem:[%s11 + $0x50] sm:$0xff] %vm2788, %v2734
  %2800 = vst.msk [vmem:[%s11 + $0x58] sm:$0xff] %vm2788, %v2735
  %2801 = vst.msk [vmem:[%s11 + $0x60] sm:$0xff] %vm2788, %v2736
  %2802 = vst.msk [vmem:[%s11 + $0x68] sm:$0xff] %vm2788, %v2737
  %2803 = vst.msk [vmem:[%s11 + $0x70] sm:$0xff] %vm2788, %v2738
  %2804 = vst.msk [vmem:[%s11 + $0x78] sm:$0xff] %vm2788, %v2739
  %2805 = vst.msk [vmem:[%s11 + $0x80] sm:$0xff] %vm2788, %v2740
  %2806 = vst.msk [vmem:[%s11 + $0x88] sm:$0xff] %vm2788, %v2741
  %2807 = vst.msk [vmem:[%s11 + $0x90] sm:$0xff] %vm2788, %v2742
  %2808 = vst.msk [vmem:[%s11 + $0x98] sm:$0xff] %vm2788, %v2743
  %2809 = vst.msk [vmem:[%s11 + $0xa0] sm:$0xff] %vm2788, %v2744
  %2810 = vst.msk [vmem:[%s11 + $0xa8] sm:$0xff] %vm2788, %v2745
  %2811 = vst.msk [vmem:[%s11 + $0xb0] sm:$0xff] %vm2788, %v2746
  %2812 = vst.msk [vmem:[%s11 + $0xb8] sm:$0xff] %vm2788, %v2747
  %2813 = vst.msk [vmem:[%s11 + $0xc0] sm:$0xff] %vm2788, %v2748
  %2814 = vst.msk [vmem:[%s11 + $0xc8] sm:$0xff] %vm2788, %v2749
  %2815 = vst.msk [vmem:[%s11 + $0xd0] sm:$0xff] %vm2788, %v2750
  %2816 = vst.msk [vmem:[%s11 + $0xd8] sm:$0xff] %vm2788, %v2751
  %2817 = vst.msk [vmem:[%s11 + $0xe0] sm:$0xff] %vm2788, %v2752
  %2818 = vst.msk [vmem:[%s11 + $0xe8] sm:$0xff] %vm2788, %v2753
  %2819 = vst.msk [vmem:[%s11 + $0xf0] sm:$0xff] %vm2788, %v2754
  %2820 = vst.msk [vmem:[%s11 + $0xf8] sm:$0xff] %vm2788, %v2755
  %2821 = vst.msk [vmem:[%s11 + $0x100] sm:$0xff] %vm2788, %v2756
  %2822 = vst.msk [vmem:[%s11 + $0x108] sm:$0xff] %vm2788, %v2757
  %2823 = vst.msk [vmem:[%s11 + $0x110] sm:$0xff] %vm2788, %v2758
  %2824 = vst.msk [vmem:[%s11 + $0x118] sm:$0xff] %vm2788, %v2759
  %2825 = vst.msk [vmem:[%s11 + $0x120] sm:$0xff] %vm2788, %v2760
  %2826 = vst.msk [vmem:[%s11 + $0x128] sm:$0xff] %vm2788, %v2761
  %2827 = vst.msk [vmem:[%s11 + $0x130] sm:$0xff] %vm2788, %v2762
  %2828 = vst.msk [vmem:[%s11 + $0x138] sm:$0xff] %vm2788, %v2763
  %2829 = vst.msk [vmem:[%s11 + $0x140] sm:$0xff] %vm2788, %v2764
  %2830 = vst.msk [vmem:[%s11 + $0x148] sm:$0xff] %vm2788, %v2765
  %2831 = vst.msk [vmem:[%s11 + $0x150] sm:$0xff] %vm2788, %v2766
  %2832 = vst.msk [vmem:[%s11 + $0x158] sm:$0xff] %vm2788, %v2767
  %2833 = vst.msk [vmem:[%s11 + $0x160] sm:$0xff] %vm2788, %v2768
  %2834 = vst.msk [vmem:[%s11 + $0x168] sm:$0xff] %vm2788, %v2769
  %2835 = vst.msk [vmem:[%s11 + $0x170] sm:$0xff] %vm2788, %v2770
  %2836 = vst.msk [vmem:[%s11 + $0x178] sm:$0xff] %vm2788, %v2771
  %2837 = vst.msk [vmem:[%s11 + $0x180] sm:$0xff] %vm2788, %v2772
  %2838 = vst.msk [vmem:[%s11 + $0x188] sm:$0xff] %vm2788, %v2773
  %2839 = vst.msk [vmem:[%s11 + $0x190] sm:$0xff] %vm2788, %v2774
  %2840 = vst.msk [vmem:[%s11 + $0x198] sm:$0xff] %vm2788, %v2775
  %2841 = vst.msk [vmem:[%s11 + $0x1a0] sm:$0xff] %vm2788, %v2776
  %2842 = vst.msk [vmem:[%s11 + $0x1a8] sm:$0xff] %vm2788, %v2777
  %2843 = vst.msk [vmem:[%s11 + $0x1b0] sm:$0xff] %vm2788, %v2778
  %2844 = vst.msk [vmem:[%s11 + $0x1b8] sm:$0xff] %vm2788, %v2779
  %2845 = vst.msk [vmem:[%s11 + $0x1c0] sm:$0xff] %vm2788, %v2780
  %2846 = vst.msk [vmem:[%s11 + $0x1c8] sm:$0xff] %vm2788, %v2781
  %2847 = vst.msk [vmem:[%s11 + $0x1d0] sm:$0xff] %vm2788, %v2782
  %2848 = vst.msk [vmem:[%s11 + $0x1d8] sm:$0xff] %vm2788, %v2783
  %2849 = vst.msk [vmem:[%s11 + $0x1e0] sm:$0xff] %vm2788, %v2784
  %2850 = vst.msk [vmem:[%s11 + $0x1e8] sm:$0xff] %vm2788, %v2785
  %2851 = vst.msk [vmem:[%s11 + $0x1f0] sm:$0xff] %vm2788, %v2786
  %2852 = vst.msk [vmem:[%s11 + $0x1f8] sm:$0xff] %vm2788, %v2787
  %v2853 = vld [vmem:[%s9] sm:$0xf]
  %v2856 = vunpack.c.l.s4 1966171168
  %v2857 = vunpack.c.0.s8 %v2856
  %v2858 = vlaneseq
  %v2859 = vshrl.u32 %v2858, 7
  %v2860 = vsub.s32 %v2857, %v2859
  %v2861 = vrot.slane %v2853, %v2860
  %v2862 = vcombine.high %v2861, %v2861
  %v2864 = vunpack.c.l.s4 1966171168
  %v2865 = vunpack.c.0.s8 %v2864
  %v2866 = vlaneseq
  %v2867 = vshrl.u32 %v2866, 7
  %v2868 = vsub.s32 %v2865, %v2867
  %v2869 = vrot.slane %v2861, %v2868
  %v2871 = vunpack.c.l.s4 1966171168
  %v2872 = vunpack.c.0.s8 %v2871
  %v2873 = vlaneseq
  %v2874 = vshrl.u32 %v2873, 7
  %v2875 = vsub.s32 %v2872, %v2874
  %v2876 = vrot.slane %v2862, %v2875
  %v2877 = vcombine.high %v2869, %v2869
  %v2878 = vcombine.high %v2876, %v2876
  %2883 = vmatprep.subr.bf16.mxu0 0
  %2884 = vmatpush1.bf16.msra.mxu0 %v2035
  %2885 = vmatprep.subr.bf16.mxu0 0
  %2886 = vmatpush1.bf16.msra.mxu0 %v2036
  %2887 = vmatprep.subr.bf16.mxu0 0
  %2888 = vmatpush1.bf16.msra.mxu0 %v2037
  %2889 = vmatprep.subr.bf16.mxu0 0
  %2890 = vmatpush1.bf16.msra.mxu0 %v2038
  %2891 = vmatprep.subr.bf16.mxu0 0
  %2892 = vmatpush1.bf16.msra.mxu0 %v2039
  %2893 = vmatprep.subr.bf16.mxu0 0
  %2894 = vmatpush1.bf16.msra.mxu0 %v2040
  %2895 = vmatprep.subr.bf16.mxu0 0
  %2896 = vmatpush1.bf16.msra.mxu0 %v2041
  %2897 = vmatprep.subr.bf16.mxu0 0
  %2898 = vmatpush1.bf16.msra.mxu0 %v2042
  %2899 = vmatprep.subr.bf16.mxu0 0
  %2900 = vmatpush1.bf16.msra.mxu0 %v2043
  %2901 = vmatprep.subr.bf16.mxu0 0
  %2902 = vmatpush1.bf16.msra.mxu0 %v2044
  %2903 = vmatprep.subr.bf16.mxu0 0
  %2904 = vmatpush1.bf16.msra.mxu0 %v2045
  %2905 = vmatprep.subr.bf16.mxu0 0
  %2906 = vmatpush1.bf16.msra.mxu0 %v2046
  %2907 = vmatprep.subr.bf16.mxu0 0
  %2908 = vmatpush1.bf16.msra.mxu0 %v2047
  %2909 = vmatprep.subr.bf16.mxu0 0
  %2910 = vmatpush1.bf16.msra.mxu0 %v2048
  %2911 = vmatprep.subr.bf16.mxu0 0
  %2912 = vmatpush1.bf16.msra.mxu0 %v2049
  %2913 = vmatprep.subr.bf16.mxu0 0
  %2914 = vmatpush1.bf16.msra.mxu0 %v2050
  %2915 = vmatprep.mubr.bf16.mxu0 %v2876
  %2916 = vmatmul.mubr.bf16.gmra.mrb[0].mxu0 %v2869
  %v2917 = vpop.f32.mrb[0].mxu0
  %v2918 = vadd.f32 0.0, %v2917
  %v2919 = vpop.f32.mrb[0].mxu0
  %v2920 = vpop.f32.mrb[0].mxu0
  %v2921 = vpop.f32.mrb[0].mxu0
  %2922 = vdwg.mxu0
  %2923 = vmatprep.subr.bf16.mxu0 0
  %2924 = vmatpush1.bf16.msra.mxu0 %v2051
  %2925 = vmatprep.subr.bf16.mxu0 0
  %2926 = vmatpush1.bf16.msra.mxu0 %v2052
  %2927 = vmatprep.subr.bf16.mxu0 0
  %2928 = vmatpush1.bf16.msra.mxu0 %v2053
  %2929 = vmatprep.subr.bf16.mxu0 0
  %2930 = vmatpush1.bf16.msra.mxu0 %v2054
  %2931 = vmatprep.subr.bf16.mxu0 0
  %2932 = vmatpush1.bf16.msra.mxu0 %v2055
  %2933 = vmatprep.subr.bf16.mxu0 0
  %2934 = vmatpush1.bf16.msra.mxu0 %v2056
  %2935 = vmatprep.subr.bf16.mxu0 0
  %2936 = vmatpush1.bf16.msra.mxu0 %v2057
  %2937 = vmatprep.subr.bf16.mxu0 0
  %2938 = vmatpush1.bf16.msra.mxu0 %v2058
  %2939 = vmatprep.subr.bf16.mxu0 0
  %2940 = vmatpush1.bf16.msra.mxu0 %v2059
  %2941 = vmatprep.subr.bf16.mxu0 0
  %2942 = vmatpush1.bf16.msra.mxu0 %v2060
  %2943 = vmatprep.subr.bf16.mxu0 0
  %2944 = vmatpush1.bf16.msra.mxu0 %v2061
  %2945 = vmatprep.subr.bf16.mxu0 0
  %2946 = vmatpush1.bf16.msra.mxu0 %v2062
  %2947 = vmatprep.subr.bf16.mxu0 0
  %2948 = vmatpush1.bf16.msra.mxu0 %v2063
  %2949 = vmatprep.subr.bf16.mxu0 0
  %2950 = vmatpush1.bf16.msra.mxu0 %v2064
  %2951 = vmatprep.subr.bf16.mxu0 0
  %2952 = vmatpush1.bf16.msra.mxu0 %v2065
  %2953 = vmatprep.subr.bf16.mxu0 0
  %2954 = vmatpush1.bf16.msra.mxu0 %v2066
  %2955 = vmatprep.mubr.bf16.mxu0 %v2878
  %2956 = vmatmul.mubr.bf16.gmra.mrb[0].mxu0 %v2877
  %v2957 = vpop.f32.mrb[0].mxu0
  %v2958 = vadd.f32 %v2918, %v2957
  %v2959 = vpop.f32.mrb[0].mxu0
  %v2960 = vpop.f32.mrb[0].mxu0
  %v2961 = vpop.f32.mrb[0].mxu0
  %2962 = vdwg.mxu0
  %v2963 = vpack.c.bf16 %v2958, %v2958
  %vm2964 = vcmask 122880
  %2965 = vst.msk [vmem:[%s12] sm:$0x1] %vm2964, %v2963
  // Predicated region
  $region42: #{faster_rcnn_forward.4} parent=0 // pred_check
    _
  $region43: #{faster_rcnn_forward.4} parent=0 // pred_check_branch
    %2967 = sbr.rel (0) target = $region45
  $region44: #{faster_rcnn_forward.4} parent=0 // pred_region
    _
  $region45: #{faster_rcnn_forward.4} parent=0 // pred_fallthru
    _
  // Predicated region
  $region46: #{faster_rcnn_forward.4} parent=0 // pred_check
    _
  $region47: #{faster_rcnn_forward.4} parent=0 // pred_check_branch
    %2969 = sbr.rel (0) target = $region49
  $region48: #{faster_rcnn_forward.4} parent=0 // pred_region
    _
  $region49: #{faster_rcnn_forward.4} parent=0 // pred_fallthru
    _
  // Predicated region
  $region50: #{faster_rcnn_forward.4} parent=0 // pred_check
    _
  $region51: #{faster_rcnn_forward.4} parent=0 // pred_check_branch
    %2971 = sbr.rel (0) target = $region53
  $region52: #{faster_rcnn_forward.4} parent=0 // pred_region
    _
  $region53: #{faster_rcnn_forward.4} parent=0 // pred_fallthru
    _
  // Predicated region
  $region54: #{faster_rcnn_forward.4} parent=0 // pred_check
    _
  $region55: #{faster_rcnn_forward.4} parent=0 // pred_check_branch
    %2973 = sbr.rel (0) target = $region57
  $region56: #{faster_rcnn_forward.4} parent=0 // pred_region
    _
  $region57: #{faster_rcnn_forward.4} parent=0 // pred_fallthru
    _
  // Predicated region
  $region58: #{faster_rcnn_forward.4} parent=0 // pred_check
    _
  $region59: #{faster_rcnn_forward.4} parent=0 // pred_check_branch
    %2975 = sbr.rel (0) target = $region61
  $region60: #{faster_rcnn_forward.4} parent=0 // pred_region
    _
  $region61: #{faster_rcnn_forward.4} parent=0 // pred_fallthru
    _
  // Predicated region
  $region62: #{faster_rcnn_forward.4} parent=0 // pred_check
    _
  $region63: #{faster_rcnn_forward.4} parent=0 // pred_check_branch
    %2977 = sbr.rel (0) target = $region65
  $region64: #{faster_rcnn_forward.4} parent=0 // pred_region
    _
  $region65: #{faster_rcnn_forward.4} parent=0 // pred_fallthru
    _

// kernel: faster_rcnn_forward.5
$region0: #{faster_rcnn_forward.5}
  #allocation0 [shape = 'u32[]', space=smem, size = 0x4, offset = 0x4, fixed_abs, tag = 'smem constant byte address 0x4 - core index']
  #allocation1 [shape = 'u32[144,128]{1,0:T(1,128)}', space=vmem, size = 0x12000, scoped, tag = 'internal scratch']
  %s0 = inlined_call_operand.vmem [shape: bf16[128,288], index: 0, kind: input, shape index: {}]
  %s1 = inlined_call_operand.vmem [shape: bf16[288,32], index: 1, kind: input, shape index: {}]
  %s2 = inlined_call_operand.vmem [shape: f32[1,32], index: 2, kind: input, shape index: {}]
  %s3 = inlined_call_operand.vmem [shape: bf16[128,32], index: 3, kind: output, shape index: {}]
  %s4 = sld [smem:[#allocation0]]
  $region22: #{faster_rcnn_forward.5} parent=0
    _
  %s6 = ssub.s32 1, %s4
  %s7 = scalar_select 0, %s6, %s4
  // Predicated region
  $region2: #{faster_rcnn_forward.5} parent=0 // pred_check
    _
  $region3: #{faster_rcnn_forward.5} parent=0 // pred_check_branch
    %9 = sbr.rel (0) target = $region5
  $region4: #{faster_rcnn_forward.5} parent=0 // pred_region
    _
  $region5: #{faster_rcnn_forward.5} parent=0 // pred_fallthru
    _
  // Predicated region
  $region6: #{faster_rcnn_forward.5} parent=0 // pred_check
    _
  $region7: #{faster_rcnn_forward.5} parent=0 // pred_check_branch
    %11 = sbr.rel (0) target = $region9
  $region8: #{faster_rcnn_forward.5} parent=0 // pred_region
    _
  $region9: #{faster_rcnn_forward.5} parent=0 // pred_fallthru
    _
  // Predicated region
  $region10: #{faster_rcnn_forward.5} parent=0 // pred_check
    _
  $region11: #{faster_rcnn_forward.5} parent=0 // pred_check_branch
    %13 = sbr.rel (0) target = $region13
  $region12: #{faster_rcnn_forward.5} parent=0 // pred_region
    _
  $region13: #{faster_rcnn_forward.5} parent=0 // pred_fallthru
    _
  %v15 = vld [vmem:[%s0] sm:$0xff]
  %v16 = vld [vmem:[%s0 + $0x8] sm:$0xf]
  %v17 = vld [vmem:[%s0 + $0xc] sm:$0xff]
  %v18 = vld [vmem:[%s0 + $0x14] sm:$0xf]
  %v19 = vld [vmem:[%s0 + $0x18] sm:$0xff]
  %v20 = vld [vmem:[%s0 + $0x20] sm:$0xf]
  %v21 = vld [vmem:[%s0 + $0x24] sm:$0xff]
  %v22 = vld [vmem:[%s0 + $0x2c] sm:$0xf]
  %v23 = vld [vmem:[%s0 + $0x30] sm:$0xff]
  %v24 = vld [vmem:[%s0 + $0x38] sm:$0xf]
  %v25 = vld [vmem:[%s0 + $0x3c] sm:$0xff]
  %v26 = vld [vmem:[%s0 + $0x44] sm:$0xf]
  %v27 = vld [vmem:[%s0 + $0x48] sm:$0xff]
  %v28 = vld [vmem:[%s0 + $0x50] sm:$0xf]
  %v29 = vld [vmem:[%s0 + $0x54] sm:$0xff]
  %v30 = vld [vmem:[%s0 + $0x5c] sm:$0xf]
  %v31 = vld [vmem:[%s0 + $0x60] sm:$0xff]
  %v32 = vld [vmem:[%s0 + $0x68] sm:$0xf]
  %v33 = vld [vmem:[%s0 + $0x6c] sm:$0xff]
  %v34 = vld [vmem:[%s0 + $0x74] sm:$0xf]
  %v35 = vld [vmem:[%s0 + $0x78] sm:$0xff]
  %v36 = vld [vmem:[%s0 + $0x80] sm:$0xf]
  %v37 = vld [vmem:[%s0 + $0x84] sm:$0xff]
  %v38 = vld [vmem:[%s0 + $0x8c] sm:$0xf]
  %v39 = vld [vmem:[%s0 + $0x90] sm:$0xff]
  %v40 = vld [vmem:[%s0 + $0x98] sm:$0xf]
  %v41 = vld [vmem:[%s0 + $0x9c] sm:$0xff]
  %v42 = vld [vmem:[%s0 + $0xa4] sm:$0xf]
  %v43 = vld [vmem:[%s0 + $0xa8] sm:$0xff]
  %v44 = vld [vmem:[%s0 + $0xb0] sm:$0xf]
  %v45 = vld [vmem:[%s0 + $0xb4] sm:$0xff]
  %v46 = vld [vmem:[%s0 + $0xbc] sm:$0xf]
  %v47 = vld [vmem:[%s1] sm:$0xf]
  %v48 = vld [vmem:[%s1 + $0x4] sm:$0xf]
  %v49 = vld [vmem:[%s1 + $0x8] sm:$0xf]
  %v50 = vld [vmem:[%s1 + $0xc] sm:$0xf]
  %v51 = vld [vmem:[%s1 + $0x10] sm:$0xf]
  %v52 = vld [vmem:[%s1 + $0x14] sm:$0xf]
  %v53 = vld [vmem:[%s1 + $0x18] sm:$0xf]
  %v54 = vld [vmem:[%s1 + $0x1c] sm:$0xf]
  %v55 = vld [vmem:[%s1 + $0x20] sm:$0xf]
  %v56 = vld [vmem:[%s1 + $0x24] sm:$0xf]
  %v57 = vld [vmem:[%s1 + $0x28] sm:$0xf]
  %v58 = vld [vmem:[%s1 + $0x2c] sm:$0xf]
  %v59 = vld [vmem:[%s1 + $0x30] sm:$0xf]
  %v60 = vld [vmem:[%s1 + $0x34] sm:$0xf]
  %v61 = vld [vmem:[%s1 + $0x38] sm:$0xf]
  %v62 = vld [vmem:[%s1 + $0x3c] sm:$0xf]
  %v63 = vld [vmem:[%s1 + $0x40] sm:$0xf]
  %v64 = vld [vmem:[%s1 + $0x44] sm:$0xf]
  %v65 = vld [vmem:[%s1 + $0x48] sm:$0xf]
  %v66 = vld [vmem:[%s1 + $0x4c] sm:$0xf]
  %v67 = vld [vmem:[%s1 + $0x50] sm:$0xf]
  %v68 = vld [vmem:[%s1 + $0x54] sm:$0xf]
  %v69 = vld [vmem:[%s1 + $0x58] sm:$0xf]
  %v70 = vld [vmem:[%s1 + $0x5c] sm:$0xf]
  %v71 = vld [vmem:[%s1 + $0x60] sm:$0xf]
  %v72 = vld [vmem:[%s1 + $0x64] sm:$0xf]
  %v73 = vld [vmem:[%s1 + $0x68] sm:$0xf]
  %v74 = vld [vmem:[%s1 + $0x6c] sm:$0xf]
  %v75 = vld [vmem:[%s1 + $0x70] sm:$0xf]
  %v76 = vld [vmem:[%s1 + $0x74] sm:$0xf]
  %v77 = vld [vmem:[%s1 + $0x78] sm:$0xf]
  %v78 = vld [vmem:[%s1 + $0x7c] sm:$0xf]
  %v79 = vld [vmem:[%s1 + $0x80] sm:$0xf]
  %v80 = vld [vmem:[%s1 + $0x84] sm:$0xf]
  %v81 = vld [vmem:[%s1 + $0x88] sm:$0xf]
  %v82 = vld [vmem:[%s1 + $0x8c] sm:$0xf]
  %v83 = vld [vmem:[%s2] sm:$0x1]
  %v85 = vlaneseq
  %v86 = vshrl.u32 %v85, 7
  %v87 = vsub.s32 0, %v86
  %v88 = vrot.slane %v83, %v87
  %v122 = vunpack.c.l.b16 %v15
  %v123 = vunpack.c.h.b16 %v15
  %v124 = vunpack.c.l.b16 %v16
  %v125 = vunpack.c.l.b16 %v17
  %v126 = vunpack.c.h.b16 %v17
  %v127 = vunpack.c.l.b16 %v18
  %v128 = vunpack.c.l.b16 %v19
  %v129 = vunpack.c.h.b16 %v19
  %v130 = vunpack.c.l.b16 %v20
  %v131 = vunpack.c.l.b16 %v21
  %v132 = vunpack.c.h.b16 %v21
  %v133 = vunpack.c.l.b16 %v22
  %v134 = vunpack.c.l.b16 %v23
  %v135 = vunpack.c.h.b16 %v23
  %v136 = vunpack.c.l.b16 %v24
  %v137 = vunpack.c.l.b16 %v25
  %v138 = vunpack.c.h.b16 %v25
  %v139 = vunpack.c.l.b16 %v26
  %v140 = vunpack.c.l.b16 %v27
  %v141 = vunpack.c.h.b16 %v27
  %v142 = vunpack.c.l.b16 %v28
  %v143 = vunpack.c.l.b16 %v29
  %v144 = vunpack.c.h.b16 %v29
  %v145 = vunpack.c.l.b16 %v30
  %v146 = vunpack.c.l.b16 %v31
  %v147 = vunpack.c.h.b16 %v31
  %v148 = vunpack.c.l.b16 %v32
  %v149 = vunpack.c.l.b16 %v33
  %v150 = vunpack.c.h.b16 %v33
  %v151 = vunpack.c.l.b16 %v34
  %v152 = vunpack.c.l.b16 %v35
  %v153 = vunpack.c.h.b16 %v35
  %v154 = vunpack.c.l.b16 %v36
  %v155 = vunpack.c.l.b16 %v37
  %v156 = vunpack.c.h.b16 %v37
  %v157 = vunpack.c.l.b16 %v38
  %v158 = vunpack.c.l.b16 %v39
  %v159 = vunpack.c.h.b16 %v39
  %v160 = vunpack.c.l.b16 %v40
  %v161 = vunpack.c.l.b16 %v41
  %v162 = vunpack.c.h.b16 %v41
  %v163 = vunpack.c.l.b16 %v42
  %v164 = vunpack.c.l.b16 %v43
  %v165 = vunpack.c.h.b16 %v43
  %v166 = vunpack.c.l.b16 %v44
  %v167 = vunpack.c.l.b16 %v45
  %v168 = vunpack.c.h.b16 %v45
  %v169 = vunpack.c.l.b16 %v46
  %v170 = vpack.c.b16 %v125, %v122
  %v171 = vpack.c.b16 %v126, %v123
  %v172 = vpack.c.b16 %v127, %v124
  %v173 = vpack.c.b16 %v131, %v128
  %v174 = vpack.c.b16 %v132, %v129
  %v175 = vpack.c.b16 %v133, %v130
  %v176 = vpack.c.b16 %v137, %v134
  %v177 = vpack.c.b16 %v138, %v135
  %v178 = vpack.c.b16 %v139, %v136
  %v179 = vpack.c.b16 %v143, %v140
  %v180 = vpack.c.b16 %v144, %v141
  %v181 = vpack.c.b16 %v145, %v142
  %v182 = vpack.c.b16 %v149, %v146
  %v183 = vpack.c.b16 %v150, %v147
  %v184 = vpack.c.b16 %v151, %v148
  %v185 = vpack.c.b16 %v155, %v152
  %v186 = vpack.c.b16 %v156, %v153
  %v187 = vpack.c.b16 %v157, %v154
  %v188 = vpack.c.b16 %v161, %v158
  %v189 = vpack.c.b16 %v162, %v159
  %v190 = vpack.c.b16 %v163, %v160
  %v191 = vpack.c.b16 %v167, %v164
  %v192 = vpack.c.b16 %v168, %v165
  %v193 = vpack.c.b16 %v169, %v166
  %v246 = vunpack.c.l.b16 %v47
  %v247 = vunpack.c.l.b16 %v48
  %v248 = vunpack.c.l.b16 %v49
  %v249 = vunpack.c.l.b16 %v50
  %v250 = vunpack.c.l.b16 %v51
  %v251 = vunpack.c.l.b16 %v52
  %v252 = vunpack.c.l.b16 %v53
  %v253 = vunpack.c.l.b16 %v54
  %v254 = vunpack.c.l.b16 %v55
  %v255 = vunpack.c.l.b16 %v56
  %v256 = vunpack.c.l.b16 %v57
  %v257 = vunpack.c.l.b16 %v58
  %v258 = vunpack.c.l.b16 %v59
  %v259 = vunpack.c.l.b16 %v60
  %v260 = vunpack.c.l.b16 %v61
  %v261 = vunpack.c.l.b16 %v62
  %v262 = vunpack.c.l.b16 %v63
  %v263 = vunpack.c.l.b16 %v64
  %v264 = vunpack.c.l.b16 %v65
  %v265 = vunpack.c.l.b16 %v66
  %v266 = vunpack.c.l.b16 %v67
  %v267 = vunpack.c.l.b16 %v68
  %v268 = vunpack.c.l.b16 %v69
  %v269 = vunpack.c.l.b16 %v70
  %v270 = vunpack.c.l.b16 %v71
  %v271 = vunpack.c.l.b16 %v72
  %v272 = vunpack.c.l.b16 %v73
  %v273 = vunpack.c.l.b16 %v74
  %v274 = vunpack.c.l.b16 %v75
  %v275 = vunpack.c.l.b16 %v76
  %v276 = vunpack.c.l.b16 %v77
  %v277 = vunpack.c.l.b16 %v78
  %v278 = vunpack.c.l.b16 %v79
  %v279 = vunpack.c.l.b16 %v80
  %v280 = vunpack.c.l.b16 %v81
  %v281 = vunpack.c.l.b16 %v82
  %v282 = vpack.c.b16 %v247, %v246
  %v283 = vpack.c.b16 %v249, %v248
  %v284 = vpack.c.b16 %v251, %v250
  %v285 = vpack.c.b16 %v253, %v252
  %v286 = vpack.c.b16 %v255, %v254
  %v287 = vpack.c.b16 %v257, %v256
  %v288 = vpack.c.b16 %v259, %v258
  %v289 = vpack.c.b16 %v261, %v260
  %v290 = vpack.c.b16 %v263, %v262
  %v291 = vpack.c.b16 %v265, %v264
  %v292 = vpack.c.b16 %v267, %v266
  %v293 = vpack.c.b16 %v269, %v268
  %v294 = vpack.c.b16 %v271, %v270
  %v295 = vpack.c.b16 %v273, %v272
  %v296 = vpack.c.b16 %v275, %v274
  %v297 = vpack.c.b16 %v277, %v276
  %v298 = vpack.c.b16 %v279, %v278
  %v299 = vpack.c.b16 %v281, %v280
  %vm318 = vcmask 261120
  %v320 = vsel %vm318, %v172, 0
  %v323 = vsel %vm318, %v175, 0
  %v326 = vsel %vm318, %v178, 0
  %v329 = vsel %vm318, %v181, 0
  %v332 = vsel %vm318, %v184, 0
  %v335 = vsel %vm318, %v187, 0
  %v338 = vsel %vm318, %v190, 0
  %v341 = vsel %vm318, %v193, 0
  %343 = vmatprep.subr.bf16.mxu0 0
  %344 = vmatpush1.bf16.msra.mxu0 %v282
  %345 = vmatprep.subr.bf16.mxu0 0
  %346 = vmatpush1.bf16.msra.mxu0 %v283
  %347 = vmatprep.subr.bf16.mxu0 0
  %348 = vmatpush1.bf16.msra.mxu0 %v284
  %349 = vmatprep.subr.bf16.mxu0 0
  %350 = vmatpush1.bf16.msra.mxu0 %v285
  %351 = vmatprep.subr.bf16.mxu0 0
  %352 = vmatpush1.bf16.msra.mxu0 %v286
  %353 = vmatprep.subr.bf16.mxu0 0
  %354 = vmatpush1.bf16.msra.mxu0 %v287
  %355 = vmatprep.subr.bf16.mxu0 0
  %356 = vmatpush1.bf16.msra.mxu0 %v288
  %357 = vmatprep.subr.bf16.mxu0 0
  %358 = vmatpush1.bf16.msra.mxu0 %v289
  %359 = vmatprep.subr.bf16.mxu0 0
  %360 = vmatpush1.bf16.msra.mxu0 %v290
  %361 = vmatprep.subr.bf16.mxu0 0
  %362 = vmatpush1.bf16.msra.mxu0 %v291
  %363 = vmatprep.subr.bf16.mxu0 0
  %364 = vmatpush1.bf16.msra.mxu0 %v292
  %365 = vmatprep.subr.bf16.mxu0 0
  %366 = vmatpush1.bf16.msra.mxu0 %v293
  %367 = vmatprep.subr.bf16.mxu0 0
  %368 = vmatpush1.bf16.msra.mxu0 %v294
  %369 = vmatprep.subr.bf16.mxu0 0
  %370 = vmatpush1.bf16.msra.mxu0 %v295
  %371 = vmatprep.subr.bf16.mxu0 0
  %372 = vmatpush1.bf16.msra.mxu0 %v296
  %373 = vmatprep.subr.bf16.mxu0 0
  %374 = vmatpush1.bf16.msra.mxu0 %v297
  %375 = vmatprep.mubr.bf16.mxu0 %v171
  %376 = vmatmul.mubr.bf16.gmra.mrb[0].mxu0 %v170
  %v377 = vpop.f32.mrb[0].mxu0
  %v378 = vadd.f32 %v88, %v377
  %v379 = vpop.f32.mrb[0].mxu0
  %v380 = vpop.f32.mrb[0].mxu0
  %v381 = vadd.f32 %v88, %v380
  %v382 = vpop.f32.mrb[0].mxu0
  %383 = vmatprep.mubr.bf16.mxu0 %v174
  %384 = vmatmul.mubr.bf16.gmra.mrb[0].mxu0 %v173
  %v385 = vpop.f32.mrb[0].mxu0
  %v386 = vadd.f32 %v88, %v385
  %v387 = vpop.f32.mrb[0].mxu0
  %v388 = vpop.f32.mrb[0].mxu0
  %v389 = vadd.f32 %v88, %v388
  %v390 = vpop.f32.mrb[0].mxu0
  %391 = vmatprep.mubr.bf16.mxu0 %v177
  %392 = vmatmul.mubr.bf16.gmra.mrb[0].mxu0 %v176
  %v393 = vpop.f32.mrb[0].mxu0
  %v394 = vadd.f32 %v88, %v393
  %v395 = vpop.f32.mrb[0].mxu0
  %v396 = vpop.f32.mrb[0].mxu0
  %v397 = vadd.f32 %v88, %v396
  %v398 = vpop.f32.mrb[0].mxu0
  %399 = vmatprep.mubr.bf16.mxu0 %v180
  %400 = vmatmul.mubr.bf16.gmra.mrb[0].mxu0 %v179
  %v401 = vpop.f32.mrb[0].mxu0
  %v402 = vadd.f32 %v88, %v401
  %v403 = vpop.f32.mrb[0].mxu0
  %v404 = vpop.f32.mrb[0].mxu0
  %v405 = vadd.f32 %v88, %v404
  %v406 = vpop.f32.mrb[0].mxu0
  %407 = vmatprep.mubr.bf16.mxu0 %v183
  %408 = vmatmul.mubr.bf16.gmra.mrb[0].mxu0 %v182
  %v409 = vpop.f32.mrb[0].mxu0
  %v410 = vadd.f32 %v88, %v409
  %v411 = vpop.f32.mrb[0].mxu0
  %v412 = vpop.f32.mrb[0].mxu0
  %v413 = vadd.f32 %v88, %v412
  %v414 = vpop.f32.mrb[0].mxu0
  %415 = vmatprep.mubr.bf16.mxu0 %v186
  %416 = vmatmul.mubr.bf16.gmra.mrb[0].mxu0 %v185
  %v417 = vpop.f32.mrb[0].mxu0
  %v418 = vadd.f32 %v88, %v417
  %v419 = vpop.f32.mrb[0].mxu0
  %v420 = vpop.f32.mrb[0].mxu0
  %v421 = vadd.f32 %v88, %v420
  %v422 = vpop.f32.mrb[0].mxu0
  %423 = vmatprep.mubr.bf16.mxu0 %v189
  %424 = vmatmul.mubr.bf16.gmra.mrb[0].mxu0 %v188
  %v425 = vpop.f32.mrb[0].mxu0
  %v426 = vadd.f32 %v88, %v425
  %v427 = vpop.f32.mrb[0].mxu0
  %v428 = vpop.f32.mrb[0].mxu0
  %v429 = vadd.f32 %v88, %v428
  %v430 = vpop.f32.mrb[0].mxu0
  %431 = vmatprep.mubr.bf16.mxu0 %v192
  %432 = vmatmul.mubr.bf16.gmra.mrb[0].mxu0 %v191
  %v433 = vpop.f32.mrb[0].mxu0
  %v434 = vadd.f32 %v88, %v433
  %v435 = vpop.f32.mrb[0].mxu0
  %v436 = vpop.f32.mrb[0].mxu0
  %v437 = vadd.f32 %v88, %v436
  %v438 = vpop.f32.mrb[0].mxu0
  %439 = vdwg.mxu0
  %440 = vmatprep.subr.bf16.mxu0 0
  %441 = vmatpush1.bf16.msra.mxu0 %v298
  %442 = vmatprep.subr.bf16.mxu0 0
  %443 = vmatpush1.bf16.msra.mxu0 %v299
  %444 = vmatprep.subr.bf16.mxu0 0
  %445 = vmatpush1.bf16.msra.mxu0 0
  %446 = vmatprep.subr.bf16.mxu0 0
  %447 = vmatpush1.bf16.msra.mxu0 0
  %448 = vmatprep.subr.bf16.mxu0 0
  %449 = vmatpush1.bf16.msra.mxu0 0
  %450 = vmatprep.subr.bf16.mxu0 0
  %451 = vmatpush1.bf16.msra.mxu0 0
  %452 = vmatprep.subr.bf16.mxu0 0
  %453 = vmatpush1.bf16.msra.mxu0 0
  %454 = vmatprep.subr.bf16.mxu0 0
  %455 = vmatpush1.bf16.msra.mxu0 0
  %456 = vmatprep.subr.bf16.mxu0 0
  %457 = vmatpush1.bf16.msra.mxu0 0
  %458 = vmatprep.subr.bf16.mxu0 0
  %459 = vmatpush1.bf16.msra.mxu0 0
  %460 = vmatprep.subr.bf16.mxu0 0
  %461 = vmatpush1.bf16.msra.mxu0 0
  %462 = vmatprep.subr.bf16.mxu0 0
  %463 = vmatpush1.bf16.msra.mxu0 0
  %464 = vmatprep.subr.bf16.mxu0 0
  %465 = vmatpush1.bf16.msra.mxu0 0
  %466 = vmatprep.subr.bf16.mxu0 0
  %467 = vmatpush1.bf16.msra.mxu0 0
  %468 = vmatprep.subr.bf16.mxu0 0
  %469 = vmatpush1.bf16.msra.mxu0 0
  %470 = vmatprep.subr.bf16.mxu0 0
  %471 = vmatpush1.bf16.msra.mxu0 0
  %472 = vmatprep.mubr.bf16.mxu0 0
  %473 = vmatmul.mubr.bf16.gmra.mrb[0].mxu0 %v320
  %v474 = vpop.f32.mrb[0].mxu0
  %v475 = vadd.f32 %v378, %v474
  %v476 = vpop.f32.mrb[0].mxu0
  %v477 = vpop.f32.mrb[0].mxu0
  %v478 = vadd.f32 %v381, %v477
  %v479 = vpop.f32.mrb[0].mxu0
  %480 = vmatprep.mubr.bf16.mxu0 0
  %481 = vmatmul.mubr.bf16.gmra.mrb[0].mxu0 %v323
  %v482 = vpop.f32.mrb[0].mxu0
  %v483 = vadd.f32 %v386, %v482
  %v484 = vpop.f32.mrb[0].mxu0
  %v485 = vpop.f32.mrb[0].mxu0
  %v486 = vadd.f32 %v389, %v485
  %v487 = vpop.f32.mrb[0].mxu0
  %488 = vmatprep.mubr.bf16.mxu0 0
  %489 = vmatmul.mubr.bf16.gmra.mrb[0].mxu0 %v326
  %v490 = vpop.f32.mrb[0].mxu0
  %v491 = vadd.f32 %v394, %v490
  %v492 = vpop.f32.mrb[0].mxu0
  %v493 = vpop.f32.mrb[0].mxu0
  %v494 = vadd.f32 %v397, %v493
  %v495 = vpop.f32.mrb[0].mxu0
  %496 = vmatprep.mubr.bf16.mxu0 0
  %497 = vmatmul.mubr.bf16.gmra.mrb[0].mxu0 %v329
  %v498 = vpop.f32.mrb[0].mxu0
  %v499 = vadd.f32 %v402, %v498
  %v500 = vpop.f32.mrb[0].mxu0
  %v501 = vpop.f32.mrb[0].mxu0
  %v502 = vadd.f32 %v405, %v501
  %v503 = vpop.f32.mrb[0].mxu0
  %504 = vmatprep.mubr.bf16.mxu0 0
  %505 = vmatmul.mubr.bf16.gmra.mrb[0].mxu0 %v332
  %v506 = vpop.f32.mrb[0].mxu0
  %v507 = vadd.f32 %v410, %v506
  %v508 = vpop.f32.mrb[0].mxu0
  %v509 = vpop.f32.mrb[0].mxu0
  %v510 = vadd.f32 %v413, %v509
  %v511 = vpop.f32.mrb[0].mxu0
  %512 = vmatprep.mubr.bf16.mxu0 0
  %513 = vmatmul.mubr.bf16.gmra.mrb[0].mxu0 %v335
  %v514 = vpop.f32.mrb[0].mxu0
  %v515 = vadd.f32 %v418, %v514
  %v516 = vpop.f32.mrb[0].mxu0
  %v517 = vpop.f32.mrb[0].mxu0
  %v518 = vadd.f32 %v421, %v517
  %v519 = vpop.f32.mrb[0].mxu0
  %520 = vmatprep.mubr.bf16.mxu0 0
  %521 = vmatmul.mubr.bf16.gmra.mrb[0].mxu0 %v338
  %v522 = vpop.f32.mrb[0].mxu0
  %v523 = vadd.f32 %v426, %v522
  %v524 = vpop.f32.mrb[0].mxu0
  %v525 = vpop.f32.mrb[0].mxu0
  %v526 = vadd.f32 %v429, %v525
  %v527 = vpop.f32.mrb[0].mxu0
  %528 = vmatprep.mubr.bf16.mxu0 0
  %529 = vmatmul.mubr.bf16.gmra.mrb[0].mxu0 %v341
  %v530 = vpop.f32.mrb[0].mxu0
  %v531 = vadd.f32 %v434, %v530
  %v532 = vpop.f32.mrb[0].mxu0
  %v533 = vpop.f32.mrb[0].mxu0
  %v534 = vadd.f32 %v437, %v533
  %v535 = vpop.f32.mrb[0].mxu0
  %536 = vdwg.mxu0
  %v537 = vmax.f32 %v475, 0.0
  %v538 = vmax.f32 %v478, 0.0
  %v539 = vmax.f32 %v483, 0.0
  %v540 = vmax.f32 %v486, 0.0
  %v541 = vmax.f32 %v491, 0.0
  %v542 = vmax.f32 %v494, 0.0
  %v543 = vmax.f32 %v499, 0.0
  %v544 = vmax.f32 %v502, 0.0
  %v545 = vmax.f32 %v507, 0.0
  %v546 = vmax.f32 %v510, 0.0
  %v547 = vmax.f32 %v515, 0.0
  %v548 = vmax.f32 %v518, 0.0
  %v549 = vmax.f32 %v523, 0.0
  %v550 = vmax.f32 %v526, 0.0
  %v551 = vmax.f32 %v531, 0.0
  %v552 = vmax.f32 %v534, 0.0
  %v553 = vpack.c.bf16 %v538, %v537
  %v554 = vpack.c.bf16 %v540, %v539
  %v555 = vpack.c.bf16 %v542, %v541
  %v556 = vpack.c.bf16 %v544, %v543
  %v557 = vpack.c.bf16 %v546, %v545
  %v558 = vpack.c.bf16 %v548, %v547
  %v559 = vpack.c.bf16 %v550, %v549
  %v560 = vpack.c.bf16 %v552, %v551
  %v569 = vunpack.c.l.b16 %v553
  %v570 = vunpack.c.h.b16 %v553
  %v571 = vunpack.c.l.b16 %v554
  %v572 = vunpack.c.h.b16 %v554
  %v573 = vunpack.c.l.b16 %v555
  %v574 = vunpack.c.h.b16 %v555
  %v575 = vunpack.c.l.b16 %v556
  %v576 = vunpack.c.h.b16 %v556
  %v577 = vunpack.c.l.b16 %v557
  %v578 = vunpack.c.h.b16 %v557
  %v579 = vunpack.c.l.b16 %v558
  %v580 = vunpack.c.h.b16 %v558
  %v581 = vunpack.c.l.b16 %v559
  %v582 = vunpack.c.h.b16 %v559
  %v583 = vunpack.c.l.b16 %v560
  %v584 = vunpack.c.h.b16 %v560
  %v585 = vpack.c.b16 %v569, %v569
  %v586 = vpack.c.b16 %v570, %v570
  %v587 = vpack.c.b16 %v571, %v571
  %v588 = vpack.c.b16 %v572, %v572
  %v589 = vpack.c.b16 %v573, %v573
  %v590 = vpack.c.b16 %v574, %v574
  %v591 = vpack.c.b16 %v575, %v575
  %v592 = vpack.c.b16 %v576, %v576
  %v593 = vpack.c.b16 %v577, %v577
  %v594 = vpack.c.b16 %v578, %v578
  %v595 = vpack.c.b16 %v579, %v579
  %v596 = vpack.c.b16 %v580, %v580
  %v597 = vpack.c.b16 %v581, %v581
  %v598 = vpack.c.b16 %v582, %v582
  %v599 = vpack.c.b16 %v583, %v583
  %v600 = vpack.c.b16 %v584, %v584
  %vm617 = vcmask 257024
  %618 = vst.msk [vmem:[%s3] sm:$0xf] %vm617, %v585
  %619 = vst.msk [vmem:[%s3 + $0x4] sm:$0xf] %vm617, %v586
  %620 = vst.msk [vmem:[%s3 + $0x8] sm:$0xf] %vm617, %v587
  %621 = vst.msk [vmem:[%s3 + $0xc] sm:$0xf] %vm617, %v588
  %622 = vst.msk [vmem:[%s3 + $0x10] sm:$0xf] %vm617, %v589
  %623 = vst.msk [vmem:[%s3 + $0x14] sm:$0xf] %vm617, %v590
  %624 = vst.msk [vmem:[%s3 + $0x18] sm:$0xf] %vm617, %v591
  %625 = vst.msk [vmem:[%s3 + $0x1c] sm:$0xf] %vm617, %v592
  %626 = vst.msk [vmem:[%s3 + $0x20] sm:$0xf] %vm617, %v593
  %627 = vst.msk [vmem:[%s3 + $0x24] sm:$0xf] %vm617, %v594
  %628 = vst.msk [vmem:[%s3 + $0x28] sm:$0xf] %vm617, %v595
  %629 = vst.msk [vmem:[%s3 + $0x2c] sm:$0xf] %vm617, %v596
  %630 = vst.msk [vmem:[%s3 + $0x30] sm:$0xf] %vm617, %v597
  %631 = vst.msk [vmem:[%s3 + $0x34] sm:$0xf] %vm617, %v598
  %632 = vst.msk [vmem:[%s3 + $0x38] sm:$0xf] %vm617, %v599
  %633 = vst.msk [vmem:[%s3 + $0x3c] sm:$0xf] %vm617, %v600
  // Predicated region
  $region14: #{faster_rcnn_forward.5} parent=0 // pred_check
    _
  $region15: #{faster_rcnn_forward.5} parent=0 // pred_check_branch
    %635 = sbr.rel (0) target = $region17
  $region16: #{faster_rcnn_forward.5} parent=0 // pred_region
    _
  $region17: #{faster_rcnn_forward.5} parent=0 // pred_fallthru
    _
  // Predicated region
  $region18: #{faster_rcnn_forward.5} parent=0 // pred_check
    _
  $region19: #{faster_rcnn_forward.5} parent=0 // pred_check_branch
    %637 = sbr.rel (0) target = $region21
  $region20: #{faster_rcnn_forward.5} parent=0 // pred_region
    _
  $region21: #{faster_rcnn_forward.5} parent=0 // pred_fallthru
    _

// kernel: faster_rcnn_forward.6
$region0: #{faster_rcnn_forward.6}
  #allocation0 [shape = 'u32[]', space=smem, size = 0x4, offset = 0x4, fixed_abs, tag = 'smem constant byte address 0x4 - core index']
  #allocation1 [shape = 'u32[144,128]{1,0:T(1,128)}', space=vmem, size = 0x12000, scoped, tag = 'internal scratch']
  %s0 = inlined_call_operand.vmem [shape: bf16[32,288], index: 0, kind: input, shape index: {}]
  %s1 = inlined_call_operand.vmem [shape: bf16[288,32], index: 1, kind: input, shape index: {}]
  %s2 = inlined_call_operand.vmem [shape: f32[1,32], index: 2, kind: input, shape index: {}]
  %s3 = inlined_call_operand.vmem [shape: bf16[2,32], index: 3, kind: input, shape index: {}]
  %s4 = inlined_call_operand.vmem [shape: bf16[32,32], index: 4, kind: input, shape index: {}]
  %s5 = inlined_call_operand.vmem [shape: f32[1,32], index: 5, kind: input, shape index: {}]
  %s6 = inlined_call_operand.vmem [shape: bf16[32,2], index: 6, kind: input, shape index: {}]
  %s7 = inlined_call_operand.vmem [shape: f32[1,2], index: 7, kind: input, shape index: {}]
  %s8 = inlined_call_operand.hbm [shape: f32[2,2], index: 8, kind: output, shape index: {0}]
  %s9 = inlined_call_operand.vmem [shape: bf16[2,32], index: 9, kind: output, shape index: {1}]
  %10 = xla_tuple %s8, %s9
  %s11 = sld [smem:[#allocation0]]
  $region50: #{faster_rcnn_forward.6} parent=0
    _
  %s13 = ssub.s32 1, %s11
  %s14 = scalar_select 0, %s13, %s11
  $region1: #{faster_rcnn_forward.6} parent=0
    #allocation2 [shape = 'u8[1024]{0}', space=vmem, size = 0x400, scoped, tag = 'output window, operand 0, single buffered']
    #allocation3 [shape = 's32[1]{0}', space=sflag, size = 0x4, scoped, tag = 'scoped memory for faster_rcnn_forward.6']
    %15 = vsyncpa [#allocation3], 0
    // Predicated region
    $region2: #{faster_rcnn_forward.6} parent=1 // pred_check
      _
    $region3: #{faster_rcnn_forward.6} parent=1 // pred_check_branch
      %17 = sbr.rel (0) target = $region5
    $region4: #{faster_rcnn_forward.6} parent=1 // pred_region
      _
    $region5: #{faster_rcnn_forward.6} parent=1 // pred_fallthru
      _
    // Predicated region
    $region6: #{faster_rcnn_forward.6} parent=1 // pred_check
      _
    $region7: #{faster_rcnn_forward.6} parent=1 // pred_check_branch
      %19 = sbr.rel (0) target = $region9
    $region8: #{faster_rcnn_forward.6} parent=1 // pred_region
      _
    $region9: #{faster_rcnn_forward.6} parent=1 // pred_fallthru
      _
    // Predicated region
    $region10: #{faster_rcnn_forward.6} parent=1 // pred_check
      _
    $region11: #{faster_rcnn_forward.6} parent=1 // pred_check_branch
      %21 = sbr.rel (0) target = $region13
    $region12: #{faster_rcnn_forward.6} parent=1 // pred_region
      _
    $region13: #{faster_rcnn_forward.6} parent=1 // pred_fallthru
      _
    // Predicated region
    $region14: #{faster_rcnn_forward.6} parent=1 // pred_check
      _
    $region15: #{faster_rcnn_forward.6} parent=1 // pred_check_branch
      %23 = sbr.rel (0) target = $region17
    $region16: #{faster_rcnn_forward.6} parent=1 // pred_region
      _
    $region17: #{faster_rcnn_forward.6} parent=1 // pred_fallthru
      _
    // Predicated region
    $region18: #{faster_rcnn_forward.6} parent=1 // pred_check
      _
    $region19: #{faster_rcnn_forward.6} parent=1 // pred_check_branch
      %25 = sbr.rel (0) target = $region21
    $region20: #{faster_rcnn_forward.6} parent=1 // pred_region
      _
    $region21: #{faster_rcnn_forward.6} parent=1 // pred_fallthru
      _
    // Predicated region
    $region22: #{faster_rcnn_forward.6} parent=1 // pred_check
      _
    $region23: #{faster_rcnn_forward.6} parent=1 // pred_check_branch
      %27 = sbr.rel (0) target = $region25
    $region24: #{faster_rcnn_forward.6} parent=1 // pred_region
      _
    $region25: #{faster_rcnn_forward.6} parent=1 // pred_fallthru
      _
    // Predicated region
    $region26: #{faster_rcnn_forward.6} parent=1 // pred_check
      _
    $region27: #{faster_rcnn_forward.6} parent=1 // pred_check_branch
      %29 = sbr.rel (0) target = $region29
    $region28: #{faster_rcnn_forward.6} parent=1 // pred_region
      _
    $region29: #{faster_rcnn_forward.6} parent=1 // pred_fallthru
      _
    // Predicated region
    $region30: #{faster_rcnn_forward.6} parent=1 // pred_check
      _
    $region31: #{faster_rcnn_forward.6} parent=1 // pred_check_branch
      %31 = sbr.rel (0) target = $region33
    $region32: #{faster_rcnn_forward.6} parent=1 // pred_region
      _
    $region33: #{faster_rcnn_forward.6} parent=1 // pred_fallthru
      _
    %v33 = vld [vmem:[%s0] sm:$0xff]
    %v34 = vld [vmem:[%s0 + $0x8] sm:$0xf]
    %v35 = vld [vmem:[%s0 + $0xc] sm:$0xff]
    %v36 = vld [vmem:[%s0 + $0x14] sm:$0xf]
    %v37 = vld [vmem:[%s0 + $0x18] sm:$0xff]
    %v38 = vld [vmem:[%s0 + $0x20] sm:$0xf]
    %v39 = vld [vmem:[%s0 + $0x24] sm:$0xff]
    %v40 = vld [vmem:[%s0 + $0x2c] sm:$0xf]
    %v41 = vld [vmem:[%s1] sm:$0xf]
    %v42 = vld [vmem:[%s1 + $0x4] sm:$0xf]
    %v43 = vld [vmem:[%s1 + $0x8] sm:$0xf]
    %v44 = vld [vmem:[%s1 + $0xc] sm:$0xf]
    %v45 = vld [vmem:[%s1 + $0x10] sm:$0xf]
    %v46 = vld [vmem:[%s1 + $0x14] sm:$0xf]
    %v47 = vld [vmem:[%s1 + $0x18] sm:$0xf]
    %v48 = vld [vmem:[%s1 + $0x1c] sm:$0xf]
    %v49 = vld [vmem:[%s1 + $0x20] sm:$0xf]
    %v50 = vld [vmem:[%s1 + $0x24] sm:$0xf]
    %v51 = vld [vmem:[%s1 + $0x28] sm:$0xf]
    %v52 = vld [vmem:[%s1 + $0x2c] sm:$0xf]
    %v53 = vld [vmem:[%s1 + $0x30] sm:$0xf]
    %v54 = vld [vmem:[%s1 + $0x34] sm:$0xf]
    %v55 = vld [vmem:[%s1 + $0x38] sm:$0xf]
    %v56 = vld [vmem:[%s1 + $0x3c] sm:$0xf]
    %v57 = vld [vmem:[%s1 + $0x40] sm:$0xf]
    %v58 = vld [vmem:[%s1 + $0x44] sm:$0xf]
    %v59 = vld [vmem:[%s1 + $0x48] sm:$0xf]
    %v60 = vld [vmem:[%s1 + $0x4c] sm:$0xf]
    %v61 = vld [vmem:[%s1 + $0x50] sm:$0xf]
    %v62 = vld [vmem:[%s1 + $0x54] sm:$0xf]
    %v63 = vld [vmem:[%s1 + $0x58] sm:$0xf]
    %v64 = vld [vmem:[%s1 + $0x5c] sm:$0xf]
    %v65 = vld [vmem:[%s1 + $0x60] sm:$0xf]
    %v66 = vld [vmem:[%s1 + $0x64] sm:$0xf]
    %v67 = vld [vmem:[%s1 + $0x68] sm:$0xf]
    %v68 = vld [vmem:[%s1 + $0x6c] sm:$0xf]
    %v69 = vld [vmem:[%s1 + $0x70] sm:$0xf]
    %v70 = vld [vmem:[%s1 + $0x74] sm:$0xf]
    %v71 = vld [vmem:[%s1 + $0x78] sm:$0xf]
    %v72 = vld [vmem:[%s1 + $0x7c] sm:$0xf]
    %v73 = vld [vmem:[%s1 + $0x80] sm:$0xf]
    %v74 = vld [vmem:[%s1 + $0x84] sm:$0xf]
    %v75 = vld [vmem:[%s1 + $0x88] sm:$0xf]
    %v76 = vld [vmem:[%s1 + $0x8c] sm:$0xf]
    %v77 = vld [vmem:[%s2] sm:$0x1]
    %v79 = vlaneseq
    %v80 = vshrl.u32 %v79, 7
    %v81 = vsub.s32 0, %v80
    %v82 = vrot.slane %v77, %v81
    %v92 = vunpack.c.l.b16 %v33
    %v93 = vunpack.c.h.b16 %v33
    %v94 = vunpack.c.l.b16 %v34
    %v95 = vunpack.c.l.b16 %v35
    %v96 = vunpack.c.h.b16 %v35
    %v97 = vunpack.c.l.b16 %v36
    %v98 = vunpack.c.l.b16 %v37
    %v99 = vunpack.c.h.b16 %v37
    %v100 = vunpack.c.l.b16 %v38
    %v101 = vunpack.c.l.b16 %v39
    %v102 = vunpack.c.h.b16 %v39
    %v103 = vunpack.c.l.b16 %v40
    %v104 = vpack.c.b16 %v95, %v92
    %v105 = vpack.c.b16 %v96, %v93
    %v106 = vpack.c.b16 %v97, %v94
    %v107 = vpack.c.b16 %v101, %v98
    %v108 = vpack.c.b16 %v102, %v99
    %v109 = vpack.c.b16 %v103, %v100
    %v150 = vunpack.c.l.b16 %v41
    %v151 = vunpack.c.l.b16 %v42
    %v152 = vunpack.c.l.b16 %v43
    %v153 = vunpack.c.l.b16 %v44
    %v154 = vunpack.c.l.b16 %v45
    %v155 = vunpack.c.l.b16 %v46
    %v156 = vunpack.c.l.b16 %v47
    %v157 = vunpack.c.l.b16 %v48
    %v158 = vunpack.c.l.b16 %v49
    %v159 = vunpack.c.l.b16 %v50
    %v160 = vunpack.c.l.b16 %v51
    %v161 = vunpack.c.l.b16 %v52
    %v162 = vunpack.c.l.b16 %v53
    %v163 = vunpack.c.l.b16 %v54
    %v164 = vunpack.c.l.b16 %v55
    %v165 = vunpack.c.l.b16 %v56
    %v166 = vunpack.c.l.b16 %v57
    %v167 = vunpack.c.l.b16 %v58
    %v168 = vunpack.c.l.b16 %v59
    %v169 = vunpack.c.l.b16 %v60
    %v170 = vunpack.c.l.b16 %v61
    %v171 = vunpack.c.l.b16 %v62
    %v172 = vunpack.c.l.b16 %v63
    %v173 = vunpack.c.l.b16 %v64
    %v174 = vunpack.c.l.b16 %v65
    %v175 = vunpack.c.l.b16 %v66
    %v176 = vunpack.c.l.b16 %v67
    %v177 = vunpack.c.l.b16 %v68
    %v178 = vunpack.c.l.b16 %v69
    %v179 = vunpack.c.l.b16 %v70
    %v180 = vunpack.c.l.b16 %v71
    %v181 = vunpack.c.l.b16 %v72
    %v182 = vunpack.c.l.b16 %v73
    %v183 = vunpack.c.l.b16 %v74
    %v184 = vunpack.c.l.b16 %v75
    %v185 = vunpack.c.l.b16 %v76
    %v186 = vpack.c.b16 %v151, %v150
    %v187 = vpack.c.b16 %v153, %v152
    %v188 = vpack.c.b16 %v155, %v154
    %v189 = vpack.c.b16 %v157, %v156
    %v190 = vpack.c.b16 %v159, %v158
    %v191 = vpack.c.b16 %v161, %v160
    %v192 = vpack.c.b16 %v163, %v162
    %v193 = vpack.c.b16 %v165, %v164
    %v194 = vpack.c.b16 %v167, %v166
    %v195 = vpack.c.b16 %v169, %v168
    %v196 = vpack.c.b16 %v171, %v170
    %v197 = vpack.c.b16 %v173, %v172
    %v198 = vpack.c.b16 %v175, %v174
    %v199 = vpack.c.b16 %v177, %v176
    %v200 = vpack.c.b16 %v179, %v178
    %v201 = vpack.c.b16 %v181, %v180
    %v202 = vpack.c.b16 %v183, %v182
    %v203 = vpack.c.b16 %v185, %v184
    %vm222 = vcmask 261120
    %v224 = vsel %vm222, %v106, 0
    %v227 = vsel %vm222, %v109, 0
    %229 = vmatprep.subr.bf16.mxu0 0
    %230 = vmatpush1.bf16.msra.mxu0 %v186
    %231 = vmatprep.subr.bf16.mxu0 0
    %232 = vmatpush1.bf16.msra.mxu0 %v187
    %233 = vmatprep.subr.bf16.mxu0 0
    %234 = vmatpush1.bf16.msra.mxu0 %v188
    %235 = vmatprep.subr.bf16.mxu0 0
    %236 = vmatpush1.bf16.msra.mxu0 %v189
    %237 = vmatprep.subr.bf16.mxu0 0
    %238 = vmatpush1.bf16.msra.mxu0 %v190
    %239 = vmatprep.subr.bf16.mxu0 0
    %240 = vmatpush1.bf16.msra.mxu0 %v191
    %241 = vmatprep.subr.bf16.mxu0 0
    %242 = vmatpush1.bf16.msra.mxu0 %v192
    %243 = vmatprep.subr.bf16.mxu0 0
    %244 = vmatpush1.bf16.msra.mxu0 %v193
    %245 = vmatprep.subr.bf16.mxu0 0
    %246 = vmatpush1.bf16.msra.mxu0 %v194
    %247 = vmatprep.subr.bf16.mxu0 0
    %248 = vmatpush1.bf16.msra.mxu0 %v195
    %249 = vmatprep.subr.bf16.mxu0 0
    %250 = vmatpush1.bf16.msra.mxu0 %v196
    %251 = vmatprep.subr.bf16.mxu0 0
    %252 = vmatpush1.bf16.msra.mxu0 %v197
    %253 = vmatprep.subr.bf16.mxu0 0
    %254 = vmatpush1.bf16.msra.mxu0 %v198
    %255 = vmatprep.subr.bf16.mxu0 0
    %256 = vmatpush1.bf16.msra.mxu0 %v199
    %257 = vmatprep.subr.bf16.mxu0 0
    %258 = vmatpush1.bf16.msra.mxu0 %v200
    %259 = vmatprep.subr.bf16.mxu0 0
    %260 = vmatpush1.bf16.msra.mxu0 %v201
    %261 = vmatprep.mubr.bf16.mxu0 %v105
    %262 = vmatmul.mubr.bf16.gmra.mrb[0].mxu0 %v104
    %v263 = vpop.f32.mrb[0].mxu0
    %v264 = vadd.f32 %v82, %v263
    %v265 = vpop.f32.mrb[0].mxu0
    %v266 = vpop.f32.mrb[0].mxu0
    %v267 = vadd.f32 %v82, %v266
    %v268 = vpop.f32.mrb[0].mxu0
    %269 = vmatprep.mubr.bf16.mxu0 %v108
    %270 = vmatmul.mubr.bf16.gmra.mrb[0].mxu0 %v107
    %v271 = vpop.f32.mrb[0].mxu0
    %v272 = vadd.f32 %v82, %v271
    %v273 = vpop.f32.mrb[0].mxu0
    %v274 = vpop.f32.mrb[0].mxu0
    %v275 = vadd.f32 %v82, %v274
    %v276 = vpop.f32.mrb[0].mxu0
    %277 = vdwg.mxu0
    %278 = vmatprep.subr.bf16.mxu0 0
    %279 = vmatpush1.bf16.msra.mxu0 %v202
    %280 = vmatprep.subr.bf16.mxu0 0
    %281 = vmatpush1.bf16.msra.mxu0 %v203
    %282 = vmatprep.subr.bf16.mxu0 0
    %283 = vmatpush1.bf16.msra.mxu0 0
    %284 = vmatprep.subr.bf16.mxu0 0
    %285 = vmatpush1.bf16.msra.mxu0 0
    %286 = vmatprep.subr.bf16.mxu0 0
    %287 = vmatpush1.bf16.msra.mxu0 0
    %288 = vmatprep.subr.bf16.mxu0 0
    %289 = vmatpush1.bf16.msra.mxu0 0
    %290 = vmatprep.subr.bf16.mxu0 0
    %291 = vmatpush1.bf16.msra.mxu0 0
    %292 = vmatprep.subr.bf16.mxu0 0
    %293 = vmatpush1.bf16.msra.mxu0 0
    %294 = vmatprep.subr.bf16.mxu0 0
    %295 = vmatpush1.bf16.msra.mxu0 0
    %296 = vmatprep.subr.bf16.mxu0 0
    %297 = vmatpush1.bf16.msra.mxu0 0
    %298 = vmatprep.subr.bf16.mxu0 0
    %299 = vmatpush1.bf16.msra.mxu0 0
    %300 = vmatprep.subr.bf16.mxu0 0
    %301 = vmatpush1.bf16.msra.mxu0 0
    %302 = vmatprep.subr.bf16.mxu0 0
    %303 = vmatpush1.bf16.msra.mxu0 0
    %304 = vmatprep.subr.bf16.mxu0 0
    %305 = vmatpush1.bf16.msra.mxu0 0
    %306 = vmatprep.subr.bf16.mxu0 0
    %307 = vmatpush1.bf16.msra.mxu0 0
    %308 = vmatprep.subr.bf16.mxu0 0
    %309 = vmatpush1.bf16.msra.mxu0 0
    %310 = vmatprep.mubr.bf16.mxu0 0
    %311 = vmatmul.mubr.bf16.gmra.mrb[0].mxu0 %v224
    %v312 = vpop.f32.mrb[0].mxu0
    %v313 = vadd.f32 %v264, %v312
    %v314 = vpop.f32.mrb[0].mxu0
    %v315 = vpop.f32.mrb[0].mxu0
    %v316 = vadd.f32 %v267, %v315
    %v317 = vpop.f32.mrb[0].mxu0
    %318 = vmatprep.mubr.bf16.mxu0 0
    %319 = vmatmul.mubr.bf16.gmra.mrb[0].mxu0 %v227
    %v320 = vpop.f32.mrb[0].mxu0
    %v321 = vadd.f32 %v272, %v320
    %v322 = vpop.f32.mrb[0].mxu0
    %v323 = vpop.f32.mrb[0].mxu0
    %v324 = vadd.f32 %v275, %v323
    %v325 = vpop.f32.mrb[0].mxu0
    %326 = vdwg.mxu0
    %v327 = vmax.f32 %v313, 0.0
    %v328 = vmax.f32 %v316, 0.0
    %v329 = vmax.f32 %v321, 0.0
    %v330 = vmax.f32 %v324, 0.0
    %v331 = vpack.c.bf16 %v328, %v327
    %v332 = vpack.c.bf16 %v330, %v329
    %v333 = vld [vmem:[%s3] sm:$0x1]
    %v335 = vsel %vm222, %v333, 0
    %337 = vmatprep.subr.bf16.mxu0 0
    %338 = vmatpush1.bf16.msra.mxu0 %v331
    %339 = vmatprep.subr.bf16.mxu0 0
    %340 = vmatpush1.bf16.msra.mxu0 %v332
    %341 = vmatprep.subr.bf16.mxu0 0
    %342 = vmatpush1.bf16.msra.mxu0 0
    %343 = vmatprep.subr.bf16.mxu0 0
    %344 = vmatpush1.bf16.msra.mxu0 0
    %345 = vmatprep.subr.bf16.mxu0 0
    %346 = vmatpush1.bf16.msra.mxu0 0
    %347 = vmatprep.subr.bf16.mxu0 0
    %348 = vmatpush1.bf16.msra.mxu0 0
    %349 = vmatprep.subr.bf16.mxu0 0
    %350 = vmatpush1.bf16.msra.mxu0 0
    %351 = vmatprep.subr.bf16.mxu0 0
    %352 = vmatpush1.bf16.msra.mxu0 0
    %353 = vmatprep.subr.bf16.mxu0 0
    %354 = vmatpush1.bf16.msra.mxu0 0
    %355 = vmatprep.subr.bf16.mxu0 0
    %356 = vmatpush1.bf16.msra.mxu0 0
    %357 = vmatprep.subr.bf16.mxu0 0
    %358 = vmatpush1.bf16.msra.mxu0 0
    %359 = vmatprep.subr.bf16.mxu0 0
    %360 = vmatpush1.bf16.msra.mxu0 0
    %361 = vmatprep.subr.bf16.mxu0 0
    %362 = vmatpush1.bf16.msra.mxu0 0
    %363 = vmatprep.subr.bf16.mxu0 0
    %364 = vmatpush1.bf16.msra.mxu0 0
    %365 = vmatprep.subr.bf16.mxu0 0
    %366 = vmatpush1.bf16.msra.mxu0 0
    %367 = vmatprep.subr.bf16.mxu0 0
    %368 = vmatpush1.bf16.msra.mxu0 0
    %369 = vmatprep.mubr.bf16.mxu0 0
    %370 = vmatmul.mubr.bf16.gmra.mrb[0].mxu0 %v335
    %v371 = vpop.f32.mrb[0].mxu0
    %v372 = vadd.f32 0.0, %v371
    %v373 = vpop.f32.mrb[0].mxu0
    %v374 = vpop.f32.mrb[0].mxu0
    %v375 = vpop.f32.mrb[0].mxu0
    %376 = vdwg.mxu0
    %v377 = vpack.c.bf16 %v372, %v372
    %v378 = vld [vmem:[%s4] sm:$0xf]
    %v379 = vld [vmem:[%s4 + $0x4] sm:$0xf]
    %v380 = vld [vmem:[%s4 + $0x8] sm:$0xf]
    %v381 = vld [vmem:[%s4 + $0xc] sm:$0xf]
    %v382 = vld [vmem:[%s5] sm:$0x1]
    %v384 = vlaneseq
    %v385 = vshrl.u32 %v384, 7
    %v386 = vsub.s32 0, %v385
    %v387 = vrot.slane %v382, %v386
    %v393 = vunpack.c.l.b16 %v378
    %v394 = vunpack.c.l.b16 %v379
    %v395 = vunpack.c.l.b16 %v380
    %v396 = vunpack.c.l.b16 %v381
    %v397 = vpack.c.b16 %v394, %v393
    %v398 = vpack.c.b16 %v396, %v395
    %v402 = vsel %vm222, %v377, 0
    %404 = vmatprep.subr.bf16.mxu0 0
    %405 = vmatpush1.bf16.msra.mxu0 %v397
    %406 = vmatprep.subr.bf16.mxu0 0
    %407 = vmatpush1.bf16.msra.mxu0 %v398
    %408 = vmatprep.subr.bf16.mxu0 0
    %409 = vmatpush1.bf16.msra.mxu0 0
    %410 = vmatprep.subr.bf16.mxu0 0
    %411 = vmatpush1.bf16.msra.mxu0 0
    %412 = vmatprep.subr.bf16.mxu0 0
    %413 = vmatpush1.bf16.msra.mxu0 0
    %414 = vmatprep.subr.bf16.mxu0 0
    %415 = vmatpush1.bf16.msra.mxu0 0
    %416 = vmatprep.subr.bf16.mxu0 0
    %417 = vmatpush1.bf16.msra.mxu0 0
    %418 = vmatprep.subr.bf16.mxu0 0
    %419 = vmatpush1.bf16.msra.mxu0 0
    %420 = vmatprep.subr.bf16.mxu0 0
    %421 = vmatpush1.bf16.msra.mxu0 0
    %422 = vmatprep.subr.bf16.mxu0 0
    %423 = vmatpush1.bf16.msra.mxu0 0
    %424 = vmatprep.subr.bf16.mxu0 0
    %425 = vmatpush1.bf16.msra.mxu0 0
    %426 = vmatprep.subr.bf16.mxu0 0
    %427 = vmatpush1.bf16.msra.mxu0 0
    %428 = vmatprep.subr.bf16.mxu0 0
    %429 = vmatpush1.bf16.msra.mxu0 0
    %430 = vmatprep.subr.bf16.mxu0 0
    %431 = vmatpush1.bf16.msra.mxu0 0
    %432 = vmatprep.subr.bf16.mxu0 0
    %433 = vmatpush1.bf16.msra.mxu0 0
    %434 = vmatprep.subr.bf16.mxu0 0
    %435 = vmatpush1.bf16.msra.mxu0 0
    %436 = vmatprep.mubr.bf16.mxu0 0
    %437 = vmatmul.mubr.bf16.gmra.mrb[0].mxu0 %v402
    %v438 = vpop.f32.mrb[0].mxu0
    %v439 = vadd.f32 %v387, %v438
    %v440 = vpop.f32.mrb[0].mxu0
    %v441 = vpop.f32.mrb[0].mxu0
    %v442 = vpop.f32.mrb[0].mxu0
    %443 = vdwg.mxu0
    %v444 = vmax.f32 %v439, 0.0
    %v445 = vpack.c.bf16 %v444, %v444
    %vm446 = vcmask 253952
    %447 = vst.msk [vmem:[%s9] sm:$0x1] %vm446, %v445
    %v448 = vld [vmem:[%s6] sm:$0xf]
    %v449 = vld [vmem:[%s6 + $0x4] sm:$0xf]
    %v450 = vld [vmem:[%s6 + $0x8] sm:$0xf]
    %v451 = vld [vmem:[%s6 + $0xc] sm:$0xf]
    %v452 = vld [vmem:[%s7] sm:$0x1]
    %v454 = vlaneseq
    %v455 = vshrl.u32 %v454, 7
    %v456 = vsub.s32 0, %v455
    %v457 = vrot.slane %v452, %v456
    %v463 = vunpack.c.l.b16 %v448
    %v464 = vunpack.c.l.b16 %v449
    %v465 = vunpack.c.l.b16 %v450
    %v466 = vunpack.c.l.b16 %v451
    %v467 = vpack.c.b16 %v464, %v463
    %v468 = vpack.c.b16 %v466, %v465
    %v472 = vsel %vm222, %v445, 0
    %474 = vmatprep.subr.bf16.mxu0 0
    %475 = vmatpush1.bf16.msra.mxu0 %v467
    %476 = vmatprep.subr.bf16.mxu0 0
    %477 = vmatpush1.bf16.msra.mxu0 %v468
    %478 = vmatprep.subr.bf16.mxu0 0
    %479 = vmatpush1.bf16.msra.mxu0 0
    %480 = vmatprep.subr.bf16.mxu0 0
    %481 = vmatpush1.bf16.msra.mxu0 0
    %482 = vmatprep.subr.bf16.mxu0 0
    %483 = vmatpush1.bf16.msra.mxu0 0
    %484 = vmatprep.subr.bf16.mxu0 0
    %485 = vmatpush1.bf16.msra.mxu0 0
    %486 = vmatprep.subr.bf16.mxu0 0
    %487 = vmatpush1.bf16.msra.mxu0 0
    %488 = vmatprep.subr.bf16.mxu0 0
    %489 = vmatpush1.bf16.msra.mxu0 0
    %490 = vmatprep.subr.bf16.mxu0 0
    %491 = vmatpush1.bf16.msra.mxu0 0
    %492 = vmatprep.subr.bf16.mxu0 0
    %493 = vmatpush1.bf16.msra.mxu0 0
    %494 = vmatprep.subr.bf16.mxu0 0
    %495 = vmatpush1.bf16.msra.mxu0 0
    %496 = vmatprep.subr.bf16.mxu0 0
    %497 = vmatpush1.bf16.msra.mxu0 0
    %498 = vmatprep.subr.bf16.mxu0 0
    %499 = vmatpush1.bf16.msra.mxu0 0
    %500 = vmatprep.subr.bf16.mxu0 0
    %501 = vmatpush1.bf16.msra.mxu0 0
    %502 = vmatprep.subr.bf16.mxu0 0
    %503 = vmatpush1.bf16.msra.mxu0 0
    %504 = vmatprep.subr.bf16.mxu0 0
    %505 = vmatpush1.bf16.msra.mxu0 0
    %506 = vmatprep.mubr.bf16.mxu0 0
    %507 = vmatmul.mubr.bf16.gmra.mrb[0].mxu0 %v472
    %v508 = vpop.f32.mrb[0].mxu0
    %v509 = vadd.f32 %v457, %v508
    %v510 = vpop.f32.mrb[0].mxu0
    %v511 = vpop.f32.mrb[0].mxu0
    %v512 = vpop.f32.mrb[0].mxu0
    %513 = vdwg.mxu0
    %vm514 = vcmask 9216
    %515 = vst.msk [vmem:[#allocation2] sm:$0x3] %vm514, %v509
    // Predicated region
    $region34: #{faster_rcnn_forward.6} parent=1 // pred_check
      _
    $region35: #{faster_rcnn_forward.6} parent=1 // pred_check_branch
      %517 = sbr.rel (0) target = $region37
    $region36: #{faster_rcnn_forward.6} parent=1 // pred_region
      %s519 = ssub.s32 32, 32
      %520 = vsyncadd [#allocation3], %s519
      %s522 = sshll.u32 [#allocation2], 4
      %s523 = int_to_ptr.vmem [resolvable:$true] %s522
      %525 = dma.vmem_to_hbm [thread:$0]  %s523, 32, %s8, [#allocation3]
    $region37: #{faster_rcnn_forward.6} parent=1 // pred_fallthru
      _
    // Predicated region
    $region38: #{faster_rcnn_forward.6} parent=1 // pred_check
      _
    $region39: #{faster_rcnn_forward.6} parent=1 // pred_check_branch
      %527 = sbr.rel (0) target = $region41
    $region40: #{faster_rcnn_forward.6} parent=1 // pred_region
      _
    $region41: #{faster_rcnn_forward.6} parent=1 // pred_fallthru
      _
    // Predicated region
    $region42: #{faster_rcnn_forward.6} parent=1 // pred_check
      _
    $region43: #{faster_rcnn_forward.6} parent=1 // pred_check_branch
      %529 = sbr.rel (0) target = $region45
    $region44: #{faster_rcnn_forward.6} parent=1 // pred_region
      %530 = dma.done [#allocation3], 32
    $region45: #{faster_rcnn_forward.6} parent=1 // pred_fallthru
      _
    // Predicated region
    $region46: #{faster_rcnn_forward.6} parent=1 // pred_check
      _
    $region47: #{faster_rcnn_forward.6} parent=1 // pred_check_branch
      %532 = sbr.rel (0) target = $region49
    $region48: #{faster_rcnn_forward.6} parent=1 // pred_region
      _
    $region49: #{faster_rcnn_forward.6} parent=1 // pred_fallthru
      _
    %533 = vsyncpa [#allocation3], 1

// kernel: faster_rcnn_forward.7
$region0: #{faster_rcnn_forward.7}
  #allocation0 [shape = 'u32[]', space=smem, size = 0x4, offset = 0x4, fixed_abs, tag = 'smem constant byte address 0x4 - core index']
  #allocation1 [shape = 'u32[144,128]{1,0:T(1,128)}', space=vmem, size = 0x12000, scoped, tag = 'internal scratch']
  %s0 = inlined_call_operand.vmem [shape: bf16[16,512], index: 0, kind: input, shape index: {}]
  %s1 = inlined_call_operand.vmem [shape: bf16[512,64], index: 1, kind: input, shape index: {}]
  %s2 = inlined_call_operand.vmem [shape: f32[1,64], index: 2, kind: input, shape index: {}]
  %s3 = inlined_call_operand.vmem [shape: bf16[1,64], index: 3, kind: input, shape index: {}]
  %s4 = inlined_call_operand.vmem [shape: bf16[1,32], index: 4, kind: input, shape index: {}]
  %s5 = inlined_call_operand.vmem [shape: bf16[64,3], index: 5, kind: input, shape index: {}]
  %s6 = inlined_call_operand.vmem [shape: bf16[32,3], index: 6, kind: input, shape index: {}]
  %s7 = inlined_call_operand.vmem [shape: bf16[64,3], index: 7, kind: input, shape index: {}]
  %s8 = inlined_call_operand.vmem [shape: f32[1,3], index: 8, kind: input, shape index: {}]
  %s9 = inlined_call_operand.vmem [shape: bf16[64,12], index: 9, kind: input, shape index: {}]
  %s10 = inlined_call_operand.vmem [shape: bf16[32,12], index: 10, kind: input, shape index: {}]
  %s11 = inlined_call_operand.vmem [shape: bf16[64,12], index: 11, kind: input, shape index: {}]
  %s12 = inlined_call_operand.vmem [shape: f32[1,12], index: 12, kind: input, shape index: {}]
  %s13 = inlined_call_operand.vmem [shape: f32[16,3], index: 13, kind: output, shape index: {0}]
  %s14 = inlined_call_operand.hbm [shape: f32[16,12], index: 14, kind: output, shape index: {1}]
  %15 = xla_tuple %s13, %s14
  %s16 = sld [smem:[#allocation0]]
  $region70: #{faster_rcnn_forward.7} parent=0
    _
  %s18 = ssub.s32 1, %s16
  %s19 = scalar_select 0, %s18, %s16
  $region1: #{faster_rcnn_forward.7} parent=0
    #allocation2 [shape = 'u8[8192]{0}', space=vmem, size = 0x2000, scoped, tag = 'output window, operand 1, single buffered']
    #allocation3 [shape = 's32[1]{0}', space=sflag, size = 0x4, scoped, tag = 'scoped memory for faster_rcnn_forward.7']
    %20 = vsyncpa [#allocation3], 0
    // Predicated region
    $region2: #{faster_rcnn_forward.7} parent=1 // pred_check
      _
    $region3: #{faster_rcnn_forward.7} parent=1 // pred_check_branch
      %22 = sbr.rel (0) target = $region5
    $region4: #{faster_rcnn_forward.7} parent=1 // pred_region
      _
    $region5: #{faster_rcnn_forward.7} parent=1 // pred_fallthru
      _
    // Predicated region
    $region6: #{faster_rcnn_forward.7} parent=1 // pred_check
      _
    $region7: #{faster_rcnn_forward.7} parent=1 // pred_check_branch
      %24 = sbr.rel (0) target = $region9
    $region8: #{faster_rcnn_forward.7} parent=1 // pred_region
      _
    $region9: #{faster_rcnn_forward.7} parent=1 // pred_fallthru
      _
    // Predicated region
    $region10: #{faster_rcnn_forward.7} parent=1 // pred_check
      _
    $region11: #{faster_rcnn_forward.7} parent=1 // pred_check_branch
      %26 = sbr.rel (0) target = $region13
    $region12: #{faster_rcnn_forward.7} parent=1 // pred_region
      _
    $region13: #{faster_rcnn_forward.7} parent=1 // pred_fallthru
      _
    // Predicated region
    $region14: #{faster_rcnn_forward.7} parent=1 // pred_check
      _
    $region15: #{faster_rcnn_forward.7} parent=1 // pred_check_branch
      %28 = sbr.rel (0) target = $region17
    $region16: #{faster_rcnn_forward.7} parent=1 // pred_region
      _
    $region17: #{faster_rcnn_forward.7} parent=1 // pred_fallthru
      _
    // Predicated region
    $region18: #{faster_rcnn_forward.7} parent=1 // pred_check
      _
    $region19: #{faster_rcnn_forward.7} parent=1 // pred_check_branch
      %30 = sbr.rel (0) target = $region21
    $region20: #{faster_rcnn_forward.7} parent=1 // pred_region
      _
    $region21: #{faster_rcnn_forward.7} parent=1 // pred_fallthru
      _
    // Predicated region
    $region22: #{faster_rcnn_forward.7} parent=1 // pred_check
      _
    $region23: #{faster_rcnn_forward.7} parent=1 // pred_check_branch
      %32 = sbr.rel (0) target = $region25
    $region24: #{faster_rcnn_forward.7} parent=1 // pred_region
      _
    $region25: #{faster_rcnn_forward.7} parent=1 // pred_fallthru
      _
    // Predicated region
    $region26: #{faster_rcnn_forward.7} parent=1 // pred_check
      _
    $region27: #{faster_rcnn_forward.7} parent=1 // pred_check_branch
      %34 = sbr.rel (0) target = $region29
    $region28: #{faster_rcnn_forward.7} parent=1 // pred_region
      _
    $region29: #{faster_rcnn_forward.7} parent=1 // pred_fallthru
      _
    // Predicated region
    $region30: #{faster_rcnn_forward.7} parent=1 // pred_check
      _
    $region31: #{faster_rcnn_forward.7} parent=1 // pred_check_branch
      %36 = sbr.rel (0) target = $region33
    $region32: #{faster_rcnn_forward.7} parent=1 // pred_region
      _
    $region33: #{faster_rcnn_forward.7} parent=1 // pred_fallthru
      _
    // Predicated region
    $region34: #{faster_rcnn_forward.7} parent=1 // pred_check
      _
    $region35: #{faster_rcnn_forward.7} parent=1 // pred_check_branch
      %38 = sbr.rel (0) target = $region37
    $region36: #{faster_rcnn_forward.7} parent=1 // pred_region
      _
    $region37: #{faster_rcnn_forward.7} parent=1 // pred_fallthru
      _
    // Predicated region
    $region38: #{faster_rcnn_forward.7} parent=1 // pred_check
      _
    $region39: #{faster_rcnn_forward.7} parent=1 // pred_check_branch
      %40 = sbr.rel (0) target = $region41
    $region40: #{faster_rcnn_forward.7} parent=1 // pred_region
      _
    $region41: #{faster_rcnn_forward.7} parent=1 // pred_fallthru
      _
    // Predicated region
    $region42: #{faster_rcnn_forward.7} parent=1 // pred_check
      _
    $region43: #{faster_rcnn_forward.7} parent=1 // pred_check_branch
      %42 = sbr.rel (0) target = $region45
    $region44: #{faster_rcnn_forward.7} parent=1 // pred_region
      _
    $region45: #{faster_rcnn_forward.7} parent=1 // pred_fallthru
      _
    // Predicated region
    $region46: #{faster_rcnn_forward.7} parent=1 // pred_check
      _
    $region47: #{faster_rcnn_forward.7} parent=1 // pred_check_branch
      %44 = sbr.rel (0) target = $region49
    $region48: #{faster_rcnn_forward.7} parent=1 // pred_region
      _
    $region49: #{faster_rcnn_forward.7} parent=1 // pred_fallthru
      _
    // Predicated region
    $region50: #{faster_rcnn_forward.7} parent=1 // pred_check
      _
    $region51: #{faster_rcnn_forward.7} parent=1 // pred_check_branch
      %46 = sbr.rel (0) target = $region53
    $region52: #{faster_rcnn_forward.7} parent=1 // pred_region
      _
    $region53: #{faster_rcnn_forward.7} parent=1 // pred_fallthru
      _
    %v48 = vld [vmem:[%s0] sm:$0xff]
    %v49 = vld [vmem:[%s0 + $0x8] sm:$0xff]
    %v50 = vld [vmem:[%s0 + $0x10] sm:$0xff]
    %v51 = vld [vmem:[%s0 + $0x18] sm:$0xff]
    %v52 = vld [vmem:[%s1] sm:$0xf]
    %v53 = vld [vmem:[%s1 + $0x4] sm:$0xf]
    %v54 = vld [vmem:[%s1 + $0x8] sm:$0xf]
    %v55 = vld [vmem:[%s1 + $0xc] sm:$0xf]
    %v56 = vld [vmem:[%s1 + $0x10] sm:$0xf]
    %v57 = vld [vmem:[%s1 + $0x14] sm:$0xf]
    %v58 = vld [vmem:[%s1 + $0x18] sm:$0xf]
    %v59 = vld [vmem:[%s1 + $0x1c] sm:$0xf]
    %v60 = vld [vmem:[%s1 + $0x20] sm:$0xf]
    %v61 = vld [vmem:[%s1 + $0x24] sm:$0xf]
    %v62 = vld [vmem:[%s1 + $0x28] sm:$0xf]
    %v63 = vld [vmem:[%s1 + $0x2c] sm:$0xf]
    %v64 = vld [vmem:[%s1 + $0x30] sm:$0xf]
    %v65 = vld [vmem:[%s1 + $0x34] sm:$0xf]
    %v66 = vld [vmem:[%s1 + $0x38] sm:$0xf]
    %v67 = vld [vmem:[%s1 + $0x3c] sm:$0xf]
    %v68 = vld [vmem:[%s1 + $0x40] sm:$0xf]
    %v69 = vld [vmem:[%s1 + $0x44] sm:$0xf]
    %v70 = vld [vmem:[%s1 + $0x48] sm:$0xf]
    %v71 = vld [vmem:[%s1 + $0x4c] sm:$0xf]
    %v72 = vld [vmem:[%s1 + $0x50] sm:$0xf]
    %v73 = vld [vmem:[%s1 + $0x54] sm:$0xf]
    %v74 = vld [vmem:[%s1 + $0x58] sm:$0xf]
    %v75 = vld [vmem:[%s1 + $0x5c] sm:$0xf]
    %v76 = vld [vmem:[%s1 + $0x60] sm:$0xf]
    %v77 = vld [vmem:[%s1 + $0x64] sm:$0xf]
    %v78 = vld [vmem:[%s1 + $0x68] sm:$0xf]
    %v79 = vld [vmem:[%s1 + $0x6c] sm:$0xf]
    %v80 = vld [vmem:[%s1 + $0x70] sm:$0xf]
    %v81 = vld [vmem:[%s1 + $0x74] sm:$0xf]
    %v82 = vld [vmem:[%s1 + $0x78] sm:$0xf]
    %v83 = vld [vmem:[%s1 + $0x7c] sm:$0xf]
    %v84 = vld [vmem:[%s1 + $0x80] sm:$0xf]
    %v85 = vld [vmem:[%s1 + $0x84] sm:$0xf]
    %v86 = vld [vmem:[%s1 + $0x88] sm:$0xf]
    %v87 = vld [vmem:[%s1 + $0x8c] sm:$0xf]
    %v88 = vld [vmem:[%s1 + $0x90] sm:$0xf]
    %v89 = vld [vmem:[%s1 + $0x94] sm:$0xf]
    %v90 = vld [vmem:[%s1 + $0x98] sm:$0xf]
    %v91 = vld [vmem:[%s1 + $0x9c] sm:$0xf]
    %v92 = vld [vmem:[%s1 + $0xa0] sm:$0xf]
    %v93 = vld [vmem:[%s1 + $0xa4] sm:$0xf]
    %v94 = vld [vmem:[%s1 + $0xa8] sm:$0xf]
    %v95 = vld [vmem:[%s1 + $0xac] sm:$0xf]
    %v96 = vld [vmem:[%s1 + $0xb0] sm:$0xf]
    %v97 = vld [vmem:[%s1 + $0xb4] sm:$0xf]
    %v98 = vld [vmem:[%s1 + $0xb8] sm:$0xf]
    %v99 = vld [vmem:[%s1 + $0xbc] sm:$0xf]
    %v100 = vld [vmem:[%s1 + $0xc0] sm:$0xf]
    %v101 = vld [vmem:[%s1 + $0xc4] sm:$0xf]
    %v102 = vld [vmem:[%s1 + $0xc8] sm:$0xf]
    %v103 = vld [vmem:[%s1 + $0xcc] sm:$0xf]
    %v104 = vld [vmem:[%s1 + $0xd0] sm:$0xf]
    %v105 = vld [vmem:[%s1 + $0xd4] sm:$0xf]
    %v106 = vld [vmem:[%s1 + $0xd8] sm:$0xf]
    %v107 = vld [vmem:[%s1 + $0xdc] sm:$0xf]
    %v108 = vld [vmem:[%s1 + $0xe0] sm:$0xf]
    %v109 = vld [vmem:[%s1 + $0xe4] sm:$0xf]
    %v110 = vld [vmem:[%s1 + $0xe8] sm:$0xf]
    %v111 = vld [vmem:[%s1 + $0xec] sm:$0xf]
    %v112 = vld [vmem:[%s1 + $0xf0] sm:$0xf]
    %v113 = vld [vmem:[%s1 + $0xf4] sm:$0xf]
    %v114 = vld [vmem:[%s1 + $0xf8] sm:$0xf]
    %v115 = vld [vmem:[%s1 + $0xfc] sm:$0xf]
    %v116 = vld [vmem:[%s2] sm:$0x1]
    %v118 = vlaneseq
    %v119 = vshrl.u32 %v118, 7
    %v120 = vsub.s32 0, %v119
    %v121 = vrot.slane %v116, %v120
    %v127 = vunpack.c.l.b16 %v48
    %v128 = vunpack.c.h.b16 %v48
    %v129 = vunpack.c.l.b16 %v49
    %v130 = vunpack.c.h.b16 %v49
    %v131 = vunpack.c.l.b16 %v50
    %v132 = vunpack.c.h.b16 %v50
    %v133 = vunpack.c.l.b16 %v51
    %v134 = vunpack.c.h.b16 %v51
    %v135 = vpack.c.b16 %v131, %v127
    %v136 = vpack.c.b16 %v132, %v128
    %v137 = vpack.c.b16 %v133, %v129
    %v138 = vpack.c.b16 %v134, %v130
    %v207 = vunpack.c.l.b16 %v52
    %v208 = vunpack.c.l.b16 %v53
    %v209 = vunpack.c.l.b16 %v54
    %v210 = vunpack.c.l.b16 %v55
    %v211 = vunpack.c.l.b16 %v56
    %v212 = vunpack.c.l.b16 %v57
    %v213 = vunpack.c.l.b16 %v58
    %v214 = vunpack.c.l.b16 %v59
    %v215 = vunpack.c.l.b16 %v60
    %v216 = vunpack.c.l.b16 %v61
    %v217 = vunpack.c.l.b16 %v62
    %v218 = vunpack.c.l.b16 %v63
    %v219 = vunpack.c.l.b16 %v64
    %v220 = vunpack.c.l.b16 %v65
    %v221 = vunpack.c.l.b16 %v66
    %v222 = vunpack.c.l.b16 %v67
    %v223 = vunpack.c.l.b16 %v68
    %v224 = vunpack.c.l.b16 %v69
    %v225 = vunpack.c.l.b16 %v70
    %v226 = vunpack.c.l.b16 %v71
    %v227 = vunpack.c.l.b16 %v72
    %v228 = vunpack.c.l.b16 %v73
    %v229 = vunpack.c.l.b16 %v74
    %v230 = vunpack.c.l.b16 %v75
    %v231 = vunpack.c.l.b16 %v76
    %v232 = vunpack.c.l.b16 %v77
    %v233 = vunpack.c.l.b16 %v78
    %v234 = vunpack.c.l.b16 %v79
    %v235 = vunpack.c.l.b16 %v80
    %v236 = vunpack.c.l.b16 %v81
    %v237 = vunpack.c.l.b16 %v82
    %v238 = vunpack.c.l.b16 %v83
    %v239 = vunpack.c.l.b16 %v84
    %v240 = vunpack.c.l.b16 %v85
    %v241 = vunpack.c.l.b16 %v86
    %v242 = vunpack.c.l.b16 %v87
    %v243 = vunpack.c.l.b16 %v88
    %v244 = vunpack.c.l.b16 %v89
    %v245 = vunpack.c.l.b16 %v90
    %v246 = vunpack.c.l.b16 %v91
    %v247 = vunpack.c.l.b16 %v92
    %v248 = vunpack.c.l.b16 %v93
    %v249 = vunpack.c.l.b16 %v94
    %v250 = vunpack.c.l.b16 %v95
    %v251 = vunpack.c.l.b16 %v96
    %v252 = vunpack.c.l.b16 %v97
    %v253 = vunpack.c.l.b16 %v98
    %v254 = vunpack.c.l.b16 %v99
    %v255 = vunpack.c.l.b16 %v100
    %v256 = vunpack.c.l.b16 %v101
    %v257 = vunpack.c.l.b16 %v102
    %v258 = vunpack.c.l.b16 %v103
    %v259 = vunpack.c.l.b16 %v104
    %v260 = vunpack.c.l.b16 %v105
    %v261 = vunpack.c.l.b16 %v106
    %v262 = vunpack.c.l.b16 %v107
    %v263 = vunpack.c.l.b16 %v108
    %v264 = vunpack.c.l.b16 %v109
    %v265 = vunpack.c.l.b16 %v110
    %v266 = vunpack.c.l.b16 %v111
    %v267 = vunpack.c.l.b16 %v112
    %v268 = vunpack.c.l.b16 %v113
    %v269 = vunpack.c.l.b16 %v114
    %v270 = vunpack.c.l.b16 %v115
    %v271 = vpack.c.b16 %v208, %v207
    %v272 = vpack.c.b16 %v210, %v209
    %v273 = vpack.c.b16 %v212, %v211
    %v274 = vpack.c.b16 %v214, %v213
    %v275 = vpack.c.b16 %v216, %v215
    %v276 = vpack.c.b16 %v218, %v217
    %v277 = vpack.c.b16 %v220, %v219
    %v278 = vpack.c.b16 %v222, %v221
    %v279 = vpack.c.b16 %v224, %v223
    %v280 = vpack.c.b16 %v226, %v225
    %v281 = vpack.c.b16 %v228, %v227
    %v282 = vpack.c.b16 %v230, %v229
    %v283 = vpack.c.b16 %v232, %v231
    %v284 = vpack.c.b16 %v234, %v233
    %v285 = vpack.c.b16 %v236, %v235
    %v286 = vpack.c.b16 %v238, %v237
    %v287 = vpack.c.b16 %v240, %v239
    %v288 = vpack.c.b16 %v242, %v241
    %v289 = vpack.c.b16 %v244, %v243
    %v290 = vpack.c.b16 %v246, %v245
    %v291 = vpack.c.b16 %v248, %v247
    %v292 = vpack.c.b16 %v250, %v249
    %v293 = vpack.c.b16 %v252, %v251
    %v294 = vpack.c.b16 %v254, %v253
    %v295 = vpack.c.b16 %v256, %v255
    %v296 = vpack.c.b16 %v258, %v257
    %v297 = vpack.c.b16 %v260, %v259
    %v298 = vpack.c.b16 %v262, %v261
    %v299 = vpack.c.b16 %v264, %v263
    %v300 = vpack.c.b16 %v266, %v265
    %v301 = vpack.c.b16 %v268, %v267
    %v302 = vpack.c.b16 %v270, %v269
    %335 = vmatprep.subr.bf16.mxu0 0
    %336 = vmatpush1.bf16.msra.mxu0 %v271
    %337 = vmatprep.subr.bf16.mxu0 0
    %338 = vmatpush1.bf16.msra.mxu0 %v272
    %339 = vmatprep.subr.bf16.mxu0 0
    %340 = vmatpush1.bf16.msra.mxu0 %v273
    %341 = vmatprep.subr.bf16.mxu0 0
    %342 = vmatpush1.bf16.msra.mxu0 %v274
    %343 = vmatprep.subr.bf16.mxu0 0
    %344 = vmatpush1.bf16.msra.mxu0 %v275
    %345 = vmatprep.subr.bf16.mxu0 0
    %346 = vmatpush1.bf16.msra.mxu0 %v276
    %347 = vmatprep.subr.bf16.mxu0 0
    %348 = vmatpush1.bf16.msra.mxu0 %v277
    %349 = vmatprep.subr.bf16.mxu0 0
    %350 = vmatpush1.bf16.msra.mxu0 %v278
    %351 = vmatprep.subr.bf16.mxu0 0
    %352 = vmatpush1.bf16.msra.mxu0 %v279
    %353 = vmatprep.subr.bf16.mxu0 0
    %354 = vmatpush1.bf16.msra.mxu0 %v280
    %355 = vmatprep.subr.bf16.mxu0 0
    %356 = vmatpush1.bf16.msra.mxu0 %v281
    %357 = vmatprep.subr.bf16.mxu0 0
    %358 = vmatpush1.bf16.msra.mxu0 %v282
    %359 = vmatprep.subr.bf16.mxu0 0
    %360 = vmatpush1.bf16.msra.mxu0 %v283
    %361 = vmatprep.subr.bf16.mxu0 0
    %362 = vmatpush1.bf16.msra.mxu0 %v284
    %363 = vmatprep.subr.bf16.mxu0 0
    %364 = vmatpush1.bf16.msra.mxu0 %v285
    %365 = vmatprep.subr.bf16.mxu0 0
    %366 = vmatpush1.bf16.msra.mxu0 %v286
    %367 = vmatprep.mubr.bf16.mxu0 %v136
    %368 = vmatmul.mubr.bf16.gmra.mrb[0].mxu0 %v135
    %v369 = vpop.f32.mrb[0].mxu0
    %v370 = vadd.f32 %v121, %v369
    %v371 = vpop.f32.mrb[0].mxu0
    %v372 = vpop.f32.mrb[0].mxu0
    %v373 = vadd.f32 %v121, %v372
    %v374 = vpop.f32.mrb[0].mxu0
    %375 = vdwg.mxu0
    %376 = vmatprep.subr.bf16.mxu0 0
    %377 = vmatpush1.bf16.msra.mxu0 %v287
    %378 = vmatprep.subr.bf16.mxu0 0
    %379 = vmatpush1.bf16.msra.mxu0 %v288
    %380 = vmatprep.subr.bf16.mxu0 0
    %381 = vmatpush1.bf16.msra.mxu0 %v289
    %382 = vmatprep.subr.bf16.mxu0 0
    %383 = vmatpush1.bf16.msra.mxu0 %v290
    %384 = vmatprep.subr.bf16.mxu0 0
    %385 = vmatpush1.bf16.msra.mxu0 %v291
    %386 = vmatprep.subr.bf16.mxu0 0
    %387 = vmatpush1.bf16.msra.mxu0 %v292
    %388 = vmatprep.subr.bf16.mxu0 0
    %389 = vmatpush1.bf16.msra.mxu0 %v293
    %390 = vmatprep.subr.bf16.mxu0 0
    %391 = vmatpush1.bf16.msra.mxu0 %v294
    %392 = vmatprep.subr.bf16.mxu0 0
    %393 = vmatpush1.bf16.msra.mxu0 %v295
    %394 = vmatprep.subr.bf16.mxu0 0
    %395 = vmatpush1.bf16.msra.mxu0 %v296
    %396 = vmatprep.subr.bf16.mxu0 0
    %397 = vmatpush1.bf16.msra.mxu0 %v297
    %398 = vmatprep.subr.bf16.mxu0 0
    %399 = vmatpush1.bf16.msra.mxu0 %v298
    %400 = vmatprep.subr.bf16.mxu0 0
    %401 = vmatpush1.bf16.msra.mxu0 %v299
    %402 = vmatprep.subr.bf16.mxu0 0
    %403 = vmatpush1.bf16.msra.mxu0 %v300
    %404 = vmatprep.subr.bf16.mxu0 0
    %405 = vmatpush1.bf16.msra.mxu0 %v301
    %406 = vmatprep.subr.bf16.mxu0 0
    %407 = vmatpush1.bf16.msra.mxu0 %v302
    %408 = vmatprep.mubr.bf16.mxu0 %v138
    %409 = vmatmul.mubr.bf16.gmra.mrb[0].mxu0 %v137
    %v410 = vpop.f32.mrb[0].mxu0
    %v411 = vadd.f32 %v370, %v410
    %v412 = vpop.f32.mrb[0].mxu0
    %v413 = vpop.f32.mrb[0].mxu0
    %v414 = vadd.f32 %v373, %v413
    %v415 = vpop.f32.mrb[0].mxu0
    %416 = vdwg.mxu0
    %v417 = vmax.f32 %v411, 0.0
    %v418 = vmax.f32 %v414, 0.0
    %v419 = vpack.c.bf16 %v418, %v417
    %v420 = vld [vmem:[%s3] sm:$0x1]
    %v421 = vld [vmem:[%s4] sm:$0x1]
    %v422 = vld [vmem:[%s5] sm:$0xf]
    %v423 = vld [vmem:[%s5 + $0x4] sm:$0xf]
    %v424 = vld [vmem:[%s5 + $0x8] sm:$0xf]
    %v425 = vld [vmem:[%s5 + $0xc] sm:$0xf]
    %v426 = vld [vmem:[%s5 + $0x10] sm:$0xf]
    %v427 = vld [vmem:[%s5 + $0x14] sm:$0xf]
    %v428 = vld [vmem:[%s5 + $0x18] sm:$0xf]
    %v429 = vld [vmem:[%s5 + $0x1c] sm:$0xf]
    %v430 = vld [vmem:[%s6] sm:$0xf]
    %v431 = vld [vmem:[%s6 + $0x4] sm:$0xf]
    %v432 = vld [vmem:[%s6 + $0x8] sm:$0xf]
    %v433 = vld [vmem:[%s6 + $0xc] sm:$0xf]
    %v438 = vunpack.c.l.b16 %v430
    %v439 = vunpack.c.l.b16 %v431
    %v440 = vunpack.c.l.b16 %v432
    %v441 = vunpack.c.l.b16 %v433
    %v442 = vpack.c.b16 %v439, %v438
    %v443 = vpack.c.b16 %v441, %v440
    %vm446 = vcmask 261120
    %v448 = vsel %vm446, %v421, 0
    %450 = vmatprep.subr.bf16.mxu0 0
    %451 = vmatpush1.bf16.msra.mxu0 %v442
    %452 = vmatprep.subr.bf16.mxu0 0
    %453 = vmatpush1.bf16.msra.mxu0 %v443
    %454 = vmatprep.subr.bf16.mxu0 0
    %455 = vmatpush1.bf16.msra.mxu0 0
    %456 = vmatprep.subr.bf16.mxu0 0
    %457 = vmatpush1.bf16.msra.mxu0 0
    %458 = vmatprep.subr.bf16.mxu0 0
    %459 = vmatpush1.bf16.msra.mxu0 0
    %460 = vmatprep.subr.bf16.mxu0 0
    %461 = vmatpush1.bf16.msra.mxu0 0
    %462 = vmatprep.subr.bf16.mxu0 0
    %463 = vmatpush1.bf16.msra.mxu0 0
    %464 = vmatprep.subr.bf16.mxu0 0
    %465 = vmatpush1.bf16.msra.mxu0 0
    %466 = vmatprep.subr.bf16.mxu0 0
    %467 = vmatpush1.bf16.msra.mxu0 0
    %468 = vmatprep.subr.bf16.mxu0 0
    %469 = vmatpush1.bf16.msra.mxu0 0
    %470 = vmatprep.subr.bf16.mxu0 0
    %471 = vmatpush1.bf16.msra.mxu0 0
    %472 = vmatprep.subr.bf16.mxu0 0
    %473 = vmatpush1.bf16.msra.mxu0 0
    %474 = vmatprep.subr.bf16.mxu0 0
    %475 = vmatpush1.bf16.msra.mxu0 0
    %476 = vmatprep.subr.bf16.mxu0 0
    %477 = vmatpush1.bf16.msra.mxu0 0
    %478 = vmatprep.subr.bf16.mxu0 0
    %479 = vmatpush1.bf16.msra.mxu0 0
    %480 = vmatprep.subr.bf16.mxu0 0
    %481 = vmatpush1.bf16.msra.mxu0 0
    %482 = vmatprep.mubr.bf16.mxu0 0
    %483 = vmatmul.mubr.bf16.gmra.mrb[0].mxu0 %v448
    %v484 = vpop.f32.mrb[0].mxu0
    %v485 = vadd.f32 0.0, %v484
    %v486 = vpop.f32.mrb[0].mxu0
    %v487 = vpop.f32.mrb[0].mxu0
    %v488 = vpop.f32.mrb[0].mxu0
    %489 = vdwg.mxu0
    %v498 = vunpack.c.l.b16 %v422
    %v499 = vunpack.c.l.b16 %v423
    %v500 = vunpack.c.l.b16 %v424
    %v501 = vunpack.c.l.b16 %v425
    %v502 = vunpack.c.l.b16 %v426
    %v503 = vunpack.c.l.b16 %v427
    %v504 = vunpack.c.l.b16 %v428
    %v505 = vunpack.c.l.b16 %v429
    %v506 = vpack.c.b16 %v499, %v498
    %v507 = vpack.c.b16 %v501, %v500
    %v508 = vpack.c.b16 %v503, %v502
    %v509 = vpack.c.b16 %v505, %v504
    %vm514 = vcmask 523264
    %v516 = vsel %vm514, %v420, 0
    %518 = vmatprep.subr.bf16.mxu0 0
    %519 = vmatpush1.bf16.msra.mxu0 %v506
    %520 = vmatprep.subr.bf16.mxu0 0
    %521 = vmatpush1.bf16.msra.mxu0 %v507
    %522 = vmatprep.subr.bf16.mxu0 0
    %523 = vmatpush1.bf16.msra.mxu0 %v508
    %524 = vmatprep.subr.bf16.mxu0 0
    %525 = vmatpush1.bf16.msra.mxu0 %v509
    %526 = vmatprep.subr.bf16.mxu0 0
    %527 = vmatpush1.bf16.msra.mxu0 0
    %528 = vmatprep.subr.bf16.mxu0 0
    %529 = vmatpush1.bf16.msra.mxu0 0
    %530 = vmatprep.subr.bf16.mxu0 0
    %531 = vmatpush1.bf16.msra.mxu0 0
    %532 = vmatprep.subr.bf16.mxu0 0
    %533 = vmatpush1.bf16.msra.mxu0 0
    %534 = vmatprep.subr.bf16.mxu0 0
    %535 = vmatpush1.bf16.msra.mxu0 0
    %536 = vmatprep.subr.bf16.mxu0 0
    %537 = vmatpush1.bf16.msra.mxu0 0
    %538 = vmatprep.subr.bf16.mxu0 0
    %539 = vmatpush1.bf16.msra.mxu0 0
    %540 = vmatprep.subr.bf16.mxu0 0
    %541 = vmatpush1.bf16.msra.mxu0 0
    %542 = vmatprep.subr.bf16.mxu0 0
    %543 = vmatpush1.bf16.msra.mxu0 0
    %544 = vmatprep.subr.bf16.mxu0 0
    %545 = vmatpush1.bf16.msra.mxu0 0
    %546 = vmatprep.subr.bf16.mxu0 0
    %547 = vmatpush1.bf16.msra.mxu0 0
    %548 = vmatprep.subr.bf16.mxu0 0
    %549 = vmatpush1.bf16.msra.mxu0 0
    %550 = vmatprep.mubr.bf16.mxu0 0
    %551 = vmatmul.mubr.bf16.gmra.mrb[0].mxu0 %v516
    %v552 = vpop.f32.mrb[0].mxu0
    %v553 = vadd.f32 %v485, %v552
    %v554 = vpop.f32.mrb[0].mxu0
    %v555 = vpop.f32.mrb[0].mxu0
    %v556 = vpop.f32.mrb[0].mxu0
    %557 = vdwg.mxu0
    %v558 = vld [vmem:[%s8] sm:$0x1]
    %v559 = vadd.f32 %v553, %v558
    %v560 = vld [vmem:[%s7] sm:$0xf]
    %v561 = vld [vmem:[%s7 + $0x4] sm:$0xf]
    %v562 = vld [vmem:[%s7 + $0x8] sm:$0xf]
    %v563 = vld [vmem:[%s7 + $0xc] sm:$0xf]
    %v564 = vld [vmem:[%s7 + $0x10] sm:$0xf]
    %v565 = vld [vmem:[%s7 + $0x14] sm:$0xf]
    %v566 = vld [vmem:[%s7 + $0x18] sm:$0xf]
    %v567 = vld [vmem:[%s7 + $0x1c] sm:$0xf]
    %v568 = vlaneseq
    %v569 = vshrl.u32 %v568, 7
    %v570 = vsub.s32 0, %v569
    %v571 = vrot.slane %v559, %v570
    %v580 = vunpack.c.l.b16 %v560
    %v581 = vunpack.c.l.b16 %v561
    %v582 = vunpack.c.l.b16 %v562
    %v583 = vunpack.c.l.b16 %v563
    %v584 = vunpack.c.l.b16 %v564
    %v585 = vunpack.c.l.b16 %v565
    %v586 = vunpack.c.l.b16 %v566
    %v587 = vunpack.c.l.b16 %v567
    %v588 = vpack.c.b16 %v581, %v580
    %v589 = vpack.c.b16 %v583, %v582
    %v590 = vpack.c.b16 %v585, %v584
    %v591 = vpack.c.b16 %v587, %v586
    %v597 = vsel %vm514, %v419, 0
    %599 = vmatprep.subr.bf16.mxu0 0
    %600 = vmatpush1.bf16.msra.mxu0 %v588
    %601 = vmatprep.subr.bf16.mxu0 0
    %602 = vmatpush1.bf16.msra.mxu0 %v589
    %603 = vmatprep.subr.bf16.mxu0 0
    %604 = vmatpush1.bf16.msra.mxu0 %v590
    %605 = vmatprep.subr.bf16.mxu0 0
    %606 = vmatpush1.bf16.msra.mxu0 %v591
    %607 = vmatprep.subr.bf16.mxu0 0
    %608 = vmatpush1.bf16.msra.mxu0 0
    %609 = vmatprep.subr.bf16.mxu0 0
    %610 = vmatpush1.bf16.msra.mxu0 0
    %611 = vmatprep.subr.bf16.mxu0 0
    %612 = vmatpush1.bf16.msra.mxu0 0
    %613 = vmatprep.subr.bf16.mxu0 0
    %614 = vmatpush1.bf16.msra.mxu0 0
    %615 = vmatprep.subr.bf16.mxu0 0
    %616 = vmatpush1.bf16.msra.mxu0 0
    %617 = vmatprep.subr.bf16.mxu0 0
    %618 = vmatpush1.bf16.msra.mxu0 0
    %619 = vmatprep.subr.bf16.mxu0 0
    %620 = vmatpush1.bf16.msra.mxu0 0
    %621 = vmatprep.subr.bf16.mxu0 0
    %622 = vmatpush1.bf16.msra.mxu0 0
    %623 = vmatprep.subr.bf16.mxu0 0
    %624 = vmatpush1.bf16.msra.mxu0 0
    %625 = vmatprep.subr.bf16.mxu0 0
    %626 = vmatpush1.bf16.msra.mxu0 0
    %627 = vmatprep.subr.bf16.mxu0 0
    %628 = vmatpush1.bf16.msra.mxu0 0
    %629 = vmatprep.subr.bf16.mxu0 0
    %630 = vmatpush1.bf16.msra.mxu0 0
    %631 = vmatprep.mubr.bf16.mxu0 0
    %632 = vmatmul.mubr.bf16.gmra.mrb[0].mxu0 %v597
    %v633 = vpop.f32.mrb[0].mxu0
    %v634 = vadd.f32 %v571, %v633
    %v635 = vpop.f32.mrb[0].mxu0
    %v636 = vpop.f32.mrb[0].mxu0
    %v637 = vadd.f32 %v571, %v636
    %v638 = vpop.f32.mrb[0].mxu0
    %639 = vdwg.mxu0
    %vm640 = vcmask 23552
    %v641 = vsel %vm640, %v634, -inf
    %642 = vmax.xlane.f32.xlu0 %v641
    %v643 = vpop.xlane.xlu0 %642
    %v644 = vsel %vm640, %v637, -inf
    %645 = vmax.xlane.f32.xlu0 %v644
    %v646 = vpop.xlane.xlu0 %645
    %v647 = vsub.f32 %v634, %v643
    %v648 = vsub.f32 %v637, %v646
    %v649 = vmul.f32 %v647, 1.442695
    %v650 = vpow.pop %v649
    %v651 = vmul.f32 %v648, 1.442695
    %v652 = vpow.pop %v651
    %v653 = vsel %vm640, %v650, 0.0
    %654 = vadd.xlane.f32.xlu0 %v653
    %v655 = vpop.xlane.xlu0 %654
    %v656 = vsel %vm640, %v652, 0.0
    %657 = vadd.xlane.f32.xlu0 %v656
    %v658 = vpop.xlane.xlu0 %657
    %v659 = vrcp.pop %v655
    %v660 = vmul.f32 %v650, %v659
    %v661 = vrcp.pop %v658
    %v662 = vmul.f32 %v652, %v661
    %663 = vst.msk [vmem:[%s13] sm:$0xff] %vm640, %v660
    %664 = vst.msk [vmem:[%s13 + $0x8] sm:$0xff] %vm640, %v662
    %v665 = vld [vmem:[%s9] sm:$0xf]
    %v666 = vld [vmem:[%s9 + $0x4] sm:$0xf]
    %v667 = vld [vmem:[%s9 + $0x8] sm:$0xf]
    %v668 = vld [vmem:[%s9 + $0xc] sm:$0xf]
    %v669 = vld [vmem:[%s9 + $0x10] sm:$0xf]
    %v670 = vld [vmem:[%s9 + $0x14] sm:$0xf]
    %v671 = vld [vmem:[%s9 + $0x18] sm:$0xf]
    %v672 = vld [vmem:[%s9 + $0x1c] sm:$0xf]
    %v673 = vld [vmem:[%s10] sm:$0xf]
    %v674 = vld [vmem:[%s10 + $0x4] sm:$0xf]
    %v675 = vld [vmem:[%s10 + $0x8] sm:$0xf]
    %v676 = vld [vmem:[%s10 + $0xc] sm:$0xf]
    %v681 = vunpack.c.l.b16 %v673
    %v682 = vunpack.c.l.b16 %v674
    %v683 = vunpack.c.l.b16 %v675
    %v684 = vunpack.c.l.b16 %v676
    %v685 = vpack.c.b16 %v682, %v681
    %v686 = vpack.c.b16 %v684, %v683
    %689 = vmatprep.subr.bf16.mxu0 0
    %690 = vmatpush1.bf16.msra.mxu0 %v685
    %691 = vmatprep.subr.bf16.mxu0 0
    %692 = vmatpush1.bf16.msra.mxu0 %v686
    %693 = vmatprep.subr.bf16.mxu0 0
    %694 = vmatpush1.bf16.msra.mxu0 0
    %695 = vmatprep.subr.bf16.mxu0 0
    %696 = vmatpush1.bf16.msra.mxu0 0
    %697 = vmatprep.subr.bf16.mxu0 0
    %698 = vmatpush1.bf16.msra.mxu0 0
    %699 = vmatprep.subr.bf16.mxu0 0
    %700 = vmatpush1.bf16.msra.mxu0 0
    %701 = vmatprep.subr.bf16.mxu0 0
    %702 = vmatpush1.bf16.msra.mxu0 0
    %703 = vmatprep.subr.bf16.mxu0 0
    %704 = vmatpush1.bf16.msra.mxu0 0
    %705 = vmatprep.subr.bf16.mxu0 0
    %706 = vmatpush1.bf16.msra.mxu0 0
    %707 = vmatprep.subr.bf16.mxu0 0
    %708 = vmatpush1.bf16.msra.mxu0 0
    %709 = vmatprep.subr.bf16.mxu0 0
    %710 = vmatpush1.bf16.msra.mxu0 0
    %711 = vmatprep.subr.bf16.mxu0 0
    %712 = vmatpush1.bf16.msra.mxu0 0
    %713 = vmatprep.subr.bf16.mxu0 0
    %714 = vmatpush1.bf16.msra.mxu0 0
    %715 = vmatprep.subr.bf16.mxu0 0
    %716 = vmatpush1.bf16.msra.mxu0 0
    %717 = vmatprep.subr.bf16.mxu0 0
    %718 = vmatpush1.bf16.msra.mxu0 0
    %719 = vmatprep.subr.bf16.mxu0 0
    %720 = vmatpush1.bf16.msra.mxu0 0
    %721 = vmatprep.mubr.bf16.mxu0 0
    %722 = vmatmul.mubr.bf16.gmra.mrb[0].mxu0 %v448
    %v723 = vpop.f32.mrb[0].mxu0
    %v724 = vadd.f32 0.0, %v723
    %v725 = vpop.f32.mrb[0].mxu0
    %v726 = vpop.f32.mrb[0].mxu0
    %v727 = vpop.f32.mrb[0].mxu0
    %728 = vdwg.mxu0
    %v737 = vunpack.c.l.b16 %v665
    %v738 = vunpack.c.l.b16 %v666
    %v739 = vunpack.c.l.b16 %v667
    %v740 = vunpack.c.l.b16 %v668
    %v741 = vunpack.c.l.b16 %v669
    %v742 = vunpack.c.l.b16 %v670
    %v743 = vunpack.c.l.b16 %v671
    %v744 = vunpack.c.l.b16 %v672
    %v745 = vpack.c.b16 %v738, %v737
    %v746 = vpack.c.b16 %v740, %v739
    %v747 = vpack.c.b16 %v742, %v741
    %v748 = vpack.c.b16 %v744, %v743
    %753 = vmatprep.subr.bf16.mxu0 0
    %754 = vmatpush1.bf16.msra.mxu0 %v745
    %755 = vmatprep.subr.bf16.mxu0 0
    %756 = vmatpush1.bf16.msra.mxu0 %v746
    %757 = vmatprep.subr.bf16.mxu0 0
    %758 = vmatpush1.bf16.msra.mxu0 %v747
    %759 = vmatprep.subr.bf16.mxu0 0
    %760 = vmatpush1.bf16.msra.mxu0 %v748
    %761 = vmatprep.subr.bf16.mxu0 0
    %762 = vmatpush1.bf16.msra.mxu0 0
    %763 = vmatprep.subr.bf16.mxu0 0
    %764 = vmatpush1.bf16.msra.mxu0 0
    %765 = vmatprep.subr.bf16.mxu0 0
    %766 = vmatpush1.bf16.msra.mxu0 0
    %767 = vmatprep.subr.bf16.mxu0 0
    %768 = vmatpush1.bf16.msra.mxu0 0
    %769 = vmatprep.subr.bf16.mxu0 0
    %770 = vmatpush1.bf16.msra.mxu0 0
    %771 = vmatprep.subr.bf16.mxu0 0
    %772 = vmatpush1.bf16.msra.mxu0 0
    %773 = vmatprep.subr.bf16.mxu0 0
    %774 = vmatpush1.bf16.msra.mxu0 0
    %775 = vmatprep.subr.bf16.mxu0 0
    %776 = vmatpush1.bf16.msra.mxu0 0
    %777 = vmatprep.subr.bf16.mxu0 0
    %778 = vmatpush1.bf16.msra.mxu0 0
    %779 = vmatprep.subr.bf16.mxu0 0
    %780 = vmatpush1.bf16.msra.mxu0 0
    %781 = vmatprep.subr.bf16.mxu0 0
    %782 = vmatpush1.bf16.msra.mxu0 0
    %783 = vmatprep.subr.bf16.mxu0 0
    %784 = vmatpush1.bf16.msra.mxu0 0
    %785 = vmatprep.mubr.bf16.mxu0 0
    %786 = vmatmul.mubr.bf16.gmra.mrb[0].mxu0 %v516
    %v787 = vpop.f32.mrb[0].mxu0
    %v788 = vadd.f32 %v724, %v787
    %v789 = vpop.f32.mrb[0].mxu0
    %v790 = vpop.f32.mrb[0].mxu0
    %v791 = vpop.f32.mrb[0].mxu0
    %792 = vdwg.mxu0
    %v793 = vld [vmem:[%s12] sm:$0x1]
    %v794 = vadd.f32 %v788, %v793
    %v795 = vld [vmem:[%s11] sm:$0xf]
    %v796 = vld [vmem:[%s11 + $0x4] sm:$0xf]
    %v797 = vld [vmem:[%s11 + $0x8] sm:$0xf]
    %v798 = vld [vmem:[%s11 + $0xc] sm:$0xf]
    %v799 = vld [vmem:[%s11 + $0x10] sm:$0xf]
    %v800 = vld [vmem:[%s11 + $0x14] sm:$0xf]
    %v801 = vld [vmem:[%s11 + $0x18] sm:$0xf]
    %v802 = vld [vmem:[%s11 + $0x1c] sm:$0xf]
    %v803 = vlaneseq
    %v804 = vshrl.u32 %v803, 7
    %v805 = vsub.s32 0, %v804
    %v806 = vrot.slane %v794, %v805
    %v815 = vunpack.c.l.b16 %v795
    %v816 = vunpack.c.l.b16 %v796
    %v817 = vunpack.c.l.b16 %v797
    %v818 = vunpack.c.l.b16 %v798
    %v819 = vunpack.c.l.b16 %v799
    %v820 = vunpack.c.l.b16 %v800
    %v821 = vunpack.c.l.b16 %v801
    %v822 = vunpack.c.l.b16 %v802
    %v823 = vpack.c.b16 %v816, %v815
    %v824 = vpack.c.b16 %v818, %v817
    %v825 = vpack.c.b16 %v820, %v819
    %v826 = vpack.c.b16 %v822, %v821
    %831 = vmatprep.subr.bf16.mxu0 0
    %832 = vmatpush1.bf16.msra.mxu0 %v823
    %833 = vmatprep.subr.bf16.mxu0 0
    %834 = vmatpush1.bf16.msra.mxu0 %v824
    %835 = vmatprep.subr.bf16.mxu0 0
    %836 = vmatpush1.bf16.msra.mxu0 %v825
    %837 = vmatprep.subr.bf16.mxu0 0
    %838 = vmatpush1.bf16.msra.mxu0 %v826
    %839 = vmatprep.subr.bf16.mxu0 0
    %840 = vmatpush1.bf16.msra.mxu0 0
    %841 = vmatprep.subr.bf16.mxu0 0
    %842 = vmatpush1.bf16.msra.mxu0 0
    %843 = vmatprep.subr.bf16.mxu0 0
    %844 = vmatpush1.bf16.msra.mxu0 0
    %845 = vmatprep.subr.bf16.mxu0 0
    %846 = vmatpush1.bf16.msra.mxu0 0
    %847 = vmatprep.subr.bf16.mxu0 0
    %848 = vmatpush1.bf16.msra.mxu0 0
    %849 = vmatprep.subr.bf16.mxu0 0
    %850 = vmatpush1.bf16.msra.mxu0 0
    %851 = vmatprep.subr.bf16.mxu0 0
    %852 = vmatpush1.bf16.msra.mxu0 0
    %853 = vmatprep.subr.bf16.mxu0 0
    %854 = vmatpush1.bf16.msra.mxu0 0
    %855 = vmatprep.subr.bf16.mxu0 0
    %856 = vmatpush1.bf16.msra.mxu0 0
    %857 = vmatprep.subr.bf16.mxu0 0
    %858 = vmatpush1.bf16.msra.mxu0 0
    %859 = vmatprep.subr.bf16.mxu0 0
    %860 = vmatpush1.bf16.msra.mxu0 0
    %861 = vmatprep.subr.bf16.mxu0 0
    %862 = vmatpush1.bf16.msra.mxu0 0
    %863 = vmatprep.mubr.bf16.mxu0 0
    %864 = vmatmul.mubr.bf16.gmra.mrb[0].mxu0 %v597
    %v865 = vpop.f32.mrb[0].mxu0
    %v866 = vadd.f32 %v806, %v865
    %v867 = vpop.f32.mrb[0].mxu0
    %v868 = vpop.f32.mrb[0].mxu0
    %v869 = vadd.f32 %v806, %v868
    %v870 = vpop.f32.mrb[0].mxu0
    %871 = vdwg.mxu0
    %vm872 = vcmask 97280
    %873 = vst.msk [vmem:[#allocation2] sm:$0xff] %vm872, %v866
    %874 = vst.msk [vmem:[#allocation2 + $0x8] sm:$0xff] %vm872, %v869
    // Predicated region
    $region54: #{faster_rcnn_forward.7} parent=1 // pred_check
      _
    $region55: #{faster_rcnn_forward.7} parent=1 // pred_check_branch
      %876 = sbr.rel (0) target = $region57
    $region56: #{faster_rcnn_forward.7} parent=1 // pred_region
      _
    $region57: #{faster_rcnn_forward.7} parent=1 // pred_fallthru
      _
    // Predicated region
    $region58: #{faster_rcnn_forward.7} parent=1 // pred_check
      _
    $region59: #{faster_rcnn_forward.7} parent=1 // pred_check_branch
      %878 = sbr.rel (0) target = $region61
    $region60: #{faster_rcnn_forward.7} parent=1 // pred_region
      %s880 = ssub.s32 256, 256
      %881 = vsyncadd [#allocation3], %s880
      %s882 = sshll.u32 [#allocation2], 4
      %s883 = int_to_ptr.vmem [resolvable:$true] %s882
      %888 = dma.vmem_to_hbm [thread:$0]  %s883, 256, %s14, [#allocation3], 128, 128, 8
    $region61: #{faster_rcnn_forward.7} parent=1 // pred_fallthru
      _
    // Predicated region
    $region62: #{faster_rcnn_forward.7} parent=1 // pred_check
      _
    $region63: #{faster_rcnn_forward.7} parent=1 // pred_check_branch
      %890 = sbr.rel (0) target = $region65
    $region64: #{faster_rcnn_forward.7} parent=1 // pred_region
      _
    $region65: #{faster_rcnn_forward.7} parent=1 // pred_fallthru
      _
    // Predicated region
    $region66: #{faster_rcnn_forward.7} parent=1 // pred_check
      _
    $region67: #{faster_rcnn_forward.7} parent=1 // pred_check_branch
      %892 = sbr.rel (0) target = $region69
    $region68: #{faster_rcnn_forward.7} parent=1 // pred_region
      %893 = dma.done [#allocation3], 256
    $region69: #{faster_rcnn_forward.7} parent=1 // pred_fallthru
      _
    %894 = vsyncpa [#allocation3], 1

</llo_original>
